<compile_context>
chip_gen: v5e
topology: v5e:2x2
jax: 0.10.0
libtpu: 0.0.40
codegen_flags: <defaults>
</compile_context>

<pallas_src>
import functools
import random

import jax
import jax.numpy as jnp
from jax import lax
from jax.experimental import pallas as pl
from jax.experimental.pallas import tpu as pltpu


# ---------------------------------------------------------------------------
# Pallas kernel 1: matmul + bias + activation (conv hot path)
#   grid = (M tiles [parallel], K tiles [arbitrary]) with f32 VMEM accumulator
# ---------------------------------------------------------------------------
def _mm_bias_kernel(x_ref, w_ref, b_ref, o_ref, acc_ref, *, act):
    k = pl.program_id(1)

    @pl.when(k == 0)
    def _():
        acc_ref[...] = jnp.zeros_like(acc_ref)

    acc_ref[...] += jnp.dot(x_ref[...], w_ref[...],
                            preferred_element_type=jnp.float32)

    @pl.when(k == pl.num_programs(1) - 1)
    def _():
        y = acc_ref[...] + b_ref[...]
        if act == "leaky":                       # nn.LeakyReLU(0.1)
            y = jnp.where(y >= 0, y, 0.1 * y)
        o_ref[...] = y.astype(o_ref.dtype)


def matmul_bias(x, w, b, act="none", out_dtype=jnp.float32):
    """y = act(x @ w + b);  x:(M,K) bf16  w:(K,N) bf16  b:(N,) f32 -> (M,N)."""
    M, K = x.shape
    N = w.shape[1]
    if x.dtype != jnp.bfloat16:
        x = x.astype(jnp.bfloat16)
    if w.dtype != jnp.bfloat16:
        w = w.astype(jnp.bfloat16)
    b = b.reshape(1, N).astype(jnp.float32)

    # M tiling: big tiles, even-sized parallel axis where possible (v7x 2 TCs).
    if M >= 1024 and M % 512 == 0:
        tm = 512
    elif M >= 512 and M % 256 == 0:
        tm = 256
    elif M >= 256 and M % 128 == 0:
        tm = 128
    else:
        tm = M
    # K tiling: only tile when K is big (must stay a multiple of 128).
    if K >= 2048 and K % 512 == 0:
        tk = 512
    else:
        tk = K

    return pl.pallas_call(
        functools.partial(_mm_bias_kernel, act=act),
        out_shape=jax.ShapeDtypeStruct((M, N), out_dtype),
        grid=(M // tm, K // tk),
        in_specs=[
            pl.BlockSpec((tm, tk), lambda i, k: (i, k)),
            pl.BlockSpec((tk, N), lambda i, k: (k, 0)),
            pl.BlockSpec((1, N), lambda i, k: (0, 0)),
        ],
        out_specs=pl.BlockSpec((tm, N), lambda i, k: (i, 0)),
        scratch_shapes=[pltpu.VMEM((tm, N), jnp.float32)],
        compiler_params=pltpu.CompilerParams(
            dimension_semantics=("parallel", "arbitrary"),
            vmem_limit_bytes=48 * 1024 * 1024),
    )(x, w, b)


# ---------------------------------------------------------------------------
# Pallas kernel 2: fused SA-ConvLSTM cell body (ONE launch per cell per step,
# whole batch folded into the block).
#   gate matmul -> LSTM gates -> merged QKV / KV2 projections -> 2x batched
#   attention -> layer_z -> layer_m -> SAM gate update -> per-sample LayerNorm
# ---------------------------------------------------------------------------
def _cell_kernel(p_ref, c_ref, m_ref,
                 wg_ref, bg_ref,
                 wqkv_ref, bqkv_ref, wkv2_ref, bkv2_ref,
                 wzh_ref, wzm_ref, bz_ref,
                 wmz_ref, wmh_ref, bm_ref,
                 lng_ref, lnb_ref,
                 h_ref, cn_ref, mn_ref, out_ref,
                 *, batch, n_tok, hd, att):
    f32 = jnp.float32
    bf16 = jnp.bfloat16

    # ---- gate conv (im2col matmul over the whole (B*N) row block) ----
    gates = jnp.dot(p_ref[...], wg_ref[...],
                    preferred_element_type=f32) + bg_ref[...]        # (B*N, 4hd)

    c = c_ref[...]
    m = m_ref[...]
    i_g = jax.nn.sigmoid(gates[:, 0 * hd:1 * hd])
    f_g = jax.nn.sigmoid(gates[:, 1 * hd:2 * hd])
    o_g = jax.nn.sigmoid(gates[:, 2 * hd:3 * hd])
    g_g = jnp.tanh(gates[:, 3 * hd:4 * hd])
    c_n = f_g * c + i_g * g_g
    h_pre = o_g * jnp.tanh(c_n)

    # ---- merged SAM projections ([wq|wk|wv] from h, [wk2|wv2] from m) ----
    hp16 = h_pre.astype(bf16)
    qkv = jnp.dot(hp16, wqkv_ref[...],
                  preferred_element_type=f32) + bqkv_ref[...]        # (B*N, 2att+hd)
    kv2 = jnp.dot(m.astype(bf16), wkv2_ref[...],
                  preferred_element_type=f32) + bkv2_ref[...]        # (B*N, att+hd)

    q = qkv[:, :att].astype(bf16).reshape(batch, n_tok, att)
    k_h = qkv[:, att:2 * att].astype(bf16).reshape(batch, n_tok, att)
    v_h = qkv[:, 2 * att:].astype(bf16).reshape(batch, n_tok, hd)
    k_m = kv2[:, :att].astype(bf16).reshape(batch, n_tok, att)
    v_m = kv2[:, att:].astype(bf16).reshape(batch, n_tok, hd)

    def _attn(qq, kk, vv):
        # Batched NT matmul: contract feature dims, batch over B, no transpose.
        s = jnp.einsum("bnd,bmd->bnm", qq, kk,
                       preferred_element_type=f32)                   # (B, N, N)
        s = s - jnp.max(s, axis=-1, keepdims=True)
        p = jnp.exp(s)
        p = p * pl.reciprocal(jnp.sum(p, axis=-1, keepdims=True), approx=True)
        o = jnp.einsum("bnm,bmd->bnd", p.astype(bf16), vv,
                       preferred_element_type=f32)                   # (B, N, hd)
        return o.reshape(batch * n_tok, hd)

    z_h = _attn(q, k_h, v_h)                                         # (B*N, hd)
    z_m = _attn(q, k_m, v_m)                                         # (B*N, hd)

    # layer_z on [z_h | z_m] (pre-split weights -> no lane concat needed)
    z = (jnp.dot(z_h.astype(bf16), wzh_ref[...], preferred_element_type=f32)
         + jnp.dot(z_m.astype(bf16), wzm_ref[...], preferred_element_type=f32)
         + bz_ref[...])                                              # (B*N, 2hd)

    # layer_m on [z | h_pre]
    comb = (jnp.dot(z.astype(bf16), wmz_ref[...], preferred_element_type=f32)
            + jnp.dot(hp16, wmh_ref[...], preferred_element_type=f32)
            + bm_ref[...])                                           # (B*N, 3hd)

    m_o = comb[:, 0 * hd:1 * hd]
    m_g = comb[:, 1 * hd:2 * hd]
    m_i = jax.nn.sigmoid(comb[:, 2 * hd:3 * hd])
    m_n = (1.0 - m_i) * m + m_i * jnp.tanh(m_g)
    h_n = jax.nn.sigmoid(m_o) * m_n

    h_ref[...] = h_n
    cn_ref[...] = c_n
    mn_ref[...] = m_n

    # ---- per-sample LayerNorm over the whole (N, hd) feature ----
    h3 = h_n.reshape(batch, n_tok, hd)
    mu = jnp.mean(jnp.mean(h3, axis=-1, keepdims=True), axis=1, keepdims=True)
    d = h3 - mu
    var = jnp.mean(jnp.mean(d * d, axis=-1, keepdims=True), axis=1, keepdims=True)
    out = d * lax.rsqrt(var + 1e-5) * lng_ref[...] + lnb_ref[...]
    out_ref[...] = out.astype(out_ref.dtype)


# ---------------------------------------------------------------------------
# Convolution glue (im2col data movement in JAX; matmul in Pallas)
# ---------------------------------------------------------------------------
def _im2col(x, kh, kw, stride, pads):
    """x: (B,H,W,C) NHWC -> patches (B*Ho*Wo, kh*kw*C), tap-major / chan-minor."""
    pt, pb, plft, prgt = pads
    B, H, W, C = x.shape
    xp = jnp.pad(x, ((0, 0), (pt, pb), (plft, prgt), (0, 0)))
    Ho = (H + pt + pb - kh) // stride + 1
    Wo = (W + plft + prgt - kw) // stride + 1
    cols = []
    for dy in range(kh):
        for dx in range(kw):
            cols.append(xp[:, dy:dy + stride * (Ho - 1) + 1:stride,
                           dx:dx + stride * (Wo - 1) + 1:stride, :])
    patches = jnp.concatenate(cols, axis=-1)
    return patches.reshape(B * Ho * Wo, kh * kw * C), Ho, Wo


def conv2d(x, w, b, stride=1, pad=0, act="none", out_dtype=jnp.bfloat16):
    """x NHWC (bf16), w (kh,kw,Cin,Cout) bf16 == torch Conv2d(Cin,Cout,k,s,p)."""
    kh, kw, cin, cout = w.shape
    B = x.shape[0]
    patches, Ho, Wo = _im2col(x, kh, kw, stride, (pad, pad, pad, pad))
    y = matmul_bias(patches, w.reshape(kh * kw * cin, cout), b,
                    act=act, out_dtype=out_dtype)
    return y.reshape(B, Ho, Wo, cout)


def conv_transpose2d_s2(x, w_eff, b, act="none", out_dtype=jnp.bfloat16):
    """== torch ConvTranspose2d(Cin,Cout,(3,3),(2,2),(1,1),output_padding=(1,1)),
    via sub-pixel decomposition: a single stride-1 2x2 conv producing the 4
    output phases (no zero-stuffed dilated input), then phase interleave.
    w_eff: (2,2,Cin,4*Cout) effective phase weights (built once at init)."""
    B, H, W, Cin = x.shape
    Cout = w_eff.shape[-1] // 4
    xp = jnp.pad(x, ((0, 0), (0, 1), (0, 1), (0, 0)))
    patches, Ho, Wo = _im2col(xp, 2, 2, 1, (0, 0, 0, 0))     # Ho=H, Wo=W
    y = matmul_bias(patches, w_eff.reshape(4 * Cin, 4 * Cout),
                    jnp.tile(b, 4), act=act, out_dtype=out_dtype)
    # TODO(synk): fold this depth-to-space interleave into the kernel's store
    # via a phase-indexed out_spec to avoid the extra HBM round trip.
    y = y.reshape(B, Ho, Wo, 2, 2, Cout)                     # (.., py, px, C)
    y = jnp.transpose(y, (0, 1, 3, 2, 4, 5)).reshape(B, 2 * Ho, 2 * Wo, Cout)
    return y


def _deconv_eff_weight(w3):
    """(3,3,Cin,Cout) forward-equivalent weight -> (2,2,Cin,4*Cout) phase weight."""
    cin, cout = w3.shape[2], w3.shape[3]
    e = jnp.zeros((2, 2, cin, 4, cout), w3.dtype)
    e = e.at[0, 0, :, 0].set(w3[1, 1])
    e = e.at[0, 0, :, 1].set(w3[1, 0])
    e = e.at[0, 0, :, 2].set(w3[0, 1])
    e = e.at[0, 0, :, 3].set(w3[0, 0])
    e = e.at[0, 1, :, 1].set(w3[1, 2])
    e = e.at[0, 1, :, 3].set(w3[0, 2])
    e = e.at[1, 0, :, 2].set(w3[2, 1])
    e = e.at[1, 0, :, 3].set(w3[2, 0])
    e = e.at[1, 1, :, 3].set(w3[2, 2])
    return e.reshape(2, 2, cin, 4 * cout)


# ---------------------------------------------------------------------------
# Model pieces
# ---------------------------------------------------------------------------
def img_encode(p, x):
    # TODO(synk): fuse e1 (1x1) into e2's tap loop to cut one launch per step.
    x = conv2d(x, p["e1_w"], p["e1_b"], 1, 0, act="leaky", out_dtype=jnp.bfloat16)
    x = conv2d(x, p["e2_w"], p["e2_b"], 2, 1, act="leaky", out_dtype=jnp.bfloat16)
    x = conv2d(x, p["e3_w"], p["e3_b"], 2, 1, act="leaky", out_dtype=jnp.bfloat16)
    return x


def img_decode(p, x):
    x = conv_transpose2d_s2(x, p["d1_we"], p["d1_b"], act="leaky")
    x = conv_transpose2d_s2(x, p["d2_we"], p["d2_b"], act="leaky")
    x = conv2d(x, p["d3_w"], p["d3_b"], 1, 0, act="none", out_dtype=jnp.float32)
    return x


def sa_convlstm_cell(cp, feat, h_img, c, m):
    """Fused cell.  feat,h_img: (B,hf,wf,hd) bf16;  c,m: (B*N,hd) f32."""
    B, hf, wf, hd = feat.shape
    N = hf * wf
    att = (cp["w_qkv"].shape[1] - hd) // 2

    # gate-conv im2col (JAX data movement, bf16, fused by XLA under jit)
    comb = jnp.concatenate([feat, h_img], axis=-1)               # (B,hf,wf,2hd)
    patches, _, _ = _im2col(comb, 3, 3, 1, (1, 1, 1, 1))         # (B*N, 18*hd)

    h_n, c_n, m_n, out_ln = pl.pallas_call(
        functools.partial(_cell_kernel, batch=B, n_tok=N, hd=hd, att=att),
        out_shape=(jax.ShapeDtypeStruct((B * N, hd), jnp.float32),
                   jax.ShapeDtypeStruct((B * N, hd), jnp.float32),
                   jax.ShapeDtypeStruct((B * N, hd), jnp.float32),
                   jax.ShapeDtypeStruct((B, N, hd), jnp.bfloat16)),
        compiler_params=pltpu.CompilerParams(
            vmem_limit_bytes=48 * 1024 * 1024),
    )(patches, c, m,
      cp["w_g"], cp["b_g"], cp["w_qkv"], cp["b_qkv"], cp["w_kv2"], cp["b_kv2"],
      cp["wz_h"], cp["wz_m"], cp["b_z"], cp["wm_z"], cp["wm_h"], cp["b_m"],
      cp["ln_g"], cp["ln_b"])
    return h_n, c_n, m_n, out_ln


# ---------------------------------------------------------------------------
# Forward: lax.scan over time, whole thing jitted
# ---------------------------------------------------------------------------
@jax.jit
def _encode2decode_jit(params, x, y, use_gt):
    B, seq_len, Ci, H, W = x.shape
    horizon = y.shape[1]
    T = seq_len + horizon - 1
    hd = params["e1_w"].shape[-1]
    hf, wf = H // 4, W // 4
    N = hf * wf
    num_layers = len(params["cells"])

    frames = jnp.concatenate([x, y], axis=1)[:, :T]           # (B, T, Ci, H, W)
    frames = jnp.transpose(frames, (1, 0, 3, 4, 2))           # (T, B, H, W, Ci)

    zeros_s = jnp.zeros((B * N, hd), jnp.float32)
    hidden0 = tuple((zeros_s, zeros_s, zeros_s) for _ in range(num_layers))
    out0 = jnp.zeros((B, H, W, Ci), jnp.float32)

    def step(carry, xs):
        hidden, out_prev = carry
        frame, gt = xs
        xt = jnp.where(gt, frame, out_prev)                   # teacher forcing
        feat = img_encode(params, xt.astype(jnp.bfloat16))    # (B, hf, wf, hd)
        new_hidden = []
        out_ln = None
        for i, cp in enumerate(params["cells"]):
            h, c, m = hidden[i]
            h_img = h.astype(jnp.bfloat16).reshape(B, hf, wf, hd)
            h_n, c_n, m_n, out_ln = sa_convlstm_cell(cp, feat, h_img, c, m)
            new_hidden.append((h_n, c_n, m_n))
        out_img = img_decode(params, out_ln.reshape(B, hf, wf, hd))
        return (tuple(new_hidden), out_img), out_img

    _, outs = lax.scan(step, (hidden0, out0), (frames, use_gt))
    preds = outs[seq_len - 1:]                                # (horizon,B,H,W,Ci)
    return jnp.transpose(preds, (1, 0, 4, 2, 3))              # (B,horizon,Ci,H,W)


def encode2decode_forward(params, x, y, teacher_forcing_rate=0.5):
    """x: (B, seq, C, H, W)   y: (B, horizon, C, H, W)  -> (B, horizon, C, H, W)."""
    seq_len, horizon = x.shape[1], y.shape[1]
    T = seq_len + horizon - 1
    # TODO(synk): teacher-forcing decision uses Python RNG per call (like the
    # reference's eager semantics); a traced per-step draw would need jax.random
    # keys threaded through the scan.
    flags = [bool(t < seq_len or random.random() < teacher_forcing_rate)
             for t in range(T)]
    return _encode2decode_jit(params, x, y, jnp.asarray(flags))


# ---------------------------------------------------------------------------
# Deterministic parameter init (synthetic; torch layouts re-expressed for NHWC).
# Matmul weights are stored bf16 once here; biases / LayerNorm affines stay f32.
# ---------------------------------------------------------------------------
def init_params(key, input_dim, hidden_dim, att_dim, num_layers, feat_hw):
    keys = iter(jax.random.split(key, 512))

    def w(shape, scale=0.1, dtype=jnp.bfloat16):
        return (scale * jax.random.normal(next(keys), shape, jnp.float32)
                ).astype(dtype)

    hf, wf = feat_hw
    hd, ad = hidden_dim, att_dim
    d1_w3 = 0.1 * jax.random.normal(next(keys), (3, 3, hd, hd), jnp.float32)
    d2_w3 = 0.1 * jax.random.normal(next(keys), (3, 3, hd, hd), jnp.float32)
    params = {
        # img_encode
        "e1_w": w((1, 1, input_dim, hd)), "e1_b": w((hd,), dtype=jnp.float32),
        "e2_w": w((3, 3, hd, hd)), "e2_b": w((hd,), dtype=jnp.float32),
        "e3_w": w((3, 3, hd, hd)), "e3_b": w((hd,), dtype=jnp.float32),
        # img_decode (transpose convs stored as precomputed sub-pixel weights)
        "d1_we": _deconv_eff_weight(d1_w3).astype(jnp.bfloat16),
        "d1_b": w((hd,), dtype=jnp.float32),
        "d2_we": _deconv_eff_weight(d2_w3).astype(jnp.bfloat16),
        "d2_b": w((hd,), dtype=jnp.float32),
        "d3_w": w((1, 1, hd, input_dim)),
        "d3_b": w((input_dim,), dtype=jnp.float32),
        "cells": [],
    }
    for _ in range(num_layers):
        cell = {
            # gate conv 3x3 over concat([x,h]), flattened tap-major/channel-minor
            "w_g": w((9 * 2 * hd, 4 * hd)),
            "b_g": w((1, 4 * hd), dtype=jnp.float32),
            # merged SAM projections: [wq|wk|wv] from h, [wk2|wv2] from m
            "w_qkv": w((hd, 2 * ad + hd)),
            "b_qkv": w((1, 2 * ad + hd), dtype=jnp.float32),
            "w_kv2": w((hd, ad + hd)),
            "b_kv2": w((1, ad + hd), dtype=jnp.float32),
            # layer_z / layer_m, pre-split along their input blocks
            "wz_h": w((hd, 2 * hd)), "wz_m": w((hd, 2 * hd)),
            "b_z": w((1, 2 * hd), dtype=jnp.float32),
            "wm_z": w((2 * hd, 3 * hd)), "wm_h": w((hd, 3 * hd)),
            "b_m": w((1, 3 * hd), dtype=jnp.float32),
            # LayerNorm affine over the whole (hf, wf, hd) feature (NHWC order)
            "ln_g": (1.0 + 0.01 * jax.random.normal(next(keys), (hf * wf, hd))
                     ).astype(jnp.float32),
            "ln_b": (0.01 * jax.random.normal(next(keys), (hf * wf, hd))
                     ).astype(jnp.float32),
        }
        params["cells"].append(cell)
    return params


# ---------------------------------------------------------------------------
if __name__ == "__main__":
    random.seed(0)
    key = jax.random.PRNGKey(0)
    B, Ci, H, W = 2, 1, 16, 16
    hidden_dim, att_dim, num_layers = 32, 16, 2
    seq_len, horizon = 3, 2

    kx, ky, kp = jax.random.split(key, 3)
    x = jax.random.normal(kx, (B, seq_len, Ci, H, W), jnp.float32)
    y = jax.random.normal(ky, (B, horizon, Ci, H, W), jnp.float32)
    params = init_params(kp, Ci, hidden_dim, att_dim, num_layers,
                         (H // 4, W // 4))

    # teacher_forcing_rate=1.0 -> always ground truth (matches reference behaviour)
    out = encode2decode_forward(params, x, y, teacher_forcing_rate=1.0)
    out = jax.block_until_ready(out)
    assert out.shape == (B, horizon, Ci, H, W), out.shape
    assert bool(jnp.all(jnp.isfinite(out)))
    print("KERNEL_OK")
</pallas_src>

<mosaic_0001>
module attributes {stable_mosaic.version = 11 : i64} {
  func.func @_mm_bias_kernel(%arg0: i32, %arg1: i32, %arg2: memref<256x1xbf16, #tpu.memory_space<vmem>>, %arg3: memref<1x32xbf16, #tpu.memory_space<vmem>>, %arg4: memref<1x32xf32, #tpu.memory_space<vmem>>, %arg5: memref<256x32xbf16, #tpu.memory_space<vmem>>, %arg6: memref<256x32xf32, #tpu.memory_space<vmem>>) attributes {dimension_semantics = [#tpu.dimension_semantics<parallel>, #tpu.dimension_semantics<arbitrary>], iteration_bounds = array<i64: 2, 1>, scalar_prefetch = 0 : i64, scratch_operands = 1 : i64, tpu.core_type = #tpu.core_type<tc>, window_params = [{transform_indices = @transform_0, window_bounds = array<i64: 256, 1>}, {transform_indices = @transform_1, window_bounds = array<i64: 1, 32>}, {pipeline_mode = #tpu.pipeline_mode<synchronous>, transform_indices = @transform_2, window_bounds = array<i64: 1, 32>}, {transform_indices = @transform_3, window_bounds = array<i64: 256, 32>}]} {
    %c0_i32 = arith.constant 0 : i32
    %0 = arith.cmpi eq, %arg1, %c0_i32 : i32
    %1 = arith.extui %0 : i1 to i32
    %c0_i32_0 = arith.constant 0 : i32
    %2 = arith.cmpi ne, %1, %c0_i32_0 : i32
    scf.if %2 {
      %cst_10 = arith.constant 0.000000e+00 : f32
      %12 = vector.broadcast %cst_10 : f32 to vector<256x32xf32>
      %c0_11 = arith.constant 0 : index
      %c0_12 = arith.constant 0 : index
      %13 = vector.load %arg6[%c0_11, %c0_12] : memref<256x32xf32, #tpu.memory_space<vmem>>, vector<256x32xf32>
      tpu.vector_store %arg6[%c0_11, %c0_12], %12 {strides = array<i32>} : memref<256x32xf32, #tpu.memory_space<vmem>>, vector<256x32xf32>,
    } else {
    }
    %c0 = arith.constant 0 : index
    %c0_1 = arith.constant 0 : index
    %3 = vector.load %arg6[%c0, %c0_1] : memref<256x32xf32, #tpu.memory_space<vmem>>, vector<256x32xf32>
    %c0_2 = arith.constant 0 : index
    %c0_3 = arith.constant 0 : index
    %4 = vector.load %arg2[%c0_2, %c0_3] : memref<256x1xbf16, #tpu.memory_space<vmem>>, vector<256x1xbf16>
    %c0_4 = arith.constant 0 : index
    %c0_5 = arith.constant 0 : index
    %5 = vector.load %arg3[%c0_4, %c0_5] : memref<1x32xbf16, #tpu.memory_space<vmem>>, vector<1x32xbf16>
    %cst = arith.constant dense<0.000000e+00> : vector<256x32xf32>
    %6 = tpu.matmul %4, %5, %cst {dimension_numbers = #tpu.dot_dimension_numbers<[1], [0], [0], [1], [0, 0, 1, 1], [], []>} : vector<256x1xbf16>, vector<1x32xbf16>, vector<256x32xf32> -> vector<256x32xf32>
    %7 = arith.addf %3, %6 : vector<256x32xf32>
    %c0_6 = arith.constant 0 : index
    %c0_7 = arith.constant 0 : index
    %8 = vector.load %arg6[%c0_6, %c0_7] : memref<256x32xf32, #tpu.memory_space<vmem>>, vector<256x32xf32>
    tpu.vector_store %arg6[%c0_6, %c0_7], %7 {strides = array<i32>} : memref<256x32xf32, #tpu.memory_space<vmem>>, vector<256x32xf32>,
    %c0_i32_8 = arith.constant 0 : i32
    %9 = arith.cmpi eq, %arg1, %c0_i32_8 : i32
    %10 = arith.extui %9 : i1 to i32
    %c0_i32_9 = arith.constant 0 : i32
    %11 = arith.cmpi ne, %10, %c0_i32_9 : i32
    scf.if %11 {
      %c0_10 = arith.constant 0 : index
      %c0_11 = arith.constant 0 : index
      %12 = vector.load %arg6[%c0_10, %c0_11] : memref<256x32xf32, #tpu.memory_space<vmem>>, vector<256x32xf32>
      %c0_12 = arith.constant 0 : index
      %c0_13 = arith.constant 0 : index
      %13 = vector.load %arg4[%c0_12, %c0_13] : memref<1x32xf32, #tpu.memory_space<vmem>>, vector<1x32xf32>
      %14 = vector.broadcast %13 : vector<1x32xf32> to vector<256x32xf32>
      %15 = arith.addf %12, %14 : vector<256x32xf32>
      %cst_14 = arith.constant 0.000000e+00 : f32
      %16 = vector.broadcast %cst_14 : f32 to vector<256x32xf32>
      %17 = arith.cmpf oge, %15, %16 : vector<256x32xf32>
      %cst_15 = arith.constant 1.000000e-01 : f32
      %18 = vector.broadcast %cst_15 : f32 to vector<256x32xf32>
      %19 = arith.mulf %18, %15 : vector<256x32xf32>
      %20 = arith.select %17, %15, %19 : vector<256x32xi1>, vector<256x32xf32>
      %21 = arith.truncf %20 : vector<256x32xf32> to vector<256x32xbf16>
      %c0_16 = arith.constant 0 : index
      %c0_17 = arith.constant 0 : index
      %22 = vector.load %arg5[%c0_16, %c0_17] : memref<256x32xbf16, #tpu.memory_space<vmem>>, vector<256x32xbf16>
      tpu.vector_store %arg5[%c0_16, %c0_17], %21 {strides = array<i32>} : memref<256x32xbf16, #tpu.memory_space<vmem>>, vector<256x32xbf16>,
    } else {
    }
    return
  }
  func.func @transform_0(%arg0: i32, %arg1: i32) -> (i32, i32) {
    %c0_i32 = arith.constant 0 : i32
    return %arg0, %arg1 : i32, i32
  }
  func.func @transform_1(%arg0: i32, %arg1: i32) -> (i32, i32) {
    %c0_i32 = arith.constant 0 : i32
    %c0_i32_0 = arith.constant 0 : i32
    return %arg1, %c0_i32 : i32, i32
  }
  func.func @transform_2(%arg0: i32, %arg1: i32) -> (i32, i32) {
    %c0_i32 = arith.constant 0 : i32
    %c0_i32_0 = arith.constant 0 : i32
    %c0_i32_1 = arith.constant 0 : i32
    return %c0_i32, %c0_i32_0 : i32, i32
  }
  func.func @transform_3(%arg0: i32, %arg1: i32) -> (i32, i32) {
    %c0_i32 = arith.constant 0 : i32
    %c0_i32_0 = arith.constant 0 : i32
    return %arg0, %c0_i32 : i32, i32
  }
}

module attributes {stable_mosaic.version = 11 : i64} {
  func.func @_mm_bias_kernel(%arg0: i32, %arg1: i32, %arg2: memref<128x288xbf16, #tpu.memory_space<vmem>>, %arg3: memref<288x32xbf16, #tpu.memory_space<vmem>>, %arg4: memref<1x32xf32, #tpu.memory_space<vmem>>, %arg5: memref<128x32xbf16, #tpu.memory_space<vmem>>, %arg6: memref<128x32xf32, #tpu.memory_space<vmem>>) attributes {dimension_semantics = [#tpu.dimension_semantics<parallel>, #tpu.dimension_semantics<arbitrary>], iteration_bounds = array<i64: 1, 1>, scalar_prefetch = 0 : i64, scratch_operands = 1 : i64, tpu.core_type = #tpu.core_type<tc>, window_params = [{transform_indices = @transform_0, window_bounds = array<i64: 128, 288>}, {transform_indices = @transform_1, window_bounds = array<i64: 288, 32>}, {pipeline_mode = #tpu.pipeline_mode<synchronous>, transform_indices = @transform_2, window_bounds = array<i64: 1, 32>}, {transform_indices = @transform_3, window_bounds = array<i64: 128, 32>}]} {
    %c0_i32 = arith.constant 0 : i32
    %0 = arith.cmpi eq, %arg1, %c0_i32 : i32
    %1 = arith.extui %0 : i1 to i32
    %c0_i32_0 = arith.constant 0 : i32
    %2 = arith.cmpi ne, %1, %c0_i32_0 : i32
    scf.if %2 {
      %cst_10 = arith.constant 0.000000e+00 : f32
      %12 = vector.broadcast %cst_10 : f32 to vector<128x32xf32>
      %c0_11 = arith.constant 0 : index
      %c0_12 = arith.constant 0 : index
      %13 = vector.load %arg6[%c0_11, %c0_12] : memref<128x32xf32, #tpu.memory_space<vmem>>, vector<128x32xf32>
      tpu.vector_store %arg6[%c0_11, %c0_12], %12 {strides = array<i32>} : memref<128x32xf32, #tpu.memory_space<vmem>>, vector<128x32xf32>,
    } else {
    }
    %c0 = arith.constant 0 : index
    %c0_1 = arith.constant 0 : index
    %3 = vector.load %arg6[%c0, %c0_1] : memref<128x32xf32, #tpu.memory_space<vmem>>, vector<128x32xf32>
    %c0_2 = arith.constant 0 : index
    %c0_3 = arith.constant 0 : index
    %4 = vector.load %arg2[%c0_2, %c0_3] : memref<128x288xbf16, #tpu.memory_space<vmem>>, vector<128x288xbf16>
    %c0_4 = arith.constant 0 : index
    %c0_5 = arith.constant 0 : index
    %5 = vector.load %arg3[%c0_4, %c0_5] : memref<288x32xbf16, #tpu.memory_space<vmem>>, vector<288x32xbf16>
    %cst = arith.constant dense<0.000000e+00> : vector<128x32xf32>
    %6 = tpu.matmul %4, %5, %cst {dimension_numbers = #tpu.dot_dimension_numbers<[1], [0], [0], [1], [0, 0, 1, 1], [], []>} : vector<128x288xbf16>, vector<288x32xbf16>, vector<128x32xf32> -> vector<128x32xf32>
    %7 = arith.addf %3, %6 : vector<128x32xf32>
    %c0_6 = arith.constant 0 : index
    %c0_7 = arith.constant 0 : index
    %8 = vector.load %arg6[%c0_6, %c0_7] : memref<128x32xf32, #tpu.memory_space<vmem>>, vector<128x32xf32>
    tpu.vector_store %arg6[%c0_6, %c0_7], %7 {strides = array<i32>} : memref<128x32xf32, #tpu.memory_space<vmem>>, vector<128x32xf32>,
    %c0_i32_8 = arith.constant 0 : i32
    %9 = arith.cmpi eq, %arg1, %c0_i32_8 : i32
    %10 = arith.extui %9 : i1 to i32
    %c0_i32_9 = arith.constant 0 : i32
    %11 = arith.cmpi ne, %10, %c0_i32_9 : i32
    scf.if %11 {
      %c0_10 = arith.constant 0 : index
      %c0_11 = arith.constant 0 : index
      %12 = vector.load %arg6[%c0_10, %c0_11] : memref<128x32xf32, #tpu.memory_space<vmem>>, vector<128x32xf32>
      %c0_12 = arith.constant 0 : index
      %c0_13 = arith.constant 0 : index
      %13 = vector.load %arg4[%c0_12, %c0_13] : memref<1x32xf32, #tpu.memory_space<vmem>>, vector<1x32xf32>
      %14 = vector.broadcast %13 : vector<1x32xf32> to vector<128x32xf32>
      %15 = arith.addf %12, %14 : vector<128x32xf32>
      %cst_14 = arith.constant 0.000000e+00 : f32
      %16 = vector.broadcast %cst_14 : f32 to vector<128x32xf32>
      %17 = arith.cmpf oge, %15, %16 : vector<128x32xf32>
      %cst_15 = arith.constant 1.000000e-01 : f32
      %18 = vector.broadcast %cst_15 : f32 to vector<128x32xf32>
      %19 = arith.mulf %18, %15 : vector<128x32xf32>
      %20 = arith.select %17, %15, %19 : vector<128x32xi1>, vector<128x32xf32>
      %21 = arith.truncf %20 : vector<128x32xf32> to vector<128x32xbf16>
      %c0_16 = arith.constant 0 : index
      %c0_17 = arith.constant 0 : index
      %22 = vector.load %arg5[%c0_16, %c0_17] : memref<128x32xbf16, #tpu.memory_space<vmem>>, vector<128x32xbf16>
      tpu.vector_store %arg5[%c0_16, %c0_17], %21 {strides = array<i32>} : memref<128x32xbf16, #tpu.memory_space<vmem>>, vector<128x32xbf16>,
    } else {
    }
    return
  }
  func.func @transform_0(%arg0: i32, %arg1: i32) -> (i32, i32) {
    %c0_i32 = arith.constant 0 : i32
    return %arg0, %arg1 : i32, i32
  }
  func.func @transform_1(%arg0: i32, %arg1: i32) -> (i32, i32) {
    %c0_i32 = arith.constant 0 : i32
    %c0_i32_0 = arith.constant 0 : i32
    return %arg1, %c0_i32 : i32, i32
  }
  func.func @transform_2(%arg0: i32, %arg1: i32) -> (i32, i32) {
    %c0_i32 = arith.constant 0 : i32
    %c0_i32_0 = arith.constant 0 : i32
    %c0_i32_1 = arith.constant 0 : i32
    return %c0_i32, %c0_i32_0 : i32, i32
  }
  func.func @transform_3(%arg0: i32, %arg1: i32) -> (i32, i32) {
    %c0_i32 = arith.constant 0 : i32
    %c0_i32_0 = arith.constant 0 : i32
    return %arg0, %c0_i32 : i32, i32
  }
}

module attributes {stable_mosaic.version = 11 : i64} {
  func.func @_mm_bias_kernel(%arg0: i32, %arg1: i32, %arg2: memref<32x288xbf16, #tpu.memory_space<vmem>>, %arg3: memref<288x32xbf16, #tpu.memory_space<vmem>>, %arg4: memref<1x32xf32, #tpu.memory_space<vmem>>, %arg5: memref<32x32xbf16, #tpu.memory_space<vmem>>, %arg6: memref<32x32xf32, #tpu.memory_space<vmem>>) attributes {dimension_semantics = [#tpu.dimension_semantics<parallel>, #tpu.dimension_semantics<arbitrary>], iteration_bounds = array<i64: 1, 1>, scalar_prefetch = 0 : i64, scratch_operands = 1 : i64, tpu.core_type = #tpu.core_type<tc>, window_params = [{transform_indices = @transform_0, window_bounds = array<i64: 32, 288>}, {transform_indices = @transform_1, window_bounds = array<i64: 288, 32>}, {pipeline_mode = #tpu.pipeline_mode<synchronous>, transform_indices = @transform_2, window_bounds = array<i64: 1, 32>}, {transform_indices = @transform_3, window_bounds = array<i64: 32, 32>}]} {
    %c0_i32 = arith.constant 0 : i32
    %0 = arith.cmpi eq, %arg1, %c0_i32 : i32
    %1 = arith.extui %0 : i1 to i32
    %c0_i32_0 = arith.constant 0 : i32
    %2 = arith.cmpi ne, %1, %c0_i32_0 : i32
    scf.if %2 {
      %cst_10 = arith.constant 0.000000e+00 : f32
      %12 = vector.broadcast %cst_10 : f32 to vector<32x32xf32>
      %c0_11 = arith.constant 0 : index
      %c0_12 = arith.constant 0 : index
      %13 = vector.load %arg6[%c0_11, %c0_12] : memref<32x32xf32, #tpu.memory_space<vmem>>, vector<32x32xf32>
      tpu.vector_store %arg6[%c0_11, %c0_12], %12 {strides = array<i32>} : memref<32x32xf32, #tpu.memory_space<vmem>>, vector<32x32xf32>,
    } else {
    }
    %c0 = arith.constant 0 : index
    %c0_1 = arith.constant 0 : index
    %3 = vector.load %arg6[%c0, %c0_1] : memref<32x32xf32, #tpu.memory_space<vmem>>, vector<32x32xf32>
    %c0_2 = arith.constant 0 : index
    %c0_3 = arith.constant 0 : index
    %4 = vector.load %arg2[%c0_2, %c0_3] : memref<32x288xbf16, #tpu.memory_space<vmem>>, vector<32x288xbf16>
    %c0_4 = arith.constant 0 : index
    %c0_5 = arith.constant 0 : index
    %5 = vector.load %arg3[%c0_4, %c0_5] : memref<288x32xbf16, #tpu.memory_space<vmem>>, vector<288x32xbf16>
    %cst = arith.constant dense<0.000000e+00> : vector<32x32xf32>
    %6 = tpu.matmul %4, %5, %cst {dimension_numbers = #tpu.dot_dimension_numbers<[1], [0], [0], [1], [0, 0, 1, 1], [], []>} : vector<32x288xbf16>, vector<288x32xbf16>, vector<32x32xf32> -> vector<32x32xf32>
    %7 = arith.addf %3, %6 : vector<32x32xf32>
    %c0_6 = arith.constant 0 : index
    %c0_7 = arith.constant 0 : index
    %8 = vector.load %arg6[%c0_6, %c0_7] : memref<32x32xf32, #tpu.memory_space<vmem>>, vector<32x32xf32>
    tpu.vector_store %arg6[%c0_6, %c0_7], %7 {strides = array<i32>} : memref<32x32xf32, #tpu.memory_space<vmem>>, vector<32x32xf32>,
    %c0_i32_8 = arith.constant 0 : i32
    %9 = arith.cmpi eq, %arg1, %c0_i32_8 : i32
    %10 = arith.extui %9 : i1 to i32
    %c0_i32_9 = arith.constant 0 : i32
    %11 = arith.cmpi ne, %10, %c0_i32_9 : i32
    scf.if %11 {
      %c0_10 = arith.constant 0 : index
      %c0_11 = arith.constant 0 : index
      %12 = vector.load %arg6[%c0_10, %c0_11] : memref<32x32xf32, #tpu.memory_space<vmem>>, vector<32x32xf32>
      %c0_12 = arith.constant 0 : index
      %c0_13 = arith.constant 0 : index
      %13 = vector.load %arg4[%c0_12, %c0_13] : memref<1x32xf32, #tpu.memory_space<vmem>>, vector<1x32xf32>
      %14 = vector.broadcast %13 : vector<1x32xf32> to vector<32x32xf32>
      %15 = arith.addf %12, %14 : vector<32x32xf32>
      %cst_14 = arith.constant 0.000000e+00 : f32
      %16 = vector.broadcast %cst_14 : f32 to vector<32x32xf32>
      %17 = arith.cmpf oge, %15, %16 : vector<32x32xf32>
      %cst_15 = arith.constant 1.000000e-01 : f32
      %18 = vector.broadcast %cst_15 : f32 to vector<32x32xf32>
      %19 = arith.mulf %18, %15 : vector<32x32xf32>
      %20 = arith.select %17, %15, %19 : vector<32x32xi1>, vector<32x32xf32>
      %21 = arith.truncf %20 : vector<32x32xf32> to vector<32x32xbf16>
      %c0_16 = arith.constant 0 : index
      %c0_17 = arith.constant 0 : index
      %22 = vector.load %arg5[%c0_16, %c0_17] : memref<32x32xbf16, #tpu.memory_space<vmem>>, vector<32x32xbf16>
      tpu.vector_store %arg5[%c0_16, %c0_17], %21 {strides = array<i32>} : memref<32x32xbf16, #tpu.memory_space<vmem>>, vector<32x32xbf16>,
    } else {
    }
    return
  }
  func.func @transform_0(%arg0: i32, %arg1: i32) -> (i32, i32) {
    %c0_i32 = arith.constant 0 : i32
    return %arg0, %arg1 : i32, i32
  }
  func.func @transform_1(%arg0: i32, %arg1: i32) -> (i32, i32) {
    %c0_i32 = arith.constant 0 : i32
    %c0_i32_0 = arith.constant 0 : i32
    return %arg1, %c0_i32 : i32, i32
  }
  func.func @transform_2(%arg0: i32, %arg1: i32) -> (i32, i32) {
    %c0_i32 = arith.constant 0 : i32
    %c0_i32_0 = arith.constant 0 : i32
    %c0_i32_1 = arith.constant 0 : i32
    return %c0_i32, %c0_i32_0 : i32, i32
  }
  func.func @transform_3(%arg0: i32, %arg1: i32) -> (i32, i32) {
    %c0_i32 = arith.constant 0 : i32
    %c0_i32_0 = arith.constant 0 : i32
    return %arg0, %c0_i32 : i32, i32
  }
}

module attributes {stable_mosaic.version = 11 : i64} {
  func.func @_mm_bias_kernel(%arg0: i32, %arg1: i32, %arg2: memref<32x128xbf16, #tpu.memory_space<vmem>>, %arg3: memref<128x128xbf16, #tpu.memory_space<vmem>>, %arg4: memref<1x128xf32, #tpu.memory_space<vmem>>, %arg5: memref<32x128xbf16, #tpu.memory_space<vmem>>, %arg6: memref<32x128xf32, #tpu.memory_space<vmem>>) attributes {dimension_semantics = [#tpu.dimension_semantics<parallel>, #tpu.dimension_semantics<arbitrary>], iteration_bounds = array<i64: 1, 1>, scalar_prefetch = 0 : i64, scratch_operands = 1 : i64, tpu.core_type = #tpu.core_type<tc>, window_params = [{transform_indices = @transform_0, window_bounds = array<i64: 32, 128>}, {transform_indices = @transform_1, window_bounds = array<i64: 128, 128>}, {pipeline_mode = #tpu.pipeline_mode<synchronous>, transform_indices = @transform_2, window_bounds = array<i64: 1, 128>}, {transform_indices = @transform_3, window_bounds = array<i64: 32, 128>}]} {
    %c0_i32 = arith.constant 0 : i32
    %0 = arith.cmpi eq, %arg1, %c0_i32 : i32
    %1 = arith.extui %0 : i1 to i32
    %c0_i32_0 = arith.constant 0 : i32
    %2 = arith.cmpi ne, %1, %c0_i32_0 : i32
    scf.if %2 {
      %cst_10 = arith.constant 0.000000e+00 : f32
      %12 = vector.broadcast %cst_10 : f32 to vector<32x128xf32>
      %c0_11 = arith.constant 0 : index
      %c0_12 = arith.constant 0 : index
      %13 = vector.load %arg6[%c0_11, %c0_12] : memref<32x128xf32, #tpu.memory_space<vmem>>, vector<32x128xf32>
      tpu.vector_store %arg6[%c0_11, %c0_12], %12 {strides = array<i32>} : memref<32x128xf32, #tpu.memory_space<vmem>>, vector<32x128xf32>,
    } else {
    }
    %c0 = arith.constant 0 : index
    %c0_1 = arith.constant 0 : index
    %3 = vector.load %arg6[%c0, %c0_1] : memref<32x128xf32, #tpu.memory_space<vmem>>, vector<32x128xf32>
    %c0_2 = arith.constant 0 : index
    %c0_3 = arith.constant 0 : index
    %4 = vector.load %arg2[%c0_2, %c0_3] : memref<32x128xbf16, #tpu.memory_space<vmem>>, vector<32x128xbf16>
    %c0_4 = arith.constant 0 : index
    %c0_5 = arith.constant 0 : index
    %5 = vector.load %arg3[%c0_4, %c0_5] : memref<128x128xbf16, #tpu.memory_space<vmem>>, vector<128x128xbf16>
    %cst = arith.constant dense<0.000000e+00> : vector<32x128xf32>
    %6 = tpu.matmul %4, %5, %cst {dimension_numbers = #tpu.dot_dimension_numbers<[1], [0], [0], [1], [0, 0, 1, 1], [], []>} : vector<32x128xbf16>, vector<128x128xbf16>, vector<32x128xf32> -> vector<32x128xf32>
    %7 = arith.addf %3, %6 : vector<32x128xf32>
    %c0_6 = arith.constant 0 : index
    %c0_7 = arith.constant 0 : index
    %8 = vector.load %arg6[%c0_6, %c0_7] : memref<32x128xf32, #tpu.memory_space<vmem>>, vector<32x128xf32>
    tpu.vector_store %arg6[%c0_6, %c0_7], %7 {strides = array<i32>} : memref<32x128xf32, #tpu.memory_space<vmem>>, vector<32x128xf32>,
    %c0_i32_8 = arith.constant 0 : i32
    %9 = arith.cmpi eq, %arg1, %c0_i32_8 : i32
    %10 = arith.extui %9 : i1 to i32
    %c0_i32_9 = arith.constant 0 : i32
    %11 = arith.cmpi ne, %10, %c0_i32_9 : i32
    scf.if %11 {
      %c0_10 = arith.constant 0 : index
      %c0_11 = arith.constant 0 : index
      %12 = vector.load %arg6[%c0_10, %c0_11] : memref<32x128xf32, #tpu.memory_space<vmem>>, vector<32x128xf32>
      %c0_12 = arith.constant 0 : index
      %c0_13 = arith.constant 0 : index
      %13 = vector.load %arg4[%c0_12, %c0_13] : memref<1x128xf32, #tpu.memory_space<vmem>>, vector<1x128xf32>
      %14 = vector.broadcast %13 : vector<1x128xf32> to vector<32x128xf32>
      %15 = arith.addf %12, %14 : vector<32x128xf32>
      %cst_14 = arith.constant 0.000000e+00 : f32
      %16 = vector.broadcast %cst_14 : f32 to vector<32x128xf32>
      %17 = arith.cmpf oge, %15, %16 : vector<32x128xf32>
      %cst_15 = arith.constant 1.000000e-01 : f32
      %18 = vector.broadcast %cst_15 : f32 to vector<32x128xf32>
      %19 = arith.mulf %18, %15 : vector<32x128xf32>
      %20 = arith.select %17, %15, %19 : vector<32x128xi1>, vector<32x128xf32>
      %21 = arith.truncf %20 : vector<32x128xf32> to vector<32x128xbf16>
      %c0_16 = arith.constant 0 : index
      %c0_17 = arith.constant 0 : index
      %22 = vector.load %arg5[%c0_16, %c0_17] : memref<32x128xbf16, #tpu.memory_space<vmem>>, vector<32x128xbf16>
      tpu.vector_store %arg5[%c0_16, %c0_17], %21 {strides = array<i32>} : memref<32x128xbf16, #tpu.memory_space<vmem>>, vector<32x128xbf16>,
    } else {
    }
    return
  }
  func.func @transform_0(%arg0: i32, %arg1: i32) -> (i32, i32) {
    %c0_i32 = arith.constant 0 : i32
    return %arg0, %arg1 : i32, i32
  }
  func.func @transform_1(%arg0: i32, %arg1: i32) -> (i32, i32) {
    %c0_i32 = arith.constant 0 : i32
    %c0_i32_0 = arith.constant 0 : i32
    return %arg1, %c0_i32 : i32, i32
  }
  func.func @transform_2(%arg0: i32, %arg1: i32) -> (i32, i32) {
    %c0_i32 = arith.constant 0 : i32
    %c0_i32_0 = arith.constant 0 : i32
    %c0_i32_1 = arith.constant 0 : i32
    return %c0_i32, %c0_i32_0 : i32, i32
  }
  func.func @transform_3(%arg0: i32, %arg1: i32) -> (i32, i32) {
    %c0_i32 = arith.constant 0 : i32
    %c0_i32_0 = arith.constant 0 : i32
    return %arg0, %c0_i32 : i32, i32
  }
}

module attributes {stable_mosaic.version = 11 : i64} {
  func.func @_cell_kernel(%arg0: memref<32x576xbf16, #tpu.memory_space<vmem>>, %arg1: memref<32x32xf32, #tpu.memory_space<vmem>>, %arg2: memref<32x32xf32, #tpu.memory_space<vmem>>, %arg3: memref<576x128xbf16, #tpu.memory_space<vmem>>, %arg4: memref<1x128xf32, #tpu.memory_space<vmem>>, %arg5: memref<32x64xbf16, #tpu.memory_space<vmem>>, %arg6: memref<1x64xf32, #tpu.memory_space<vmem>>, %arg7: memref<32x48xbf16, #tpu.memory_space<vmem>>, %arg8: memref<1x48xf32, #tpu.memory_space<vmem>>, %arg9: memref<32x64xbf16, #tpu.memory_space<vmem>>, %arg10: memref<32x64xbf16, #tpu.memory_space<vmem>>, %arg11: memref<1x64xf32, #tpu.memory_space<vmem>>, %arg12: memref<64x96xbf16, #tpu.memory_space<vmem>>, %arg13: memref<32x96xbf16, #tpu.memory_space<vmem>>, %arg14: memref<1x96xf32, #tpu.memory_space<vmem>>, %arg15: memref<16x32xf32, #tpu.memory_space<vmem>>, %arg16: memref<16x32xf32, #tpu.memory_space<vmem>>, %arg17: memref<32x32xf32, #tpu.memory_space<vmem>>, %arg18: memref<32x32xf32, #tpu.memory_space<vmem>>, %arg19: memref<32x32xf32, #tpu.memory_space<vmem>>, %arg20: memref<2x16x32xbf16, #tpu.memory_space<vmem>>) attributes {dimension_semantics = [], scalar_prefetch = 0 : i64, scratch_operands = 0 : i64, tpu.core_type = #tpu.core_type<tc>} {
    %c0 = arith.constant 0 : index
    %c0_0 = arith.constant 0 : index
    %0 = vector.load %arg0[%c0, %c0_0] : memref<32x576xbf16, #tpu.memory_space<vmem>>, vector<32x576xbf16>
    %c0_1 = arith.constant 0 : index
    %c0_2 = arith.constant 0 : index
    %1 = vector.load %arg3[%c0_1, %c0_2] : memref<576x128xbf16, #tpu.memory_space<vmem>>, vector<576x128xbf16>
    %cst = arith.constant dense<0.000000e+00> : vector<32x128xf32>
    %2 = tpu.matmul %0, %1, %cst {dimension_numbers = #tpu.dot_dimension_numbers<[1], [0], [0], [1], [0, 0, 1, 1], [], []>} : vector<32x576xbf16>, vector<576x128xbf16>, vector<32x128xf32> -> vector<32x128xf32>
    %c0_3 = arith.constant 0 : index
    %c0_4 = arith.constant 0 : index
    %3 = vector.load %arg4[%c0_3, %c0_4] : memref<1x128xf32, #tpu.memory_space<vmem>>, vector<1x128xf32>
    %4 = vector.broadcast %3 : vector<1x128xf32> to vector<32x128xf32>
    %5 = arith.addf %2, %4 : vector<32x128xf32>
    %c0_5 = arith.constant 0 : index
    %c0_6 = arith.constant 0 : index
    %6 = vector.load %arg1[%c0_5, %c0_6] : memref<32x32xf32, #tpu.memory_space<vmem>>, vector<32x32xf32>
    %c0_7 = arith.constant 0 : index
    %c0_8 = arith.constant 0 : index
    %7 = vector.load %arg2[%c0_7, %c0_8] : memref<32x32xf32, #tpu.memory_space<vmem>>, vector<32x32xf32>
    %8 = vector.extract_strided_slice %5 {offsets = [0, 0], sizes = [32, 32], strides = [1, 1]} : vector<32x128xf32> to vector<32x32xf32>
    %9 = arith.negf %8 : vector<32x32xf32>
    %10 = math.exp %9 : vector<32x32xf32>
    %cst_9 = arith.constant 1.000000e+00 : f32
    %11 = vector.broadcast %cst_9 : f32 to vector<32x32xf32>
    %12 = arith.addf %11, %10 : vector<32x32xf32>
    %13 = arith.divf %11, %12 : vector<32x32xf32>
    %14 = vector.extract_strided_slice %5 {offsets = [0, 32], sizes = [32, 32], strides = [1, 1]} : vector<32x128xf32> to vector<32x32xf32>
    %15 = arith.negf %14 : vector<32x32xf32>
    %16 = math.exp %15 : vector<32x32xf32>
    %cst_10 = arith.constant 1.000000e+00 : f32
    %17 = vector.broadcast %cst_10 : f32 to vector<32x32xf32>
    %18 = arith.addf %17, %16 : vector<32x32xf32>
    %19 = arith.divf %17, %18 : vector<32x32xf32>
    %20 = vector.extract_strided_slice %5 {offsets = [0, 64], sizes = [32, 32], strides = [1, 1]} : vector<32x128xf32> to vector<32x32xf32>
    %21 = arith.negf %20 : vector<32x32xf32>
    %22 = math.exp %21 : vector<32x32xf32>
    %cst_11 = arith.constant 1.000000e+00 : f32
    %23 = vector.broadcast %cst_11 : f32 to vector<32x32xf32>
    %24 = arith.addf %23, %22 : vector<32x32xf32>
    %25 = arith.divf %23, %24 : vector<32x32xf32>
    %26 = vector.extract_strided_slice %5 {offsets = [0, 96], sizes = [32, 32], strides = [1, 1]} : vector<32x128xf32> to vector<32x32xf32>
    %27 = math.tanh %26 : vector<32x32xf32>
    %28 = arith.mulf %19, %6 : vector<32x32xf32>
    %29 = arith.mulf %13, %27 : vector<32x32xf32>
    %30 = arith.addf %28, %29 : vector<32x32xf32>
    %31 = math.tanh %30 : vector<32x32xf32>
    %32 = arith.mulf %25, %31 : vector<32x32xf32>
    %33 = arith.truncf %32 : vector<32x32xf32> to vector<32x32xbf16>
    %c0_12 = arith.constant 0 : index
    %c0_13 = arith.constant 0 : index
    %34 = vector.load %arg5[%c0_12, %c0_13] : memref<32x64xbf16, #tpu.memory_space<vmem>>, vector<32x64xbf16>
    %cst_14 = arith.constant dense<0.000000e+00> : vector<32x64xf32>
    %35 = tpu.matmul %33, %34, %cst_14 {dimension_numbers = #tpu.dot_dimension_numbers<[1], [0], [0], [1], [0, 0, 1, 1], [], []>} : vector<32x32xbf16>, vector<32x64xbf16>, vector<32x64xf32> -> vector<32x64xf32>
    %c0_15 = arith.constant 0 : index
    %c0_16 = arith.constant 0 : index
    %36 = vector.load %arg6[%c0_15, %c0_16] : memref<1x64xf32, #tpu.memory_space<vmem>>, vector<1x64xf32>
    %37 = vector.broadcast %36 : vector<1x64xf32> to vector<32x64xf32>
    %38 = arith.addf %35, %37 : vector<32x64xf32>
    %39 = arith.truncf %7 : vector<32x32xf32> to vector<32x32xbf16>
    %c0_17 = arith.constant 0 : index
    %c0_18 = arith.constant 0 : index
    %40 = vector.load %arg7[%c0_17, %c0_18] : memref<32x48xbf16, #tpu.memory_space<vmem>>, vector<32x48xbf16>
    %cst_19 = arith.constant dense<0.000000e+00> : vector<32x48xf32>
    %41 = tpu.matmul %39, %40, %cst_19 {dimension_numbers = #tpu.dot_dimension_numbers<[1], [0], [0], [1], [0, 0, 1, 1], [], []>} : vector<32x32xbf16>, vector<32x48xbf16>, vector<32x48xf32> -> vector<32x48xf32>
    %c0_20 = arith.constant 0 : index
    %c0_21 = arith.constant 0 : index
    %42 = vector.load %arg8[%c0_20, %c0_21] : memref<1x48xf32, #tpu.memory_space<vmem>>, vector<1x48xf32>
    %43 = vector.broadcast %42 : vector<1x48xf32> to vector<32x48xf32>
    %44 = arith.addf %41, %43 : vector<32x48xf32>
    %45 = vector.extract_strided_slice %38 {offsets = [0, 0], sizes = [32, 16], strides = [1, 1]} : vector<32x64xf32> to vector<32x16xf32>
    %46 = arith.truncf %45 : vector<32x16xf32> to vector<32x16xbf16>
    %47 = vector.shape_cast %46 : vector<32x16xbf16> to vector<2x16x16xbf16>
    %48 = vector.extract_strided_slice %38 {offsets = [0, 16], sizes = [32, 16], strides = [1, 1]} : vector<32x64xf32> to vector<32x16xf32>
    %49 = arith.truncf %48 : vector<32x16xf32> to vector<32x16xbf16>
    %50 = vector.shape_cast %49 : vector<32x16xbf16> to vector<2x16x16xbf16>
    %51 = vector.extract_strided_slice %38 {offsets = [0, 32], sizes = [32, 32], strides = [1, 1]} : vector<32x64xf32> to vector<32x32xf32>
    %52 = arith.truncf %51 : vector<32x32xf32> to vector<32x32xbf16>
    %53 = vector.shape_cast %52 : vector<32x32xbf16> to vector<2x16x32xbf16>
    %54 = vector.extract_strided_slice %44 {offsets = [0, 0], sizes = [32, 16], strides = [1, 1]} : vector<32x48xf32> to vector<32x16xf32>
    %55 = arith.truncf %54 : vector<32x16xf32> to vector<32x16xbf16>
    %56 = vector.shape_cast %55 : vector<32x16xbf16> to vector<2x16x16xbf16>
    %57 = vector.extract_strided_slice %44 {offsets = [0, 16], sizes = [32, 32], strides = [1, 1]} : vector<32x48xf32> to vector<32x32xf32>
    %58 = arith.truncf %57 : vector<32x32xf32> to vector<32x32xbf16>
    %59 = vector.shape_cast %58 : vector<32x32xbf16> to vector<2x16x32xbf16>
    "tpu.trace_start"() <{level = 10 : i32, message = "bnd,bmd->bnm"}> : () -> ()
    %cst_22 = arith.constant dense<0.000000e+00> : vector<2x16x16xf32>
    %60 = tpu.matmul %47, %50, %cst_22 {dimension_numbers = #tpu.dot_dimension_numbers<[2], [2], [1], [1], [0, 0, 0, 1, 1, 1], [0], [0]>} : vector<2x16x16xbf16>, vector<2x16x16xbf16>, vector<2x16x16xf32> -> vector<2x16x16xf32>
    "tpu.trace_stop"() : () -> ()
    %cst_23 = arith.constant dense<0xFF800000> : vector<2x16xf32>
    %61 = vector.multi_reduction <maximumf>, %60, %cst_23 [2] : vector<2x16x16xf32> to vector<2x16xf32>
    %62 = vector.shape_cast %61 : vector<2x16xf32> to vector<2x16x1xf32>
    %63 = vector.broadcast %62 : vector<2x16x1xf32> to vector<2x16x16xf32>
    %64 = arith.subf %60, %63 : vector<2x16x16xf32>
    %65 = math.exp %64 : vector<2x16x16xf32>
    %cst_24 = arith.constant dense<0.000000e+00> : vector<2x16xf32>
    %66 = vector.multi_reduction <add>, %65, %cst_24 [2] : vector<2x16x16xf32> to vector<2x16xf32>
    %67 = vector.shape_cast %66 : vector<2x16xf32> to vector<2x16x1xf32>
    %68 = tpu.reciprocal %67 {approx = true} : vector<2x16x1xf32> -> vector<2x16x1xf32>
    %69 = vector.broadcast %68 : vector<2x16x1xf32> to vector<2x16x16xf32>
    %70 = arith.mulf %65, %69 : vector<2x16x16xf32>
    %71 = arith.truncf %70 : vector<2x16x16xf32> to vector<2x16x16xbf16>
    "tpu.trace_start"() <{level = 10 : i32, message = "bnm,bmd->bnd"}> : () -> ()
    %cst_25 = arith.constant dense<0.000000e+00> : vector<2x16x32xf32>
    %72 = tpu.matmul %71, %53, %cst_25 {dimension_numbers = #tpu.dot_dimension_numbers<[2], [1], [1], [2], [0, 0, 0, 1, 1, 2], [0], [0]>} : vector<2x16x16xbf16>, vector<2x16x32xbf16>, vector<2x16x32xf32> -> vector<2x16x32xf32>
    "tpu.trace_stop"() : () -> ()
    %73 = vector.shape_cast %72 : vector<2x16x32xf32> to vector<32x32xf32>
    "tpu.trace_start"() <{level = 10 : i32, message = "bnd,bmd->bnm"}> : () -> ()
    %cst_26 = arith.constant dense<0.000000e+00> : vector<2x16x16xf32>
    %74 = tpu.matmul %47, %56, %cst_26 {dimension_numbers = #tpu.dot_dimension_numbers<[2], [2], [1], [1], [0, 0, 0, 1, 1, 1], [0], [0]>} : vector<2x16x16xbf16>, vector<2x16x16xbf16>, vector<2x16x16xf32> -> vector<2x16x16xf32>
    "tpu.trace_stop"() : () -> ()
    %cst_27 = arith.constant dense<0xFF800000> : vector<2x16xf32>
    %75 = vector.multi_reduction <maximumf>, %74, %cst_27 [2] : vector<2x16x16xf32> to vector<2x16xf32>
    %76 = vector.shape_cast %75 : vector<2x16xf32> to vector<2x16x1xf32>
    %77 = vector.broadcast %76 : vector<2x16x1xf32> to vector<2x16x16xf32>
    %78 = arith.subf %74, %77 : vector<2x16x16xf32>
    %79 = math.exp %78 : vector<2x16x16xf32>
    %cst_28 = arith.constant dense<0.000000e+00> : vector<2x16xf32>
    %80 = vector.multi_reduction <add>, %79, %cst_28 [2] : vector<2x16x16xf32> to vector<2x16xf32>
    %81 = vector.shape_cast %80 : vector<2x16xf32> to vector<2x16x1xf32>
    %82 = tpu.reciprocal %81 {approx = true} : vector<2x16x1xf32> -> vector<2x16x1xf32>
    %83 = vector.broadcast %82 : vector<2x16x1xf32> to vector<2x16x16xf32>
    %84 = arith.mulf %79, %83 : vector<2x16x16xf32>
    %85 = arith.truncf %84 : vector<2x16x16xf32> to vector<2x16x16xbf16>
    "tpu.trace_start"() <{level = 10 : i32, message = "bnm,bmd->bnd"}> : () -> ()
    %cst_29 = arith.constant dense<0.000000e+00> : vector<2x16x32xf32>
    %86 = tpu.matmul %85, %59, %cst_29 {dimension_numbers = #tpu.dot_dimension_numbers<[2], [1], [1], [2], [0, 0, 0, 1, 1, 2], [0], [0]>} : vector<2x16x16xbf16>, vector<2x16x32xbf16>, vector<2x16x32xf32> -> vector<2x16x32xf32>
    "tpu.trace_stop"() : () -> ()
    %87 = vector.shape_cast %86 : vector<2x16x32xf32> to vector<32x32xf32>
    %88 = arith.truncf %73 : vector<32x32xf32> to vector<32x32xbf16>
    %c0_30 = arith.constant 0 : index
    %c0_31 = arith.constant 0 : index
    %89 = vector.load %arg9[%c0_30, %c0_31] : memref<32x64xbf16, #tpu.memory_space<vmem>>, vector<32x64xbf16>
    %cst_32 = arith.constant dense<0.000000e+00> : vector<32x64xf32>
    %90 = tpu.matmul %88, %89, %cst_32 {dimension_numbers = #tpu.dot_dimension_numbers<[1], [0], [0], [1], [0, 0, 1, 1], [], []>} : vector<32x32xbf16>, vector<32x64xbf16>, vector<32x64xf32> -> vector<32x64xf32>
    %91 = arith.truncf %87 : vector<32x32xf32> to vector<32x32xbf16>
    %c0_33 = arith.constant 0 : index
    %c0_34 = arith.constant 0 : index
    %92 = vector.load %arg10[%c0_33, %c0_34] : memref<32x64xbf16, #tpu.memory_space<vmem>>, vector<32x64xbf16>
    %cst_35 = arith.constant dense<0.000000e+00> : vector<32x64xf32>
    %93 = tpu.matmul %91, %92, %cst_35 {dimension_numbers = #tpu.dot_dimension_numbers<[1], [0], [0], [1], [0, 0, 1, 1], [], []>} : vector<32x32xbf16>, vector<32x64xbf16>, vector<32x64xf32> -> vector<32x64xf32>
    %94 = arith.addf %90, %93 : vector<32x64xf32>
    %c0_36 = arith.constant 0 : index
    %c0_37 = arith.constant 0 : index
    %95 = vector.load %arg11[%c0_36, %c0_37] : memref<1x64xf32, #tpu.memory_space<vmem>>, vector<1x64xf32>
    %96 = vector.broadcast %95 : vector<1x64xf32> to vector<32x64xf32>
    %97 = arith.addf %94, %96 : vector<32x64xf32>
    %98 = arith.truncf %97 : vector<32x64xf32> to vector<32x64xbf16>
    %c0_38 = arith.constant 0 : index
    %c0_39 = arith.constant 0 : index
    %99 = vector.load %arg12[%c0_38, %c0_39] : memref<64x96xbf16, #tpu.memory_space<vmem>>, vector<64x96xbf16>
    %cst_40 = arith.constant dense<0.000000e+00> : vector<32x96xf32>
    %100 = tpu.matmul %98, %99, %cst_40 {dimension_numbers = #tpu.dot_dimension_numbers<[1], [0], [0], [1], [0, 0, 1, 1], [], []>} : vector<32x64xbf16>, vector<64x96xbf16>, vector<32x96xf32> -> vector<32x96xf32>
    %c0_41 = arith.constant 0 : index
    %c0_42 = arith.constant 0 : index
    %101 = vector.load %arg13[%c0_41, %c0_42] : memref<32x96xbf16, #tpu.memory_space<vmem>>, vector<32x96xbf16>
    %cst_43 = arith.constant dense<0.000000e+00> : vector<32x96xf32>
    %102 = tpu.matmul %33, %101, %cst_43 {dimension_numbers = #tpu.dot_dimension_numbers<[1], [0], [0], [1], [0, 0, 1, 1], [], []>} : vector<32x32xbf16>, vector<32x96xbf16>, vector<32x96xf32> -> vector<32x96xf32>
    %103 = arith.addf %100, %102 : vector<32x96xf32>
    %c0_44 = arith.constant 0 : index
    %c0_45 = arith.constant 0 : index
    %104 = vector.load %arg14[%c0_44, %c0_45] : memref<1x96xf32, #tpu.memory_space<vmem>>, vector<1x96xf32>
    %105 = vector.broadcast %104 : vector<1x96xf32> to vector<32x96xf32>
    %106 = arith.addf %103, %105 : vector<32x96xf32>
    %107 = vector.extract_strided_slice %106 {offsets = [0, 0], sizes = [32, 32], strides = [1, 1]} : vector<32x96xf32> to vector<32x32xf32>
    %108 = vector.extract_strided_slice %106 {offsets = [0, 32], sizes = [32, 32], strides = [1, 1]} : vector<32x96xf32> to vector<32x32xf32>
    %109 = vector.extract_strided_slice %106 {offsets = [0, 64], sizes = [32, 32], strides = [1, 1]} : vector<32x96xf32> to vector<32x32xf32>
    %110 = arith.negf %109 : vector<32x32xf32>
    %111 = math.exp %110 : vector<32x32xf32>
    %cst_46 = arith.constant 1.000000e+00 : f32
    %112 = vector.broadcast %cst_46 : f32 to vector<32x32xf32>
    %113 = arith.addf %112, %111 : vector<32x32xf32>
    %114 = arith.divf %112, %113 : vector<32x32xf32>
    %cst_47 = arith.constant 1.000000e+00 : f32
    %115 = vector.broadcast %cst_47 : f32 to vector<32x32xf32>
    %116 = arith.subf %115, %114 : vector<32x32xf32>
    %117 = arith.mulf %116, %7 : vector<32x32xf32>
    %118 = math.tanh %108 : vector<32x32xf32>
    %119 = arith.mulf %114, %118 : vector<32x32xf32>
    %120 = arith.addf %117, %119 : vector<32x32xf32>
    %121 = arith.negf %107 : vector<32x32xf32>
    %122 = math.exp %121 : vector<32x32xf32>
    %cst_48 = arith.constant 1.000000e+00 : f32
    %123 = vector.broadcast %cst_48 : f32 to vector<32x32xf32>
    %124 = arith.addf %123, %122 : vector<32x32xf32>
    %125 = arith.divf %123, %124 : vector<32x32xf32>
    %126 = arith.mulf %125, %120 : vector<32x32xf32>
    %c0_49 = arith.constant 0 : index
    %c0_50 = arith.constant 0 : index
    %127 = vector.load %arg17[%c0_49, %c0_50] : memref<32x32xf32, #tpu.memory_space<vmem>>, vector<32x32xf32>
    tpu.vector_store %arg17[%c0_49, %c0_50], %126 {strides = array<i32>} : memref<32x32xf32, #tpu.memory_space<vmem>>, vector<32x32xf32>,
    %c0_51 = arith.constant 0 : index
    %c0_52 = arith.constant 0 : index
    %128 = vector.load %arg18[%c0_51, %c0_52] : memref<32x32xf32, #tpu.memory_space<vmem>>, vector<32x32xf32>
    tpu.vector_store %arg18[%c0_51, %c0_52], %30 {strides = array<i32>} : memref<32x32xf32, #tpu.memory_space<vmem>>, vector<32x32xf32>,
    %c0_53 = arith.constant 0 : index
    %c0_54 = arith.constant 0 : index
    %129 = vector.load %arg19[%c0_53, %c0_54] : memref<32x32xf32, #tpu.memory_space<vmem>>, vector<32x32xf32>
    tpu.vector_store %arg19[%c0_53, %c0_54], %120 {strides = array<i32>} : memref<32x32xf32, #tpu.memory_space<vmem>>, vector<32x32xf32>,
    %130 = vector.shape_cast %126 : vector<32x32xf32> to vector<2x16x32xf32>
    %cst_55 = arith.constant dense<0.000000e+00> : vector<2x16xf32>
    %131 = vector.multi_reduction <add>, %130, %cst_55 [2] : vector<2x16x32xf32> to vector<2x16xf32>
    %132 = vector.shape_cast %131 : vector<2x16xf32> to vector<2x16x1xf32>
    %cst_56 = arith.constant 3.200000e+01 : f32
    %133 = vector.broadcast %cst_56 : f32 to vector<2x16x1xf32>
    %134 = arith.divf %132, %133 : vector<2x16x1xf32>
    %cst_57 = arith.constant dense<0.000000e+00> : vector<2x1xf32>
    %135 = vector.multi_reduction <add>, %134, %cst_57 [1] : vector<2x16x1xf32> to vector<2x1xf32>
    %136 = vector.shape_cast %135 : vector<2x1xf32> to vector<2x1x1xf32>
    %cst_58 = arith.constant 1.600000e+01 : f32
    %137 = vector.broadcast %cst_58 : f32 to vector<2x1x1xf32>
    %138 = arith.divf %136, %137 : vector<2x1x1xf32>
    %139 = vector.broadcast %138 : vector<2x1x1xf32> to vector<2x16x32xf32>
    %140 = arith.subf %130, %139 : vector<2x16x32xf32>
    %141 = arith.mulf %140, %140 : vector<2x16x32xf32>
    %cst_59 = arith.constant dense<0.000000e+00> : vector<2x16xf32>
    %142 = vector.multi_reduction <add>, %141, %cst_59 [2] : vector<2x16x32xf32> to vector<2x16xf32>
    %143 = vector.shape_cast %142 : vector<2x16xf32> to vector<2x16x1xf32>
    %cst_60 = arith.constant 3.200000e+01 : f32
    %144 = vector.broadcast %cst_60 : f32 to vector<2x16x1xf32>
    %145 = arith.divf %143, %144 : vector<2x16x1xf32>
    %cst_61 = arith.constant dense<0.000000e+00> : vector<2x1xf32>
    %146 = vector.multi_reduction <add>, %145, %cst_61 [1] : vector<2x16x1xf32> to vector<2x1xf32>
    %147 = vector.shape_cast %146 : vector<2x1xf32> to vector<2x1x1xf32>
    %cst_62 = arith.constant 1.600000e+01 : f32
    %148 = vector.broadcast %cst_62 : f32 to vector<2x1x1xf32>
    %149 = arith.divf %147, %148 : vector<2x1x1xf32>
    %cst_63 = arith.constant 9.99999974E-6 : f32
    %150 = vector.broadcast %cst_63 : f32 to vector<2x1x1xf32>
    %151 = arith.addf %149, %150 : vector<2x1x1xf32>
    %152 = math.rsqrt %151 : vector<2x1x1xf32>
    %153 = vector.broadcast %152 : vector<2x1x1xf32> to vector<2x16x32xf32>
    %154 = arith.mulf %140, %153 : vector<2x16x32xf32>
    %c0_64 = arith.constant 0 : index
    %c0_65 = arith.constant 0 : index
    %155 = vector.load %arg15[%c0_64, %c0_65] : memref<16x32xf32, #tpu.memory_space<vmem>>, vector<16x32xf32>
    %156 = vector.shape_cast %155 : vector<16x32xf32> to vector<1x16x32xf32>
    %157 = vector.broadcast %156 : vector<1x16x32xf32> to vector<2x16x32xf32>
    %158 = arith.mulf %154, %157 : vector<2x16x32xf32>
    %c0_66 = arith.constant 0 : index
    %c0_67 = arith.constant 0 : index
    %159 = vector.load %arg16[%c0_66, %c0_67] : memref<16x32xf32, #tpu.memory_space<vmem>>, vector<16x32xf32>
    %160 = vector.shape_cast %159 : vector<16x32xf32> to vector<1x16x32xf32>
    %161 = vector.broadcast %160 : vector<1x16x32xf32> to vector<2x16x32xf32>
    %162 = arith.addf %158, %161 : vector<2x16x32xf32>
    %163 = arith.truncf %162 : vector<2x16x32xf32> to vector<2x16x32xbf16>
    %c0_68 = arith.constant 0 : index
    %c0_69 = arith.constant 0 : index
    %c0_70 = arith.constant 0 : index
    %164 = vector.load %arg20[%c0_68, %c0_69, %c0_70] : memref<2x16x32xbf16, #tpu.memory_space<vmem>>, vector<2x16x32xbf16>
    tpu.vector_store %arg20[%c0_68, %c0_69, %c0_70], %163 {strides = array<i32>} : memref<2x16x32xbf16, #tpu.memory_space<vmem>>, vector<2x16x32xbf16>,
    return
  }
}

module attributes {stable_mosaic.version = 11 : i64} {
  func.func @_mm_bias_kernel(%arg0: i32, %arg1: i32, %arg2: memref<128x128xbf16, #tpu.memory_space<vmem>>, %arg3: memref<128x128xbf16, #tpu.memory_space<vmem>>, %arg4: memref<1x128xf32, #tpu.memory_space<vmem>>, %arg5: memref<128x128xbf16, #tpu.memory_space<vmem>>, %arg6: memref<128x128xf32, #tpu.memory_space<vmem>>) attributes {dimension_semantics = [#tpu.dimension_semantics<parallel>, #tpu.dimension_semantics<arbitrary>], iteration_bounds = array<i64: 1, 1>, scalar_prefetch = 0 : i64, scratch_operands = 1 : i64, tpu.core_type = #tpu.core_type<tc>, window_params = [{transform_indices = @transform_0, window_bounds = array<i64: 128, 128>}, {transform_indices = @transform_1, window_bounds = array<i64: 128, 128>}, {pipeline_mode = #tpu.pipeline_mode<synchronous>, transform_indices = @transform_2, window_bounds = array<i64: 1, 128>}, {transform_indices = @transform_3, window_bounds = array<i64: 128, 128>}]} {
    %c0_i32 = arith.constant 0 : i32
    %0 = arith.cmpi eq, %arg1, %c0_i32 : i32
    %1 = arith.extui %0 : i1 to i32
    %c0_i32_0 = arith.constant 0 : i32
    %2 = arith.cmpi ne, %1, %c0_i32_0 : i32
    scf.if %2 {
      %cst_10 = arith.constant 0.000000e+00 : f32
      %12 = vector.broadcast %cst_10 : f32 to vector<128x128xf32>
      %c0_11 = arith.constant 0 : index
      %c0_12 = arith.constant 0 : index
      %13 = vector.load %arg6[%c0_11, %c0_12] : memref<128x128xf32, #tpu.memory_space<vmem>>, vector<128x128xf32>
      tpu.vector_store %arg6[%c0_11, %c0_12], %12 {strides = array<i32>} : memref<128x128xf32, #tpu.memory_space<vmem>>, vector<128x128xf32>,
    } else {
    }
    %c0 = arith.constant 0 : index
    %c0_1 = arith.constant 0 : index
    %3 = vector.load %arg6[%c0, %c0_1] : memref<128x128xf32, #tpu.memory_space<vmem>>, vector<128x128xf32>
    %c0_2 = arith.constant 0 : index
    %c0_3 = arith.constant 0 : index
    %4 = vector.load %arg2[%c0_2, %c0_3] : memref<128x128xbf16, #tpu.memory_space<vmem>>, vector<128x128xbf16>
    %c0_4 = arith.constant 0 : index
    %c0_5 = arith.constant 0 : index
    %5 = vector.load %arg3[%c0_4, %c0_5] : memref<128x128xbf16, #tpu.memory_space<vmem>>, vector<128x128xbf16>
    %cst = arith.constant dense<0.000000e+00> : vector<128x128xf32>
    %6 = tpu.matmul %4, %5, %cst {dimension_numbers = #tpu.dot_dimension_numbers<[1], [0], [0], [1], [0, 0, 1, 1], [], []>} : vector<128x128xbf16>, vector<128x128xbf16>, vector<128x128xf32> -> vector<128x128xf32>
    %7 = arith.addf %3, %6 : vector<128x128xf32>
    %c0_6 = arith.constant 0 : index
    %c0_7 = arith.constant 0 : index
    %8 = vector.load %arg6[%c0_6, %c0_7] : memref<128x128xf32, #tpu.memory_space<vmem>>, vector<128x128xf32>
    tpu.vector_store %arg6[%c0_6, %c0_7], %7 {strides = array<i32>} : memref<128x128xf32, #tpu.memory_space<vmem>>, vector<128x128xf32>,
    %c0_i32_8 = arith.constant 0 : i32
    %9 = arith.cmpi eq, %arg1, %c0_i32_8 : i32
    %10 = arith.extui %9 : i1 to i32
    %c0_i32_9 = arith.constant 0 : i32
    %11 = arith.cmpi ne, %10, %c0_i32_9 : i32
    scf.if %11 {
      %c0_10 = arith.constant 0 : index
      %c0_11 = arith.constant 0 : index
      %12 = vector.load %arg6[%c0_10, %c0_11] : memref<128x128xf32, #tpu.memory_space<vmem>>, vector<128x128xf32>
      %c0_12 = arith.constant 0 : index
      %c0_13 = arith.constant 0 : index
      %13 = vector.load %arg4[%c0_12, %c0_13] : memref<1x128xf32, #tpu.memory_space<vmem>>, vector<1x128xf32>
      %14 = vector.broadcast %13 : vector<1x128xf32> to vector<128x128xf32>
      %15 = arith.addf %12, %14 : vector<128x128xf32>
      %cst_14 = arith.constant 0.000000e+00 : f32
      %16 = vector.broadcast %cst_14 : f32 to vector<128x128xf32>
      %17 = arith.cmpf oge, %15, %16 : vector<128x128xf32>
      %cst_15 = arith.constant 1.000000e-01 : f32
      %18 = vector.broadcast %cst_15 : f32 to vector<128x128xf32>
      %19 = arith.mulf %18, %15 : vector<128x128xf32>
      %20 = arith.select %17, %15, %19 : vector<128x128xi1>, vector<128x128xf32>
      %21 = arith.truncf %20 : vector<128x128xf32> to vector<128x128xbf16>
      %c0_16 = arith.constant 0 : index
      %c0_17 = arith.constant 0 : index
      %22 = vector.load %arg5[%c0_16, %c0_17] : memref<128x128xbf16, #tpu.memory_space<vmem>>, vector<128x128xbf16>
      tpu.vector_store %arg5[%c0_16, %c0_17], %21 {strides = array<i32>} : memref<128x128xbf16, #tpu.memory_space<vmem>>, vector<128x128xbf16>,
    } else {
    }
    return
  }
  func.func @transform_0(%arg0: i32, %arg1: i32) -> (i32, i32) {
    %c0_i32 = arith.constant 0 : i32
    return %arg0, %arg1 : i32, i32
  }
  func.func @transform_1(%arg0: i32, %arg1: i32) -> (i32, i32) {
    %c0_i32 = arith.constant 0 : i32
    %c0_i32_0 = arith.constant 0 : i32
    return %arg1, %c0_i32 : i32, i32
  }
  func.func @transform_2(%arg0: i32, %arg1: i32) -> (i32, i32) {
    %c0_i32 = arith.constant 0 : i32
    %c0_i32_0 = arith.constant 0 : i32
    %c0_i32_1 = arith.constant 0 : i32
    return %c0_i32, %c0_i32_0 : i32, i32
  }
  func.func @transform_3(%arg0: i32, %arg1: i32) -> (i32, i32) {
    %c0_i32 = arith.constant 0 : i32
    %c0_i32_0 = arith.constant 0 : i32
    return %arg0, %c0_i32 : i32, i32
  }
}

module attributes {stable_mosaic.version = 11 : i64} {
  func.func @_mm_bias_kernel(%arg0: i32, %arg1: i32, %arg2: memref<256x32xbf16, #tpu.memory_space<vmem>>, %arg3: memref<32x1xbf16, #tpu.memory_space<vmem>>, %arg4: memref<1x1xf32, #tpu.memory_space<vmem>>, %arg5: memref<256x1xf32, #tpu.memory_space<vmem>>, %arg6: memref<256x1xf32, #tpu.memory_space<vmem>>) attributes {dimension_semantics = [#tpu.dimension_semantics<parallel>, #tpu.dimension_semantics<arbitrary>], iteration_bounds = array<i64: 2, 1>, scalar_prefetch = 0 : i64, scratch_operands = 1 : i64, tpu.core_type = #tpu.core_type<tc>, window_params = [{transform_indices = @transform_0, window_bounds = array<i64: 256, 32>}, {transform_indices = @transform_1, window_bounds = array<i64: 32, 1>}, {pipeline_mode = #tpu.pipeline_mode<synchronous>, transform_indices = @transform_2, window_bounds = array<i64: 1, 1>}, {transform_indices = @transform_3, window_bounds = array<i64: 256, 1>}]} {
    %c0_i32 = arith.constant 0 : i32
    %0 = arith.cmpi eq, %arg1, %c0_i32 : i32
    %1 = arith.extui %0 : i1 to i32
    %c0_i32_0 = arith.constant 0 : i32
    %2 = arith.cmpi ne, %1, %c0_i32_0 : i32
    scf.if %2 {
      %cst_10 = arith.constant 0.000000e+00 : f32
      %12 = vector.broadcast %cst_10 : f32 to vector<256x1xf32>
      %c0_11 = arith.constant 0 : index
      %c0_12 = arith.constant 0 : index
      %13 = vector.load %arg6[%c0_11, %c0_12] : memref<256x1xf32, #tpu.memory_space<vmem>>, vector<256x1xf32>
      tpu.vector_store %arg6[%c0_11, %c0_12], %12 {strides = array<i32>} : memref<256x1xf32, #tpu.memory_space<vmem>>, vector<256x1xf32>,
    } else {
    }
    %c0 = arith.constant 0 : index
    %c0_1 = arith.constant 0 : index
    %3 = vector.load %arg6[%c0, %c0_1] : memref<256x1xf32, #tpu.memory_space<vmem>>, vector<256x1xf32>
    %c0_2 = arith.constant 0 : index
    %c0_3 = arith.constant 0 : index
    %4 = vector.load %arg2[%c0_2, %c0_3] : memref<256x32xbf16, #tpu.memory_space<vmem>>, vector<256x32xbf16>
    %c0_4 = arith.constant 0 : index
    %c0_5 = arith.constant 0 : index
    %5 = vector.load %arg3[%c0_4, %c0_5] : memref<32x1xbf16, #tpu.memory_space<vmem>>, vector<32x1xbf16>
    %cst = arith.constant dense<0.000000e+00> : vector<256x1xf32>
    %6 = tpu.matmul %4, %5, %cst {dimension_numbers = #tpu.dot_dimension_numbers<[1], [0], [0], [1], [0, 0, 1, 1], [], []>} : vector<256x32xbf16>, vector<32x1xbf16>, vector<256x1xf32> -> vector<256x1xf32>
    %7 = arith.addf %3, %6 : vector<256x1xf32>
    %c0_6 = arith.constant 0 : index
    %c0_7 = arith.constant 0 : index
    %8 = vector.load %arg6[%c0_6, %c0_7] : memref<256x1xf32, #tpu.memory_space<vmem>>, vector<256x1xf32>
    tpu.vector_store %arg6[%c0_6, %c0_7], %7 {strides = array<i32>} : memref<256x1xf32, #tpu.memory_space<vmem>>, vector<256x1xf32>,
    %c0_i32_8 = arith.constant 0 : i32
    %9 = arith.cmpi eq, %arg1, %c0_i32_8 : i32
    %10 = arith.extui %9 : i1 to i32
    %c0_i32_9 = arith.constant 0 : i32
    %11 = arith.cmpi ne, %10, %c0_i32_9 : i32
    scf.if %11 {
      %c0_10 = arith.constant 0 : index
      %c0_11 = arith.constant 0 : index
      %12 = vector.load %arg6[%c0_10, %c0_11] : memref<256x1xf32, #tpu.memory_space<vmem>>, vector<256x1xf32>
      %c0_12 = arith.constant 0 : index
      %c0_13 = arith.constant 0 : index
      %13 = vector.load %arg4[%c0_12, %c0_13] : memref<1x1xf32, #tpu.memory_space<vmem>>, vector<1x1xf32>
      %14 = vector.broadcast %13 : vector<1x1xf32> to vector<256x1xf32>
      %15 = arith.addf %12, %14 : vector<256x1xf32>
      %c0_14 = arith.constant 0 : index
      %c0_15 = arith.constant 0 : index
      %16 = vector.load %arg5[%c0_14, %c0_15] : memref<256x1xf32, #tpu.memory_space<vmem>>, vector<256x1xf32>
      tpu.vector_store %arg5[%c0_14, %c0_15], %15 {strides = array<i32>} : memref<256x1xf32, #tpu.memory_space<vmem>>, vector<256x1xf32>,
    } else {
    }
    return
  }
  func.func @transform_0(%arg0: i32, %arg1: i32) -> (i32, i32) {
    %c0_i32 = arith.constant 0 : i32
    return %arg0, %arg1 : i32, i32
  }
  func.func @transform_1(%arg0: i32, %arg1: i32) -> (i32, i32) {
    %c0_i32 = arith.constant 0 : i32
    %c0_i32_0 = arith.constant 0 : i32
    return %arg1, %c0_i32 : i32, i32
  }
  func.func @transform_2(%arg0: i32, %arg1: i32) -> (i32, i32) {
    %c0_i32 = arith.constant 0 : i32
    %c0_i32_0 = arith.constant 0 : i32
    %c0_i32_1 = arith.constant 0 : i32
    return %c0_i32, %c0_i32_0 : i32, i32
  }
  func.func @transform_3(%arg0: i32, %arg1: i32) -> (i32, i32) {
    %c0_i32 = arith.constant 0 : i32
    %c0_i32_0 = arith.constant 0 : i32
    return %arg0, %c0_i32 : i32, i32
  }
}

</mosaic_0001>

<llo_original>
// kernel: custom-call
$region0: #{custom-call}
  %s0 = inlined_call_operand.vmem [shape: f32[4,2,16,16,1], index: 0, kind: output, shape index: {}]

// kernel: closed_call.51
$region0: #{closed_call.51}
  #allocation0 [shape = 'u32[]', space=smem, size = 0x4, offset = 0x4, fixed_abs, tag = 'smem constant byte address 0x4 - core index']
  #allocation1 [shape = 'u32[72,128]{1,0:T(1,128)}', space=vmem, size = 0x9000, scoped, tag = 'internal scratch']
  #allocation2 [shape = 'f32[256,32]{1,0:T(8,128)}', space=vmem, size = 0x20000, scoped, tag = 'scratch operand']
  %s0 = inlined_call_operand.vmem [shape: bf16[512,1], index: 0, kind: input, shape index: {}]
  %s1 = inlined_call_operand.vmem [shape: bf16[1,32], index: 1, kind: input, shape index: {}]
  %s2 = inlined_call_operand.vmem [shape: f32[1,32], index: 2, kind: input, shape index: {}]
  %s3 = inlined_call_operand.vmem [shape: bf16[512,32], index: 3, kind: output, shape index: {}]
  %s4 = sld [smem:[#allocation0]]
  $region53: #{closed_call.51} parent=0
    _
  %s6 = ssub.s32 1, %s4
  %s7 = scalar_select 0, %s6, %s4
  loop: start=0, step=1, limit=4
  $region2: #{closed_call.51} parent=0 // loop_pre_header
    _
  $region3: #{closed_call.51} parent=0 // loop_header
    %s9 = sphi 0, %s13
    %p10 = scmp.ge.s32.totalorder %s9, 4
    %s16 = sphi 0, %s28
    %s17 = sphi 0, %s24
    %s18 = sphi 0, %s16
    %s19 = sphi 0, %s17
    %s20 = sphi 0, %s18
    %s21 = sphi 0, %s19
    %s33 = sphi 0, %s35
    %s36 = sphi 0, %s33
    %s37 = sphi 0, %s36
    %s53 = sphi 0, %s37
    %s59 = sphi 0, %s61
    %s62 = sphi 0, %s59
    %s63 = sphi 0, %s62
    %s79 = sphi 0, %s63
    %s83 = sphi 0, %s83
    %s85 = sphi 0, %s83
    %s86 = sphi 0, %s85
    %s100 = sphi 0, %s86
    %s106 = sphi 0, %s108
    %s109 = sphi 0, %s106
    %s110 = sphi 0, %s109
    %s126 = sphi 0, %s110
  $region4: #{closed_call.51} parent=0 // loop_header_branch
    %12 = sbr.rel (%p10) target = $region8
  $region5: #{closed_call.51} parent=0 // loop_body
    %s14 = ssub.s32 %s9, 1
    %s15 = ssub.s32 %s9, 2
    %s22 = sadd.s32 1, %s17
    %p23 = scmp.ge.s32.totalorder %s22, 1
    %s24 = scalar_select %p23, 0, %s22
    %s25 = sadd.s32 1, %s16
    %s26 = scalar_select %p23, %s25, %s16
    %p27 = scmp.ge.s32.totalorder %s26, 2
    %s28 = scalar_select %p27, 0, %s26
    %s29 = ssub.s32 %s16, %s28
    %s30 = ssub.s32 %s17, %s24
    %s31 = sor.u32 %s29, %s30
    %p32 = scmp.eq.s32.totalorder %s31, 0
    %s34 = sadd.s32 %s33, 1
    %s35 = scalar_select %p32, %s33, %s34
    %p38 = pneg %p32
    %p39 = scmp.eq.s32.totalorder %s9, 1
    %p40 = por %p38, %p39
    %p41 = scmp.ne.s32.totalorder %s33, %s36
    %p42 = scmp.eq.s32.totalorder %s9, 0
    %p43 = por %p41, %p42
    %p44 = scmp.ne.s32.totalorder %s33, %s36
    %p45 = scmp.eq.s32.totalorder %s14, 1
    %p46 = por %p44, %p45
    %p47 = scmp.ne.s32.totalorder %s36, %s37
    %p48 = scmp.eq.s32.totalorder %s14, 0
    %p49 = por %p47, %p48
    %p50 = scmp.ne.s32.totalorder %s36, %s37
    %p51 = scmp.eq.s32.totalorder %s15, 1
    %p52 = por %p50, %p51
    %p54 = scmp.ne.s32.totalorder %s37, %s53
    %p55 = scmp.eq.s32.totalorder %s15, 0
    %p56 = por %p54, %p55
    %s57 = ssub.s32 %s17, %s24
    %p58 = scmp.eq.s32.totalorder %s57, 0
    %s60 = sadd.s32 %s59, 1
    %s61 = scalar_select %p58, %s59, %s60
    %p64 = pneg %p58
    %p65 = scmp.eq.s32.totalorder %s9, 1
    %p66 = por %p64, %p65
    %p67 = scmp.ne.s32.totalorder %s59, %s62
    %p68 = scmp.eq.s32.totalorder %s9, 0
    %p69 = por %p67, %p68
    %p70 = scmp.ne.s32.totalorder %s59, %s62
    %p71 = scmp.eq.s32.totalorder %s14, 1
    %p72 = por %p70, %p71
    %p73 = scmp.ne.s32.totalorder %s62, %s63
    %p74 = scmp.eq.s32.totalorder %s14, 0
    %p75 = por %p73, %p74
    %p76 = scmp.ne.s32.totalorder %s62, %s63
    %p77 = scmp.eq.s32.totalorder %s15, 1
    %p78 = por %p76, %p77
    %p80 = scmp.ne.s32.totalorder %s63, %s79
    %p81 = scmp.eq.s32.totalorder %s15, 0
    %p82 = por %p80, %p81
    %s84 = sadd.s32 %s83, 1
    %p87 = scmp.eq.s32.totalorder %s9, 1
    %p88 = scmp.ne.s32.totalorder %s83, %s85
    %p89 = scmp.eq.s32.totalorder %s9, 0
    %p90 = por %p88, %p89
    %p91 = scmp.ne.s32.totalorder %s83, %s85
    %p92 = scmp.eq.s32.totalorder %s14, 1
    %p93 = por %p91, %p92
    %p94 = scmp.ne.s32.totalorder %s85, %s86
    %p95 = scmp.eq.s32.totalorder %s14, 0
    %p96 = por %p94, %p95
    %p97 = scmp.ne.s32.totalorder %s85, %s86
    %p98 = scmp.eq.s32.totalorder %s15, 1
    %p99 = por %p97, %p98
    %p101 = scmp.ne.s32.totalorder %s86, %s100
    %p102 = scmp.eq.s32.totalorder %s15, 0
    %p103 = por %p101, %p102
    %s104 = ssub.s32 %s16, %s28
    %p105 = scmp.eq.s32.totalorder %s104, 0
    %s107 = sadd.s32 %s106, 1
    %s108 = scalar_select %p105, %s106, %s107
    %p111 = pneg %p105
    %p112 = scmp.eq.s32.totalorder %s9, 1
    %p113 = por %p111, %p112
    %p114 = scmp.ne.s32.totalorder %s106, %s109
    %p115 = scmp.eq.s32.totalorder %s9, 0
    %p116 = por %p114, %p115
    %p117 = scmp.ne.s32.totalorder %s106, %s109
    %p118 = scmp.eq.s32.totalorder %s14, 1
    %p119 = por %p117, %p118
    %p120 = scmp.ne.s32.totalorder %s109, %s110
    %p121 = scmp.eq.s32.totalorder %s14, 0
    %p122 = por %p120, %p121
    %p123 = scmp.ne.s32.totalorder %s109, %s110
    %p124 = scmp.eq.s32.totalorder %s15, 1
    %p125 = por %p123, %p124
    %p127 = scmp.ne.s32.totalorder %s110, %s126
    %p128 = scmp.eq.s32.totalorder %s15, 0
    %p129 = por %p127, %p128
    %p130 = scmp.le.s32.totalorder 1, %s9
    %p131 = scmp.lt.s32.totalorder %s9, 3
    %p132 = pnand %p130, %p131
    %p133 = pneg %p132
    // Predicated region
    $region9: #{closed_call.51} parent=5 // pred_check
      _
    $region10: #{closed_call.51} parent=5 // pred_check_branch
      %135 = sbr.rel (%p132) target = $region12
    $region11: #{closed_call.51} parent=5 // pred_region
      %s136 = ssub.s32 %s9, 1
      // Predicated region
      $region13: #{closed_call.51} parent=11 // pred_check
        %p137 = pneg %p75
      $region14: #{closed_call.51} parent=11 // pred_check_branch
        %139 = sbr.rel (%p137) target = $region16
      $region15: #{closed_call.51} parent=11 // pred_region
        %p140 = scmp.lt.s32.totalorder %s19, 0
        %s141 = scalar_select %p140, %s19, 0
        %s142 = scalar_lea.vmem %s1, %s141
      $region16: #{closed_call.51} parent=11 // pred_fallthru
        _
      // Predicated region
      $region17: #{closed_call.51} parent=11 // pred_check
        %p143 = pneg %p96
      $region18: #{closed_call.51} parent=11 // pred_check_branch
        %145 = sbr.rel (%p143) target = $region20
      $region19: #{closed_call.51} parent=11 // pred_region
        _
      $region20: #{closed_call.51} parent=11 // pred_fallthru
        _
    $region12: #{closed_call.51} parent=5 // pred_fallthru
      _
    %p146 = scmp.lt.s32.totalorder %s9, 2
    // Predicated region
    $region21: #{closed_call.51} parent=5 // pred_check
      %p147 = pneg %p146
    $region22: #{closed_call.51} parent=5 // pred_check_branch
      %149 = sbr.rel (%p147) target = $region24
    $region23: #{closed_call.51} parent=5 // pred_region
      // Predicated region
      $region25: #{closed_call.51} parent=23 // pred_check
        %p150 = pneg %p43
      $region26: #{closed_call.51} parent=23 // pred_check_branch
        %152 = sbr.rel (%p150) target = $region28
      $region27: #{closed_call.51} parent=23 // pred_region
        %s153 = smul.u32 32, %s16
        %p154 = scmp.lt.s32.totalorder %s153, 63
        %s155 = scalar_select %p154, %s153, 63
        %p156 = scmp.lt.s32.totalorder %s17, 0
        %s157 = scalar_select %p156, %s17, 0
        %s158 = sadd.s32 %s157, %s155
        %s159 = smul.addr %s158, 4
        %s160 = scalar_lea.vmem %s0, %s159
        %s161 = smul.u32 32, %s16
      $region28: #{closed_call.51} parent=23 // pred_fallthru
        _
    $region24: #{closed_call.51} parent=5 // pred_fallthru
      _
    %p162 = scmp.le.s32.totalorder 1, %s9
    %p163 = scmp.lt.s32.totalorder %s9, 3
    %p164 = pnand %p162, %p163
    %p165 = pneg %p164
    // Predicated region
    $region29: #{closed_call.51} parent=5 // pred_check
      _
    $region30: #{closed_call.51} parent=5 // pred_check_branch
      %167 = sbr.rel (%p164) target = $region32
    $region31: #{closed_call.51} parent=5 // pred_region
      %s168 = ssub.s32 %s9, 1
      %s169 = smul.u32 32, %s18
      %p170 = scmp.lt.s32.totalorder %s169, 63
      %s171 = scalar_select %p170, %s169, 63
      %p172 = scmp.lt.s32.totalorder %s19, 0
      %s173 = scalar_select %p172, %s19, 0
      %s174 = sadd.s32 %s173, %s171
      %s175 = smul.addr %s174, 4
      %s176 = scalar_lea.vmem %s0, %s175
      %p177 = pneg %p49
      %p178 = pneg %p46
      %p179 = scmp.lt.s32.totalorder %s19, 0
      %s180 = scalar_select %p179, %s19, 0
      %s181 = scalar_lea.vmem %s1, %s180
      %p182 = pneg %p75
      %p183 = pneg %p72
      %p184 = pneg %p96
      %p185 = pneg %p93
      %p186 = pneg %p122
      %p187 = pneg %p119
      %s188 = smul.u32 32, %s18
      %p189 = scmp.lt.s32.totalorder %s188, 63
      %s190 = scalar_select %p189, %s188, 63
      %s191 = smul.addr %s190, 4
      %s192 = scalar_lea.vmem %s3, %s191
      %s193 = smul.u32 32, %s18
      %p194 = scmp.lt.s32.totalorder %s193, 63
      %s195 = scalar_select %p194, %s193, 63
      %p196 = scmp.lt.s32.totalorder %s19, 0
      %s197 = scalar_select %p196, %s19, 0
      %s198 = sadd.s32 %s197, %s195
      %s199 = smul.addr %s198, 4
      %s200 = scalar_lea.vmem %s0, %s199
      %s201 = smul.u32 32, %s18
      %p202 = scmp.lt.s32.totalorder %s19, 0
      %s203 = scalar_select %p202, %s19, 0
      %s204 = scalar_lea.vmem %s1, %s203
      %s205 = smul.u32 32, %s18
      %p206 = scmp.lt.s32.totalorder %s205, 63
      %s207 = scalar_select %p206, %s205, 63
      %s208 = smul.addr %s207, 4
      %s209 = scalar_lea.vmem %s3, %s208
      %s210 = smul.u32 32, %s18
      %p212 = scmp.eq.s32.totalorder %s19, 0
      // Predicated region
      $region33: #{closed_call.51} parent=31 // pred_check
        %p213 = pneg %p212
      $region34: #{closed_call.51} parent=31 // pred_check_branch
        %215 = sbr.rel (%p213) target = $region36
      $region35: #{closed_call.51} parent=31 // pred_region
        %vm216 = vcmask 261120
        %217 = vst.msk [vmem:[#allocation2] sm:$0xff] %vm216, 0.0
        %218 = vst.msk [vmem:[#allocation2 + $0x8] sm:$0xff] %vm216, 0.0
        %219 = vst.msk [vmem:[#allocation2 + $0x10] sm:$0xff] %vm216, 0.0
        %220 = vst.msk [vmem:[#allocation2 + $0x18] sm:$0xff] %vm216, 0.0
        %221 = vst.msk [vmem:[#allocation2 + $0x20] sm:$0xff] %vm216, 0.0
        %222 = vst.msk [vmem:[#allocation2 + $0x28] sm:$0xff] %vm216, 0.0
        %223 = vst.msk [vmem:[#allocation2 + $0x30] sm:$0xff] %vm216, 0.0
        %224 = vst.msk [vmem:[#allocation2 + $0x38] sm:$0xff] %vm216, 0.0
        %225 = vst.msk [vmem:[#allocation2 + $0x40] sm:$0xff] %vm216, 0.0
        %226 = vst.msk [vmem:[#allocation2 + $0x48] sm:$0xff] %vm216, 0.0
        %227 = vst.msk [vmem:[#allocation2 + $0x50] sm:$0xff] %vm216, 0.0
        %228 = vst.msk [vmem:[#allocation2 + $0x58] sm:$0xff] %vm216, 0.0
        %229 = vst.msk [vmem:[#allocation2 + $0x60] sm:$0xff] %vm216, 0.0
        %230 = vst.msk [vmem:[#allocation2 + $0x68] sm:$0xff] %vm216, 0.0
        %231 = vst.msk [vmem:[#allocation2 + $0x70] sm:$0xff] %vm216, 0.0
        %232 = vst.msk [vmem:[#allocation2 + $0x78] sm:$0xff] %vm216, 0.0
        %233 = vst.msk [vmem:[#allocation2 + $0x80] sm:$0xff] %vm216, 0.0
        %234 = vst.msk [vmem:[#allocation2 + $0x88] sm:$0xff] %vm216, 0.0
        %235 = vst.msk [vmem:[#allocation2 + $0x90] sm:$0xff] %vm216, 0.0
        %236 = vst.msk [vmem:[#allocation2 + $0x98] sm:$0xff] %vm216, 0.0
        %237 = vst.msk [vmem:[#allocation2 + $0xa0] sm:$0xff] %vm216, 0.0
        %238 = vst.msk [vmem:[#allocation2 + $0xa8] sm:$0xff] %vm216, 0.0
        %239 = vst.msk [vmem:[#allocation2 + $0xb0] sm:$0xff] %vm216, 0.0
        %240 = vst.msk [vmem:[#allocation2 + $0xb8] sm:$0xff] %vm216, 0.0
        %241 = vst.msk [vmem:[#allocation2 + $0xc0] sm:$0xff] %vm216, 0.0
        %242 = vst.msk [vmem:[#allocation2 + $0xc8] sm:$0xff] %vm216, 0.0
        %243 = vst.msk [vmem:[#allocation2 + $0xd0] sm:$0xff] %vm216, 0.0
        %244 = vst.msk [vmem:[#allocation2 + $0xd8] sm:$0xff] %vm216, 0.0
        %245 = vst.msk [vmem:[#allocation2 + $0xe0] sm:$0xff] %vm216, 0.0
        %246 = vst.msk [vmem:[#allocation2 + $0xe8] sm:$0xff] %vm216, 0.0
        %247 = vst.msk [vmem:[#allocation2 + $0xf0] sm:$0xff] %vm216, 0.0
        %248 = vst.msk [vmem:[#allocation2 + $0xf8] sm:$0xff] %vm216, 0.0
      $region36: #{closed_call.51} parent=31 // pred_fallthru
        _
      %v249 = vld [vmem:[#allocation2] sm:$0xff]
      %v250 = vld [vmem:[#allocation2 + $0x8] sm:$0xff]
      %v251 = vld [vmem:[#allocation2 + $0x10] sm:$0xff]
      %v252 = vld [vmem:[#allocation2 + $0x18] sm:$0xff]
      %v253 = vld [vmem:[#allocation2 + $0x20] sm:$0xff]
      %v254 = vld [vmem:[#allocation2 + $0x28] sm:$0xff]
      %v255 = vld [vmem:[#allocation2 + $0x30] sm:$0xff]
      %v256 = vld [vmem:[#allocation2 + $0x38] sm:$0xff]
      %v257 = vld [vmem:[#allocation2 + $0x40] sm:$0xff]
      %v258 = vld [vmem:[#allocation2 + $0x48] sm:$0xff]
      %v259 = vld [vmem:[#allocation2 + $0x50] sm:$0xff]
      %v260 = vld [vmem:[#allocation2 + $0x58] sm:$0xff]
      %v261 = vld [vmem:[#allocation2 + $0x60] sm:$0xff]
      %v262 = vld [vmem:[#allocation2 + $0x68] sm:$0xff]
      %v263 = vld [vmem:[#allocation2 + $0x70] sm:$0xff]
      %v264 = vld [vmem:[#allocation2 + $0x78] sm:$0xff]
      %v265 = vld [vmem:[#allocation2 + $0x80] sm:$0xff]
      %v266 = vld [vmem:[#allocation2 + $0x88] sm:$0xff]
      %v267 = vld [vmem:[#allocation2 + $0x90] sm:$0xff]
      %v268 = vld [vmem:[#allocation2 + $0x98] sm:$0xff]
      %v269 = vld [vmem:[#allocation2 + $0xa0] sm:$0xff]
      %v270 = vld [vmem:[#allocation2 + $0xa8] sm:$0xff]
      %v271 = vld [vmem:[#allocation2 + $0xb0] sm:$0xff]
      %v272 = vld [vmem:[#allocation2 + $0xb8] sm:$0xff]
      %v273 = vld [vmem:[#allocation2 + $0xc0] sm:$0xff]
      %v274 = vld [vmem:[#allocation2 + $0xc8] sm:$0xff]
      %v275 = vld [vmem:[#allocation2 + $0xd0] sm:$0xff]
      %v276 = vld [vmem:[#allocation2 + $0xd8] sm:$0xff]
      %v277 = vld [vmem:[#allocation2 + $0xe0] sm:$0xff]
      %v278 = vld [vmem:[#allocation2 + $0xe8] sm:$0xff]
      %v279 = vld [vmem:[#allocation2 + $0xf0] sm:$0xff]
      %v280 = vld [vmem:[#allocation2 + $0xf8] sm:$0xff]
      %v281 = vld [vmem:[%s200] sm:$0xf]
      %v282 = vld [vmem:[%s200 + $0x4] sm:$0xf]
      %v283 = vld [vmem:[%s200 + $0x8] sm:$0xf]
      %v284 = vld [vmem:[%s200 + $0xc] sm:$0xf]
      %v285 = vld [vmem:[%s200 + $0x10] sm:$0xf]
      %v286 = vld [vmem:[%s200 + $0x14] sm:$0xf]
      %v287 = vld [vmem:[%s200 + $0x18] sm:$0xf]
      %v288 = vld [vmem:[%s200 + $0x1c] sm:$0xf]
      %v289 = vld [vmem:[%s200 + $0x20] sm:$0xf]
      %v290 = vld [vmem:[%s200 + $0x24] sm:$0xf]
      %v291 = vld [vmem:[%s200 + $0x28] sm:$0xf]
      %v292 = vld [vmem:[%s200 + $0x2c] sm:$0xf]
      %v293 = vld [vmem:[%s200 + $0x30] sm:$0xf]
      %v294 = vld [vmem:[%s200 + $0x34] sm:$0xf]
      %v295 = vld [vmem:[%s200 + $0x38] sm:$0xf]
      %v296 = vld [vmem:[%s200 + $0x3c] sm:$0xf]
      %v297 = vld [vmem:[%s200 + $0x40] sm:$0xf]
      %v298 = vld [vmem:[%s200 + $0x44] sm:$0xf]
      %v299 = vld [vmem:[%s200 + $0x48] sm:$0xf]
      %v300 = vld [vmem:[%s200 + $0x4c] sm:$0xf]
      %v301 = vld [vmem:[%s200 + $0x50] sm:$0xf]
      %v302 = vld [vmem:[%s200 + $0x54] sm:$0xf]
      %v303 = vld [vmem:[%s200 + $0x58] sm:$0xf]
      %v304 = vld [vmem:[%s200 + $0x5c] sm:$0xf]
      %v305 = vld [vmem:[%s200 + $0x60] sm:$0xf]
      %v306 = vld [vmem:[%s200 + $0x64] sm:$0xf]
      %v307 = vld [vmem:[%s200 + $0x68] sm:$0xf]
      %v308 = vld [vmem:[%s200 + $0x6c] sm:$0xf]
      %v309 = vld [vmem:[%s200 + $0x70] sm:$0xf]
      %v310 = vld [vmem:[%s200 + $0x74] sm:$0xf]
      %v311 = vld [vmem:[%s200 + $0x78] sm:$0xf]
      %v312 = vld [vmem:[%s200 + $0x7c] sm:$0xf]
      %v313 = vld [vmem:[%s204] sm:$0x1]
      %v346 = vunpack.c.l.b16 %v281
      %v347 = vunpack.c.l.b16 %v282
      %v348 = vunpack.c.l.b16 %v283
      %v349 = vunpack.c.l.b16 %v284
      %v350 = vunpack.c.l.b16 %v285
      %v351 = vunpack.c.l.b16 %v286
      %v352 = vunpack.c.l.b16 %v287
      %v353 = vunpack.c.l.b16 %v288
      %v354 = vunpack.c.l.b16 %v289
      %v355 = vunpack.c.l.b16 %v290
      %v356 = vunpack.c.l.b16 %v291
      %v357 = vunpack.c.l.b16 %v292
      %v358 = vunpack.c.l.b16 %v293
      %v359 = vunpack.c.l.b16 %v294
      %v360 = vunpack.c.l.b16 %v295
      %v361 = vunpack.c.l.b16 %v296
      %v362 = vunpack.c.l.b16 %v297
      %v363 = vunpack.c.l.b16 %v298
      %v364 = vunpack.c.l.b16 %v299
      %v365 = vunpack.c.l.b16 %v300
      %v366 = vunpack.c.l.b16 %v301
      %v367 = vunpack.c.l.b16 %v302
      %v368 = vunpack.c.l.b16 %v303
      %v369 = vunpack.c.l.b16 %v304
      %v370 = vunpack.c.l.b16 %v305
      %v371 = vunpack.c.l.b16 %v306
      %v372 = vunpack.c.l.b16 %v307
      %v373 = vunpack.c.l.b16 %v308
      %v374 = vunpack.c.l.b16 %v309
      %v375 = vunpack.c.l.b16 %v310
      %v376 = vunpack.c.l.b16 %v311
      %v377 = vunpack.c.l.b16 %v312
      %v378 = vpack.c.b16 %v347, %v346
      %v379 = vpack.c.b16 %v349, %v348
      %v380 = vpack.c.b16 %v351, %v350
      %v381 = vpack.c.b16 %v353, %v352
      %v382 = vpack.c.b16 %v355, %v354
      %v383 = vpack.c.b16 %v357, %v356
      %v384 = vpack.c.b16 %v359, %v358
      %v385 = vpack.c.b16 %v361, %v360
      %v386 = vpack.c.b16 %v363, %v362
      %v387 = vpack.c.b16 %v365, %v364
      %v388 = vpack.c.b16 %v367, %v366
      %v389 = vpack.c.b16 %v369, %v368
      %v390 = vpack.c.b16 %v371, %v370
      %v391 = vpack.c.b16 %v373, %v372
      %v392 = vpack.c.b16 %v375, %v374
      %v393 = vpack.c.b16 %v377, %v376
      %vm394 = vcmask 7168
      %v396 = vsel %vm394, %v378, 0
      %v399 = vsel %vm394, %v379, 0
      %v402 = vsel %vm394, %v380, 0
      %v405 = vsel %vm394, %v381, 0
      %v408 = vsel %vm394, %v382, 0
      %v411 = vsel %vm394, %v383, 0
      %v414 = vsel %vm394, %v384, 0
      %v417 = vsel %vm394, %v385, 0
      %v420 = vsel %vm394, %v386, 0
      %v423 = vsel %vm394, %v387, 0
      %v426 = vsel %vm394, %v388, 0
      %v429 = vsel %vm394, %v389, 0
      %v432 = vsel %vm394, %v390, 0
      %v435 = vsel %vm394, %v391, 0
      %v438 = vsel %vm394, %v392, 0
      %v441 = vsel %vm394, %v393, 0
      %vm443 = vcmask 1040384
      %v444 = vsel 0, 4294967295, 65535
      %v445 = vsel %vm443, %v444, 0
      %v447 = vand.u32 %v313, %v445
      %449 = vmatpush.bf16.msra.mxu0 0
      %450 = vmatpush.bf16.msra.mxu0 0
      %451 = vmatpush.bf16.msra.mxu0 0
      %452 = vmatpush.bf16.msra.mxu0 0
      %453 = vmatpush.bf16.msra.mxu0 0
      %454 = vmatpush.bf16.msra.mxu0 0
      %455 = vmatpush.bf16.msra.mxu0 0
      %456 = vmatpush.bf16.msra.mxu0 %v447
      %457 = vmatmul.bf16.gmra.mxu0 %v396
      %v458 = vpop.f32.mrf.mxu0
      %v459 = vadd.f32 0.0, %v458
      %v460 = vpop.f32.mrf.mxu0
      %v461 = vadd.f32 0.0, %v460
      %462 = vmatmul.bf16.gmra.mxu0 %v399
      %v463 = vpop.f32.mrf.mxu0
      %v464 = vadd.f32 0.0, %v463
      %v465 = vpop.f32.mrf.mxu0
      %v466 = vadd.f32 0.0, %v465
      %467 = vmatmul.bf16.gmra.mxu0 %v402
      %v468 = vpop.f32.mrf.mxu0
      %v469 = vadd.f32 0.0, %v468
      %v470 = vpop.f32.mrf.mxu0
      %v471 = vadd.f32 0.0, %v470
      %472 = vmatmul.bf16.gmra.mxu0 %v405
      %v473 = vpop.f32.mrf.mxu0
      %v474 = vadd.f32 0.0, %v473
      %v475 = vpop.f32.mrf.mxu0
      %v476 = vadd.f32 0.0, %v475
      %477 = vmatmul.bf16.gmra.mxu0 %v408
      %v478 = vpop.f32.mrf.mxu0
      %v479 = vadd.f32 0.0, %v478
      %v480 = vpop.f32.mrf.mxu0
      %v481 = vadd.f32 0.0, %v480
      %482 = vmatmul.bf16.gmra.mxu0 %v411
      %v483 = vpop.f32.mrf.mxu0
      %v484 = vadd.f32 0.0, %v483
      %v485 = vpop.f32.mrf.mxu0
      %v486 = vadd.f32 0.0, %v485
      %487 = vmatmul.bf16.gmra.mxu0 %v414
      %v488 = vpop.f32.mrf.mxu0
      %v489 = vadd.f32 0.0, %v488
      %v490 = vpop.f32.mrf.mxu0
      %v491 = vadd.f32 0.0, %v490
      %492 = vmatmul.bf16.gmra.mxu0 %v417
      %v493 = vpop.f32.mrf.mxu0
      %v494 = vadd.f32 0.0, %v493
      %v495 = vpop.f32.mrf.mxu0
      %v496 = vadd.f32 0.0, %v495
      %497 = vmatmul.bf16.gmra.mxu0 %v420
      %v498 = vpop.f32.mrf.mxu0
      %v499 = vadd.f32 0.0, %v498
      %v500 = vpop.f32.mrf.mxu0
      %v501 = vadd.f32 0.0, %v500
      %502 = vmatmul.bf16.gmra.mxu0 %v423
      %v503 = vpop.f32.mrf.mxu0
      %v504 = vadd.f32 0.0, %v503
      %v505 = vpop.f32.mrf.mxu0
      %v506 = vadd.f32 0.0, %v505
      %507 = vmatmul.bf16.gmra.mxu0 %v426
      %v508 = vpop.f32.mrf.mxu0
      %v509 = vadd.f32 0.0, %v508
      %v510 = vpop.f32.mrf.mxu0
      %v511 = vadd.f32 0.0, %v510
      %512 = vmatmul.bf16.gmra.mxu0 %v429
      %v513 = vpop.f32.mrf.mxu0
      %v514 = vadd.f32 0.0, %v513
      %v515 = vpop.f32.mrf.mxu0
      %v516 = vadd.f32 0.0, %v515
      %517 = vmatmul.bf16.gmra.mxu0 %v432
      %v518 = vpop.f32.mrf.mxu0
      %v519 = vadd.f32 0.0, %v518
      %v520 = vpop.f32.mrf.mxu0
      %v521 = vadd.f32 0.0, %v520
      %522 = vmatmul.bf16.gmra.mxu0 %v435
      %v523 = vpop.f32.mrf.mxu0
      %v524 = vadd.f32 0.0, %v523
      %v525 = vpop.f32.mrf.mxu0
      %v526 = vadd.f32 0.0, %v525
      %527 = vmatmul.bf16.gmra.mxu0 %v438
      %v528 = vpop.f32.mrf.mxu0
      %v529 = vadd.f32 0.0, %v528
      %v530 = vpop.f32.mrf.mxu0
      %v531 = vadd.f32 0.0, %v530
      %532 = vmatmul.bf16.gmra.mxu0 %v441
      %v533 = vpop.f32.mrf.mxu0
      %v534 = vadd.f32 0.0, %v533
      %v535 = vpop.f32.mrf.mxu0
      %v536 = vadd.f32 0.0, %v535
      %537 = vdwg.mxu0
      %v538 = vadd.f32 %v249, %v459
      %v539 = vadd.f32 %v250, %v461
      %v540 = vadd.f32 %v251, %v464
      %v541 = vadd.f32 %v252, %v466
      %v542 = vadd.f32 %v253, %v469
      %v543 = vadd.f32 %v254, %v471
      %v544 = vadd.f32 %v255, %v474
      %v545 = vadd.f32 %v256, %v476
      %v546 = vadd.f32 %v257, %v479
      %v547 = vadd.f32 %v258, %v481
      %v548 = vadd.f32 %v259, %v484
      %v549 = vadd.f32 %v260, %v486
      %v550 = vadd.f32 %v261, %v489
      %v551 = vadd.f32 %v262, %v491
      %v552 = vadd.f32 %v263, %v494
      %v553 = vadd.f32 %v264, %v496
      %v554 = vadd.f32 %v265, %v499
      %v555 = vadd.f32 %v266, %v501
      %v556 = vadd.f32 %v267, %v504
      %v557 = vadd.f32 %v268, %v506
      %v558 = vadd.f32 %v269, %v509
      %v559 = vadd.f32 %v270, %v511
      %v560 = vadd.f32 %v271, %v514
      %v561 = vadd.f32 %v272, %v516
      %v562 = vadd.f32 %v273, %v519
      %v563 = vadd.f32 %v274, %v521
      %v564 = vadd.f32 %v275, %v524
      %v565 = vadd.f32 %v276, %v526
      %v566 = vadd.f32 %v277, %v529
      %v567 = vadd.f32 %v278, %v531
      %v568 = vadd.f32 %v279, %v534
      %v569 = vadd.f32 %v280, %v536
      %vm570 = vcmask 261120
      %571 = vst.msk [vmem:[#allocation2] sm:$0xff] %vm570, %v538
      %572 = vst.msk [vmem:[#allocation2 + $0x8] sm:$0xff] %vm570, %v539
      %573 = vst.msk [vmem:[#allocation2 + $0x10] sm:$0xff] %vm570, %v540
      %574 = vst.msk [vmem:[#allocation2 + $0x18] sm:$0xff] %vm570, %v541
      %575 = vst.msk [vmem:[#allocation2 + $0x20] sm:$0xff] %vm570, %v542
      %576 = vst.msk [vmem:[#allocation2 + $0x28] sm:$0xff] %vm570, %v543
      %577 = vst.msk [vmem:[#allocation2 + $0x30] sm:$0xff] %vm570, %v544
      %578 = vst.msk [vmem:[#allocation2 + $0x38] sm:$0xff] %vm570, %v545
      %579 = vst.msk [vmem:[#allocation2 + $0x40] sm:$0xff] %vm570, %v546
      %580 = vst.msk [vmem:[#allocation2 + $0x48] sm:$0xff] %vm570, %v547
      %581 = vst.msk [vmem:[#allocation2 + $0x50] sm:$0xff] %vm570, %v548
      %582 = vst.msk [vmem:[#allocation2 + $0x58] sm:$0xff] %vm570, %v549
      %583 = vst.msk [vmem:[#allocation2 + $0x60] sm:$0xff] %vm570, %v550
      %584 = vst.msk [vmem:[#allocation2 + $0x68] sm:$0xff] %vm570, %v551
      %585 = vst.msk [vmem:[#allocation2 + $0x70] sm:$0xff] %vm570, %v552
      %586 = vst.msk [vmem:[#allocation2 + $0x78] sm:$0xff] %vm570, %v553
      %587 = vst.msk [vmem:[#allocation2 + $0x80] sm:$0xff] %vm570, %v554
      %588 = vst.msk [vmem:[#allocation2 + $0x88] sm:$0xff] %vm570, %v555
      %589 = vst.msk [vmem:[#allocation2 + $0x90] sm:$0xff] %vm570, %v556
      %590 = vst.msk [vmem:[#allocation2 + $0x98] sm:$0xff] %vm570, %v557
      %591 = vst.msk [vmem:[#allocation2 + $0xa0] sm:$0xff] %vm570, %v558
      %592 = vst.msk [vmem:[#allocation2 + $0xa8] sm:$0xff] %vm570, %v559
      %593 = vst.msk [vmem:[#allocation2 + $0xb0] sm:$0xff] %vm570, %v560
      %594 = vst.msk [vmem:[#allocation2 + $0xb8] sm:$0xff] %vm570, %v561
      %595 = vst.msk [vmem:[#allocation2 + $0xc0] sm:$0xff] %vm570, %v562
      %596 = vst.msk [vmem:[#allocation2 + $0xc8] sm:$0xff] %vm570, %v563
      %597 = vst.msk [vmem:[#allocation2 + $0xd0] sm:$0xff] %vm570, %v564
      %598 = vst.msk [vmem:[#allocation2 + $0xd8] sm:$0xff] %vm570, %v565
      %599 = vst.msk [vmem:[#allocation2 + $0xe0] sm:$0xff] %vm570, %v566
      %600 = vst.msk [vmem:[#allocation2 + $0xe8] sm:$0xff] %vm570, %v567
      %601 = vst.msk [vmem:[#allocation2 + $0xf0] sm:$0xff] %vm570, %v568
      %602 = vst.msk [vmem:[#allocation2 + $0xf8] sm:$0xff] %vm570, %v569
      // Predicated region
      $region37: #{closed_call.51} parent=31 // pred_check
        %p603 = pneg %p212
      $region38: #{closed_call.51} parent=31 // pred_check_branch
        %605 = sbr.rel (%p603) target = $region40
      $region39: #{closed_call.51} parent=31 // pred_region
        %v606 = vld [vmem:[#allocation2] sm:$0xff]
        %v607 = vld [vmem:[#allocation2 + $0x8] sm:$0xff]
        %v608 = vld [vmem:[#allocation2 + $0x10] sm:$0xff]
        %v609 = vld [vmem:[#allocation2 + $0x18] sm:$0xff]
        %v610 = vld [vmem:[#allocation2 + $0x20] sm:$0xff]
        %v611 = vld [vmem:[#allocation2 + $0x28] sm:$0xff]
        %v612 = vld [vmem:[#allocation2 + $0x30] sm:$0xff]
        %v613 = vld [vmem:[#allocation2 + $0x38] sm:$0xff]
        %v614 = vld [vmem:[#allocation2 + $0x40] sm:$0xff]
        %v615 = vld [vmem:[#allocation2 + $0x48] sm:$0xff]
        %v616 = vld [vmem:[#allocation2 + $0x50] sm:$0xff]
        %v617 = vld [vmem:[#allocation2 + $0x58] sm:$0xff]
        %v618 = vld [vmem:[#allocation2 + $0x60] sm:$0xff]
        %v619 = vld [vmem:[#allocation2 + $0x68] sm:$0xff]
        %v620 = vld [vmem:[#allocation2 + $0x70] sm:$0xff]
        %v621 = vld [vmem:[#allocation2 + $0x78] sm:$0xff]
        %v622 = vld [vmem:[#allocation2 + $0x80] sm:$0xff]
        %v623 = vld [vmem:[#allocation2 + $0x88] sm:$0xff]
        %v624 = vld [vmem:[#allocation2 + $0x90] sm:$0xff]
        %v625 = vld [vmem:[#allocation2 + $0x98] sm:$0xff]
        %v626 = vld [vmem:[#allocation2 + $0xa0] sm:$0xff]
        %v627 = vld [vmem:[#allocation2 + $0xa8] sm:$0xff]
        %v628 = vld [vmem:[#allocation2 + $0xb0] sm:$0xff]
        %v629 = vld [vmem:[#allocation2 + $0xb8] sm:$0xff]
        %v630 = vld [vmem:[#allocation2 + $0xc0] sm:$0xff]
        %v631 = vld [vmem:[#allocation2 + $0xc8] sm:$0xff]
        %v632 = vld [vmem:[#allocation2 + $0xd0] sm:$0xff]
        %v633 = vld [vmem:[#allocation2 + $0xd8] sm:$0xff]
        %v634 = vld [vmem:[#allocation2 + $0xe0] sm:$0xff]
        %v635 = vld [vmem:[#allocation2 + $0xe8] sm:$0xff]
        %v636 = vld [vmem:[#allocation2 + $0xf0] sm:$0xff]
        %v637 = vld [vmem:[#allocation2 + $0xf8] sm:$0xff]
        %v638 = vld [vmem:[%s2] sm:$0x1]
        %v640 = vperm.slane %v638, 0
        %v642 = vadd.f32 %v606, %v640
        %v643 = vadd.f32 %v607, %v640
        %v644 = vadd.f32 %v608, %v640
        %v645 = vadd.f32 %v609, %v640
        %v646 = vadd.f32 %v610, %v640
        %v647 = vadd.f32 %v611, %v640
        %v648 = vadd.f32 %v612, %v640
        %v649 = vadd.f32 %v613, %v640
        %v650 = vadd.f32 %v614, %v640
        %v651 = vadd.f32 %v615, %v640
        %v652 = vadd.f32 %v616, %v640
        %v653 = vadd.f32 %v617, %v640
        %v654 = vadd.f32 %v618, %v640
        %v655 = vadd.f32 %v619, %v640
        %v656 = vadd.f32 %v620, %v640
        %v657 = vadd.f32 %v621, %v640
        %v658 = vadd.f32 %v622, %v640
        %v659 = vadd.f32 %v623, %v640
        %v660 = vadd.f32 %v624, %v640
        %v661 = vadd.f32 %v625, %v640
        %v662 = vadd.f32 %v626, %v640
        %v663 = vadd.f32 %v627, %v640
        %v664 = vadd.f32 %v628, %v640
        %v665 = vadd.f32 %v629, %v640
        %v666 = vadd.f32 %v630, %v640
        %v667 = vadd.f32 %v631, %v640
        %v668 = vadd.f32 %v632, %v640
        %v669 = vadd.f32 %v633, %v640
        %v670 = vadd.f32 %v634, %v640
        %v671 = vadd.f32 %v635, %v640
        %v672 = vadd.f32 %v636, %v640
        %v673 = vadd.f32 %v637, %v640
        %vm674 = vcmp.ge.f32.partialorder %v642, 0.0
        %vm675 = vcmp.ge.f32.partialorder %v643, 0.0
        %vm676 = vcmp.ge.f32.partialorder %v644, 0.0
        %vm677 = vcmp.ge.f32.partialorder %v645, 0.0
        %vm678 = vcmp.ge.f32.partialorder %v646, 0.0
        %vm679 = vcmp.ge.f32.partialorder %v647, 0.0
        %vm680 = vcmp.ge.f32.partialorder %v648, 0.0
        %vm681 = vcmp.ge.f32.partialorder %v649, 0.0
        %vm682 = vcmp.ge.f32.partialorder %v650, 0.0
        %vm683 = vcmp.ge.f32.partialorder %v651, 0.0
        %vm684 = vcmp.ge.f32.partialorder %v652, 0.0
        %vm685 = vcmp.ge.f32.partialorder %v653, 0.0
        %vm686 = vcmp.ge.f32.partialorder %v654, 0.0
        %vm687 = vcmp.ge.f32.partialorder %v655, 0.0
        %vm688 = vcmp.ge.f32.partialorder %v656, 0.0
        %vm689 = vcmp.ge.f32.partialorder %v657, 0.0
        %vm690 = vcmp.ge.f32.partialorder %v658, 0.0
        %vm691 = vcmp.ge.f32.partialorder %v659, 0.0
        %vm692 = vcmp.ge.f32.partialorder %v660, 0.0
        %vm693 = vcmp.ge.f32.partialorder %v661, 0.0
        %vm694 = vcmp.ge.f32.partialorder %v662, 0.0
        %vm695 = vcmp.ge.f32.partialorder %v663, 0.0
        %vm696 = vcmp.ge.f32.partialorder %v664, 0.0
        %vm697 = vcmp.ge.f32.partialorder %v665, 0.0
        %vm698 = vcmp.ge.f32.partialorder %v666, 0.0
        %vm699 = vcmp.ge.f32.partialorder %v667, 0.0
        %vm700 = vcmp.ge.f32.partialorder %v668, 0.0
        %vm701 = vcmp.ge.f32.partialorder %v669, 0.0
        %vm702 = vcmp.ge.f32.partialorder %v670, 0.0
        %vm703 = vcmp.ge.f32.partialorder %v671, 0.0
        %vm704 = vcmp.ge.f32.partialorder %v672, 0.0
        %vm705 = vcmp.ge.f32.partialorder %v673, 0.0
        %v706 = vmul.f32 %v642, 0.1
        %v707 = vmul.f32 %v643, 0.1
        %v708 = vmul.f32 %v644, 0.1
        %v709 = vmul.f32 %v645, 0.1
        %v710 = vmul.f32 %v646, 0.1
        %v711 = vmul.f32 %v647, 0.1
        %v712 = vmul.f32 %v648, 0.1
        %v713 = vmul.f32 %v649, 0.1
        %v714 = vmul.f32 %v650, 0.1
        %v715 = vmul.f32 %v651, 0.1
        %v716 = vmul.f32 %v652, 0.1
        %v717 = vmul.f32 %v653, 0.1
        %v718 = vmul.f32 %v654, 0.1
        %v719 = vmul.f32 %v655, 0.1
        %v720 = vmul.f32 %v656, 0.1
        %v721 = vmul.f32 %v657, 0.1
        %v722 = vmul.f32 %v658, 0.1
        %v723 = vmul.f32 %v659, 0.1
        %v724 = vmul.f32 %v660, 0.1
        %v725 = vmul.f32 %v661, 0.1
        %v726 = vmul.f32 %v662, 0.1
        %v727 = vmul.f32 %v663, 0.1
        %v728 = vmul.f32 %v664, 0.1
        %v729 = vmul.f32 %v665, 0.1
        %v730 = vmul.f32 %v666, 0.1
        %v731 = vmul.f32 %v667, 0.1
        %v732 = vmul.f32 %v668, 0.1
        %v733 = vmul.f32 %v669, 0.1
        %v734 = vmul.f32 %v670, 0.1
        %v735 = vmul.f32 %v671, 0.1
        %v736 = vmul.f32 %v672, 0.1
        %v737 = vmul.f32 %v673, 0.1
        %v738 = vsel %vm674, %v642, %v706
        %v739 = vsel %vm675, %v643, %v707
        %v740 = vsel %vm676, %v644, %v708
        %v741 = vsel %vm677, %v645, %v709
        %v742 = vsel %vm678, %v646, %v710
        %v743 = vsel %vm679, %v647, %v711
        %v744 = vsel %vm680, %v648, %v712
        %v745 = vsel %vm681, %v649, %v713
        %v746 = vsel %vm682, %v650, %v714
        %v747 = vsel %vm683, %v651, %v715
        %v748 = vsel %vm684, %v652, %v716
        %v749 = vsel %vm685, %v653, %v717
        %v750 = vsel %vm686, %v654, %v718
        %v751 = vsel %vm687, %v655, %v719
        %v752 = vsel %vm688, %v656, %v720
        %v753 = vsel %vm689, %v657, %v721
        %v754 = vsel %vm690, %v658, %v722
        %v755 = vsel %vm691, %v659, %v723
        %v756 = vsel %vm692, %v660, %v724
        %v757 = vsel %vm693, %v661, %v725
        %v758 = vsel %vm694, %v662, %v726
        %v759 = vsel %vm695, %v663, %v727
        %v760 = vsel %vm696, %v664, %v728
        %v761 = vsel %vm697, %v665, %v729
        %v762 = vsel %vm698, %v666, %v730
        %v763 = vsel %vm699, %v667, %v731
        %v764 = vsel %vm700, %v668, %v732
        %v765 = vsel %vm701, %v669, %v733
        %v766 = vsel %vm702, %v670, %v734
        %v767 = vsel %vm703, %v671, %v735
        %v768 = vsel %vm704, %v672, %v736
        %v769 = vsel %vm705, %v673, %v737
        %v770 = vpack.c.bf16 %v738, %v738
        %v771 = vpack.c.bf16 %v739, %v739
        %v772 = vpack.c.bf16 %v740, %v740
        %v773 = vpack.c.bf16 %v741, %v741
        %v774 = vpack.c.bf16 %v742, %v742
        %v775 = vpack.c.bf16 %v743, %v743
        %v776 = vpack.c.bf16 %v744, %v744
        %v777 = vpack.c.bf16 %v745, %v745
        %v778 = vpack.c.bf16 %v746, %v746
        %v779 = vpack.c.bf16 %v747, %v747
        %v780 = vpack.c.bf16 %v748, %v748
        %v781 = vpack.c.bf16 %v749, %v749
        %v782 = vpack.c.bf16 %v750, %v750
        %v783 = vpack.c.bf16 %v751, %v751
        %v784 = vpack.c.bf16 %v752, %v752
        %v785 = vpack.c.bf16 %v753, %v753
        %v786 = vpack.c.bf16 %v754, %v754
        %v787 = vpack.c.bf16 %v755, %v755
        %v788 = vpack.c.bf16 %v756, %v756
        %v789 = vpack.c.bf16 %v757, %v757
        %v790 = vpack.c.bf16 %v758, %v758
        %v791 = vpack.c.bf16 %v759, %v759
        %v792 = vpack.c.bf16 %v760, %v760
        %v793 = vpack.c.bf16 %v761, %v761
        %v794 = vpack.c.bf16 %v762, %v762
        %v795 = vpack.c.bf16 %v763, %v763
        %v796 = vpack.c.bf16 %v764, %v764
        %v797 = vpack.c.bf16 %v765, %v765
        %v798 = vpack.c.bf16 %v766, %v766
        %v799 = vpack.c.bf16 %v767, %v767
        %v800 = vpack.c.bf16 %v768, %v768
        %v801 = vpack.c.bf16 %v769, %v769
        %vm802 = vcmask 257024
        %803 = vst.msk [vmem:[%s209] sm:$0xf] %vm802, %v770
        %804 = vst.msk [vmem:[%s209 + $0x4] sm:$0xf] %vm802, %v771
        %805 = vst.msk [vmem:[%s209 + $0x8] sm:$0xf] %vm802, %v772
        %806 = vst.msk [vmem:[%s209 + $0xc] sm:$0xf] %vm802, %v773
        %807 = vst.msk [vmem:[%s209 + $0x10] sm:$0xf] %vm802, %v774
        %808 = vst.msk [vmem:[%s209 + $0x14] sm:$0xf] %vm802, %v775
        %809 = vst.msk [vmem:[%s209 + $0x18] sm:$0xf] %vm802, %v776
        %810 = vst.msk [vmem:[%s209 + $0x1c] sm:$0xf] %vm802, %v777
        %811 = vst.msk [vmem:[%s209 + $0x20] sm:$0xf] %vm802, %v778
        %812 = vst.msk [vmem:[%s209 + $0x24] sm:$0xf] %vm802, %v779
        %813 = vst.msk [vmem:[%s209 + $0x28] sm:$0xf] %vm802, %v780
        %814 = vst.msk [vmem:[%s209 + $0x2c] sm:$0xf] %vm802, %v781
        %815 = vst.msk [vmem:[%s209 + $0x30] sm:$0xf] %vm802, %v782
        %816 = vst.msk [vmem:[%s209 + $0x34] sm:$0xf] %vm802, %v783
        %817 = vst.msk [vmem:[%s209 + $0x38] sm:$0xf] %vm802, %v784
        %818 = vst.msk [vmem:[%s209 + $0x3c] sm:$0xf] %vm802, %v785
        %819 = vst.msk [vmem:[%s209 + $0x40] sm:$0xf] %vm802, %v786
        %820 = vst.msk [vmem:[%s209 + $0x44] sm:$0xf] %vm802, %v787
        %821 = vst.msk [vmem:[%s209 + $0x48] sm:$0xf] %vm802, %v788
        %822 = vst.msk [vmem:[%s209 + $0x4c] sm:$0xf] %vm802, %v789
        %823 = vst.msk [vmem:[%s209 + $0x50] sm:$0xf] %vm802, %v790
        %824 = vst.msk [vmem:[%s209 + $0x54] sm:$0xf] %vm802, %v791
        %825 = vst.msk [vmem:[%s209 + $0x58] sm:$0xf] %vm802, %v792
        %826 = vst.msk [vmem:[%s209 + $0x5c] sm:$0xf] %vm802, %v793
        %827 = vst.msk [vmem:[%s209 + $0x60] sm:$0xf] %vm802, %v794
        %828 = vst.msk [vmem:[%s209 + $0x64] sm:$0xf] %vm802, %v795
        %829 = vst.msk [vmem:[%s209 + $0x68] sm:$0xf] %vm802, %v796
        %830 = vst.msk [vmem:[%s209 + $0x6c] sm:$0xf] %vm802, %v797
        %831 = vst.msk [vmem:[%s209 + $0x70] sm:$0xf] %vm802, %v798
        %832 = vst.msk [vmem:[%s209 + $0x74] sm:$0xf] %vm802, %v799
        %833 = vst.msk [vmem:[%s209 + $0x78] sm:$0xf] %vm802, %v800
        %834 = vst.msk [vmem:[%s209 + $0x7c] sm:$0xf] %vm802, %v801
      $region40: #{closed_call.51} parent=31 // pred_fallthru
        _
      %s835 = smul.u32 32, %s18
      %p836 = scmp.lt.s32.totalorder %s835, 63
      %s837 = scalar_select %p836, %s835, 63
      %s838 = smul.addr %s837, 4
      %s839 = scalar_lea.vmem %s3, %s838
      // Predicated region
      $region41: #{closed_call.51} parent=31 // pred_check
        %p840 = pneg %p119
      $region42: #{closed_call.51} parent=31 // pred_check_branch
        %842 = sbr.rel (%p840) target = $region44
      $region43: #{closed_call.51} parent=31 // pred_region
        %s843 = smul.u32 32, %s18
      $region44: #{closed_call.51} parent=31 // pred_fallthru
        _
    $region32: #{closed_call.51} parent=5 // pred_fallthru
      _
    %p844 = scmp.le.s32.totalorder 2, %s9
    // Predicated region
    $region45: #{closed_call.51} parent=5 // pred_check
      %p845 = pneg %p844
    $region46: #{closed_call.51} parent=5 // pred_check_branch
      %847 = sbr.rel (%p845) target = $region48
    $region47: #{closed_call.51} parent=5 // pred_region
      %s848 = ssub.s32 %s9, 2
      // Predicated region
      $region49: #{closed_call.51} parent=47 // pred_check
        %p849 = pneg %p125
      $region50: #{closed_call.51} parent=47 // pred_check_branch
        %851 = sbr.rel (%p849) target = $region52
      $region51: #{closed_call.51} parent=47 // pred_region
        %s852 = smul.u32 32, %s20
        %p853 = scmp.lt.s32.totalorder %s852, 63
        %s854 = scalar_select %p853, %s852, 63
        %s855 = smul.addr %s854, 4
        %s856 = scalar_lea.vmem %s3, %s855
      $region52: #{closed_call.51} parent=47 // pred_fallthru
        _
    $region48: #{closed_call.51} parent=5 // pred_fallthru
      _
  $region6: #{closed_call.51} parent=0 // loop_footer
    %s13 = sadd.s32 1, %s9
  $region7: #{closed_call.51} parent=0 // loop_footer_branch
    %8 = sbr.rel target = $region3
  $region8: #{closed_call.51} parent=0 // loop_exit
    _

// kernel: closed_call.52
$region0: #{closed_call.52}
  #allocation0 [shape = 'u32[]', space=smem, size = 0x4, offset = 0x4, fixed_abs, tag = 'smem constant byte address 0x4 - core index']
  #allocation1 [shape = 'u32[72,128]{1,0:T(1,128)}', space=vmem, size = 0x9000, scoped, tag = 'internal scratch']
  #allocation2 [shape = 'f32[128,32]{1,0:T(8,128)}', space=vmem, size = 0x10000, scoped, tag = 'scratch operand']
  %s0 = inlined_call_operand.vmem [shape: bf16[128,288], index: 0, kind: input, shape index: {}]
  %s1 = inlined_call_operand.vmem [shape: bf16[288,32], index: 1, kind: input, shape index: {}]
  %s2 = inlined_call_operand.vmem [shape: f32[1,32], index: 2, kind: input, shape index: {}]
  %s3 = inlined_call_operand.vmem [shape: bf16[128,32], index: 3, kind: output, shape index: {}]
  %s4 = sld [smem:[#allocation0]]
  $region30: #{closed_call.52} parent=0
    _
  %s6 = ssub.s32 1, %s4
  %s7 = scalar_select 0, %s6, %s4
  // Predicated region
  $region2: #{closed_call.52} parent=0 // pred_check
    _
  $region3: #{closed_call.52} parent=0 // pred_check_branch
    %9 = sbr.rel (0) target = $region5
  $region4: #{closed_call.52} parent=0 // pred_region
    _
  $region5: #{closed_call.52} parent=0 // pred_fallthru
    _
  // Predicated region
  $region6: #{closed_call.52} parent=0 // pred_check
    _
  $region7: #{closed_call.52} parent=0 // pred_check_branch
    %11 = sbr.rel (0) target = $region9
  $region8: #{closed_call.52} parent=0 // pred_region
    _
  $region9: #{closed_call.52} parent=0 // pred_fallthru
    _
  // Predicated region
  $region10: #{closed_call.52} parent=0 // pred_check
    _
  $region11: #{closed_call.52} parent=0 // pred_check_branch
    %13 = sbr.rel (0) target = $region13
  $region12: #{closed_call.52} parent=0 // pred_region
    _
  $region13: #{closed_call.52} parent=0 // pred_fallthru
    _
  %p15 = scmp.eq.s32.totalorder 0, 0
  // Predicated region
  $region14: #{closed_call.52} parent=0 // pred_check
    %p16 = pneg %p15
  $region15: #{closed_call.52} parent=0 // pred_check_branch
    %18 = sbr.rel (%p16) target = $region17
  $region16: #{closed_call.52} parent=0 // pred_region
    %vm19 = vcmask 261120
    %20 = vst.msk [vmem:[#allocation2] sm:$0xff] %vm19, 0.0
    %21 = vst.msk [vmem:[#allocation2 + $0x8] sm:$0xff] %vm19, 0.0
    %22 = vst.msk [vmem:[#allocation2 + $0x10] sm:$0xff] %vm19, 0.0
    %23 = vst.msk [vmem:[#allocation2 + $0x18] sm:$0xff] %vm19, 0.0
    %24 = vst.msk [vmem:[#allocation2 + $0x20] sm:$0xff] %vm19, 0.0
    %25 = vst.msk [vmem:[#allocation2 + $0x28] sm:$0xff] %vm19, 0.0
    %26 = vst.msk [vmem:[#allocation2 + $0x30] sm:$0xff] %vm19, 0.0
    %27 = vst.msk [vmem:[#allocation2 + $0x38] sm:$0xff] %vm19, 0.0
    %28 = vst.msk [vmem:[#allocation2 + $0x40] sm:$0xff] %vm19, 0.0
    %29 = vst.msk [vmem:[#allocation2 + $0x48] sm:$0xff] %vm19, 0.0
    %30 = vst.msk [vmem:[#allocation2 + $0x50] sm:$0xff] %vm19, 0.0
    %31 = vst.msk [vmem:[#allocation2 + $0x58] sm:$0xff] %vm19, 0.0
    %32 = vst.msk [vmem:[#allocation2 + $0x60] sm:$0xff] %vm19, 0.0
    %33 = vst.msk [vmem:[#allocation2 + $0x68] sm:$0xff] %vm19, 0.0
    %34 = vst.msk [vmem:[#allocation2 + $0x70] sm:$0xff] %vm19, 0.0
    %35 = vst.msk [vmem:[#allocation2 + $0x78] sm:$0xff] %vm19, 0.0
  $region17: #{closed_call.52} parent=0 // pred_fallthru
    _
  %v36 = vld [vmem:[#allocation2] sm:$0xff]
  %v37 = vld [vmem:[#allocation2 + $0x8] sm:$0xff]
  %v38 = vld [vmem:[#allocation2 + $0x10] sm:$0xff]
  %v39 = vld [vmem:[#allocation2 + $0x18] sm:$0xff]
  %v40 = vld [vmem:[#allocation2 + $0x20] sm:$0xff]
  %v41 = vld [vmem:[#allocation2 + $0x28] sm:$0xff]
  %v42 = vld [vmem:[#allocation2 + $0x30] sm:$0xff]
  %v43 = vld [vmem:[#allocation2 + $0x38] sm:$0xff]
  %v44 = vld [vmem:[#allocation2 + $0x40] sm:$0xff]
  %v45 = vld [vmem:[#allocation2 + $0x48] sm:$0xff]
  %v46 = vld [vmem:[#allocation2 + $0x50] sm:$0xff]
  %v47 = vld [vmem:[#allocation2 + $0x58] sm:$0xff]
  %v48 = vld [vmem:[#allocation2 + $0x60] sm:$0xff]
  %v49 = vld [vmem:[#allocation2 + $0x68] sm:$0xff]
  %v50 = vld [vmem:[#allocation2 + $0x70] sm:$0xff]
  %v51 = vld [vmem:[#allocation2 + $0x78] sm:$0xff]
  %v52 = vld [vmem:[%s0] sm:$0xff]
  %v53 = vld [vmem:[%s0 + $0x8] sm:$0xf]
  %v54 = vld [vmem:[%s0 + $0xc] sm:$0xff]
  %v55 = vld [vmem:[%s0 + $0x14] sm:$0xf]
  %v56 = vld [vmem:[%s0 + $0x18] sm:$0xff]
  %v57 = vld [vmem:[%s0 + $0x20] sm:$0xf]
  %v58 = vld [vmem:[%s0 + $0x24] sm:$0xff]
  %v59 = vld [vmem:[%s0 + $0x2c] sm:$0xf]
  %v60 = vld [vmem:[%s0 + $0x30] sm:$0xff]
  %v61 = vld [vmem:[%s0 + $0x38] sm:$0xf]
  %v62 = vld [vmem:[%s0 + $0x3c] sm:$0xff]
  %v63 = vld [vmem:[%s0 + $0x44] sm:$0xf]
  %v64 = vld [vmem:[%s0 + $0x48] sm:$0xff]
  %v65 = vld [vmem:[%s0 + $0x50] sm:$0xf]
  %v66 = vld [vmem:[%s0 + $0x54] sm:$0xff]
  %v67 = vld [vmem:[%s0 + $0x5c] sm:$0xf]
  %v68 = vld [vmem:[%s0 + $0x60] sm:$0xff]
  %v69 = vld [vmem:[%s0 + $0x68] sm:$0xf]
  %v70 = vld [vmem:[%s0 + $0x6c] sm:$0xff]
  %v71 = vld [vmem:[%s0 + $0x74] sm:$0xf]
  %v72 = vld [vmem:[%s0 + $0x78] sm:$0xff]
  %v73 = vld [vmem:[%s0 + $0x80] sm:$0xf]
  %v74 = vld [vmem:[%s0 + $0x84] sm:$0xff]
  %v75 = vld [vmem:[%s0 + $0x8c] sm:$0xf]
  %v76 = vld [vmem:[%s0 + $0x90] sm:$0xff]
  %v77 = vld [vmem:[%s0 + $0x98] sm:$0xf]
  %v78 = vld [vmem:[%s0 + $0x9c] sm:$0xff]
  %v79 = vld [vmem:[%s0 + $0xa4] sm:$0xf]
  %v80 = vld [vmem:[%s0 + $0xa8] sm:$0xff]
  %v81 = vld [vmem:[%s0 + $0xb0] sm:$0xf]
  %v82 = vld [vmem:[%s0 + $0xb4] sm:$0xff]
  %v83 = vld [vmem:[%s0 + $0xbc] sm:$0xf]
  %v84 = vld [vmem:[%s1] sm:$0xf]
  %v85 = vld [vmem:[%s1 + $0x4] sm:$0xf]
  %v86 = vld [vmem:[%s1 + $0x8] sm:$0xf]
  %v87 = vld [vmem:[%s1 + $0xc] sm:$0xf]
  %v88 = vld [vmem:[%s1 + $0x10] sm:$0xf]
  %v89 = vld [vmem:[%s1 + $0x14] sm:$0xf]
  %v90 = vld [vmem:[%s1 + $0x18] sm:$0xf]
  %v91 = vld [vmem:[%s1 + $0x1c] sm:$0xf]
  %v92 = vld [vmem:[%s1 + $0x20] sm:$0xf]
  %v93 = vld [vmem:[%s1 + $0x24] sm:$0xf]
  %v94 = vld [vmem:[%s1 + $0x28] sm:$0xf]
  %v95 = vld [vmem:[%s1 + $0x2c] sm:$0xf]
  %v96 = vld [vmem:[%s1 + $0x30] sm:$0xf]
  %v97 = vld [vmem:[%s1 + $0x34] sm:$0xf]
  %v98 = vld [vmem:[%s1 + $0x38] sm:$0xf]
  %v99 = vld [vmem:[%s1 + $0x3c] sm:$0xf]
  %v100 = vld [vmem:[%s1 + $0x40] sm:$0xf]
  %v101 = vld [vmem:[%s1 + $0x44] sm:$0xf]
  %v102 = vld [vmem:[%s1 + $0x48] sm:$0xf]
  %v103 = vld [vmem:[%s1 + $0x4c] sm:$0xf]
  %v104 = vld [vmem:[%s1 + $0x50] sm:$0xf]
  %v105 = vld [vmem:[%s1 + $0x54] sm:$0xf]
  %v106 = vld [vmem:[%s1 + $0x58] sm:$0xf]
  %v107 = vld [vmem:[%s1 + $0x5c] sm:$0xf]
  %v108 = vld [vmem:[%s1 + $0x60] sm:$0xf]
  %v109 = vld [vmem:[%s1 + $0x64] sm:$0xf]
  %v110 = vld [vmem:[%s1 + $0x68] sm:$0xf]
  %v111 = vld [vmem:[%s1 + $0x6c] sm:$0xf]
  %v112 = vld [vmem:[%s1 + $0x70] sm:$0xf]
  %v113 = vld [vmem:[%s1 + $0x74] sm:$0xf]
  %v114 = vld [vmem:[%s1 + $0x78] sm:$0xf]
  %v115 = vld [vmem:[%s1 + $0x7c] sm:$0xf]
  %v116 = vld [vmem:[%s1 + $0x80] sm:$0xf]
  %v117 = vld [vmem:[%s1 + $0x84] sm:$0xf]
  %v118 = vld [vmem:[%s1 + $0x88] sm:$0xf]
  %v119 = vld [vmem:[%s1 + $0x8c] sm:$0xf]
  %v152 = vunpack.c.l.b16 %v52
  %v153 = vunpack.c.h.b16 %v52
  %v154 = vunpack.c.l.b16 %v53
  %v155 = vunpack.c.l.b16 %v54
  %v156 = vunpack.c.h.b16 %v54
  %v157 = vunpack.c.l.b16 %v55
  %v158 = vunpack.c.l.b16 %v56
  %v159 = vunpack.c.h.b16 %v56
  %v160 = vunpack.c.l.b16 %v57
  %v161 = vunpack.c.l.b16 %v58
  %v162 = vunpack.c.h.b16 %v58
  %v163 = vunpack.c.l.b16 %v59
  %v164 = vunpack.c.l.b16 %v60
  %v165 = vunpack.c.h.b16 %v60
  %v166 = vunpack.c.l.b16 %v61
  %v167 = vunpack.c.l.b16 %v62
  %v168 = vunpack.c.h.b16 %v62
  %v169 = vunpack.c.l.b16 %v63
  %v170 = vunpack.c.l.b16 %v64
  %v171 = vunpack.c.h.b16 %v64
  %v172 = vunpack.c.l.b16 %v65
  %v173 = vunpack.c.l.b16 %v66
  %v174 = vunpack.c.h.b16 %v66
  %v175 = vunpack.c.l.b16 %v67
  %v176 = vunpack.c.l.b16 %v68
  %v177 = vunpack.c.h.b16 %v68
  %v178 = vunpack.c.l.b16 %v69
  %v179 = vunpack.c.l.b16 %v70
  %v180 = vunpack.c.h.b16 %v70
  %v181 = vunpack.c.l.b16 %v71
  %v182 = vunpack.c.l.b16 %v72
  %v183 = vunpack.c.h.b16 %v72
  %v184 = vunpack.c.l.b16 %v73
  %v185 = vunpack.c.l.b16 %v74
  %v186 = vunpack.c.h.b16 %v74
  %v187 = vunpack.c.l.b16 %v75
  %v188 = vunpack.c.l.b16 %v76
  %v189 = vunpack.c.h.b16 %v76
  %v190 = vunpack.c.l.b16 %v77
  %v191 = vunpack.c.l.b16 %v78
  %v192 = vunpack.c.h.b16 %v78
  %v193 = vunpack.c.l.b16 %v79
  %v194 = vunpack.c.l.b16 %v80
  %v195 = vunpack.c.h.b16 %v80
  %v196 = vunpack.c.l.b16 %v81
  %v197 = vunpack.c.l.b16 %v82
  %v198 = vunpack.c.h.b16 %v82
  %v199 = vunpack.c.l.b16 %v83
  %v200 = vpack.c.b16 %v155, %v152
  %v201 = vpack.c.b16 %v156, %v153
  %v202 = vpack.c.b16 %v157, %v154
  %v203 = vpack.c.b16 %v161, %v158
  %v204 = vpack.c.b16 %v162, %v159
  %v205 = vpack.c.b16 %v163, %v160
  %v206 = vpack.c.b16 %v167, %v164
  %v207 = vpack.c.b16 %v168, %v165
  %v208 = vpack.c.b16 %v169, %v166
  %v209 = vpack.c.b16 %v173, %v170
  %v210 = vpack.c.b16 %v174, %v171
  %v211 = vpack.c.b16 %v175, %v172
  %v212 = vpack.c.b16 %v179, %v176
  %v213 = vpack.c.b16 %v180, %v177
  %v214 = vpack.c.b16 %v181, %v178
  %v215 = vpack.c.b16 %v185, %v182
  %v216 = vpack.c.b16 %v186, %v183
  %v217 = vpack.c.b16 %v187, %v184
  %v218 = vpack.c.b16 %v191, %v188
  %v219 = vpack.c.b16 %v192, %v189
  %v220 = vpack.c.b16 %v193, %v190
  %v221 = vpack.c.b16 %v197, %v194
  %v222 = vpack.c.b16 %v198, %v195
  %v223 = vpack.c.b16 %v199, %v196
  %v276 = vunpack.c.l.b16 %v84
  %v277 = vunpack.c.l.b16 %v85
  %v278 = vunpack.c.l.b16 %v86
  %v279 = vunpack.c.l.b16 %v87
  %v280 = vunpack.c.l.b16 %v88
  %v281 = vunpack.c.l.b16 %v89
  %v282 = vunpack.c.l.b16 %v90
  %v283 = vunpack.c.l.b16 %v91
  %v284 = vunpack.c.l.b16 %v92
  %v285 = vunpack.c.l.b16 %v93
  %v286 = vunpack.c.l.b16 %v94
  %v287 = vunpack.c.l.b16 %v95
  %v288 = vunpack.c.l.b16 %v96
  %v289 = vunpack.c.l.b16 %v97
  %v290 = vunpack.c.l.b16 %v98
  %v291 = vunpack.c.l.b16 %v99
  %v292 = vunpack.c.l.b16 %v100
  %v293 = vunpack.c.l.b16 %v101
  %v294 = vunpack.c.l.b16 %v102
  %v295 = vunpack.c.l.b16 %v103
  %v296 = vunpack.c.l.b16 %v104
  %v297 = vunpack.c.l.b16 %v105
  %v298 = vunpack.c.l.b16 %v106
  %v299 = vunpack.c.l.b16 %v107
  %v300 = vunpack.c.l.b16 %v108
  %v301 = vunpack.c.l.b16 %v109
  %v302 = vunpack.c.l.b16 %v110
  %v303 = vunpack.c.l.b16 %v111
  %v304 = vunpack.c.l.b16 %v112
  %v305 = vunpack.c.l.b16 %v113
  %v306 = vunpack.c.l.b16 %v114
  %v307 = vunpack.c.l.b16 %v115
  %v308 = vunpack.c.l.b16 %v116
  %v309 = vunpack.c.l.b16 %v117
  %v310 = vunpack.c.l.b16 %v118
  %v311 = vunpack.c.l.b16 %v119
  %v312 = vpack.c.b16 %v277, %v276
  %v313 = vpack.c.b16 %v279, %v278
  %v314 = vpack.c.b16 %v281, %v280
  %v315 = vpack.c.b16 %v283, %v282
  %v316 = vpack.c.b16 %v285, %v284
  %v317 = vpack.c.b16 %v287, %v286
  %v318 = vpack.c.b16 %v289, %v288
  %v319 = vpack.c.b16 %v291, %v290
  %v320 = vpack.c.b16 %v293, %v292
  %v321 = vpack.c.b16 %v295, %v294
  %v322 = vpack.c.b16 %v297, %v296
  %v323 = vpack.c.b16 %v299, %v298
  %v324 = vpack.c.b16 %v301, %v300
  %v325 = vpack.c.b16 %v303, %v302
  %v326 = vpack.c.b16 %v305, %v304
  %v327 = vpack.c.b16 %v307, %v306
  %v328 = vpack.c.b16 %v309, %v308
  %v329 = vpack.c.b16 %v311, %v310
  %vm348 = vcmask 261120
  %v350 = vsel %vm348, %v202, 0
  %v353 = vsel %vm348, %v205, 0
  %v356 = vsel %vm348, %v208, 0
  %v359 = vsel %vm348, %v211, 0
  %v362 = vsel %vm348, %v214, 0
  %v365 = vsel %vm348, %v217, 0
  %v368 = vsel %vm348, %v220, 0
  %v371 = vsel %vm348, %v223, 0
  %373 = vmatpush.bf16.msra.mxu0 %v319
  %374 = vmatpush.bf16.msra.mxu0 %v318
  %375 = vmatpush.bf16.msra.mxu0 %v317
  %376 = vmatpush.bf16.msra.mxu0 %v316
  %377 = vmatpush.bf16.msra.mxu0 %v315
  %378 = vmatpush.bf16.msra.mxu0 %v314
  %379 = vmatpush.bf16.msra.mxu0 %v313
  %380 = vmatpush.bf16.msra.mxu0 %v312
  %381 = vmatmul.bf16.gmra.mxu0 %v200
  %v382 = vpop.f32.mrf.mxu0
  %v383 = vadd.f32 0.0, %v382
  %v384 = vpop.f32.mrf.mxu0
  %v385 = vadd.f32 0.0, %v384
  %386 = vmatmul.bf16.gmra.mxu0 %v203
  %v387 = vpop.f32.mrf.mxu0
  %v388 = vadd.f32 0.0, %v387
  %v389 = vpop.f32.mrf.mxu0
  %v390 = vadd.f32 0.0, %v389
  %391 = vmatmul.bf16.gmra.mxu0 %v206
  %v392 = vpop.f32.mrf.mxu0
  %v393 = vadd.f32 0.0, %v392
  %v394 = vpop.f32.mrf.mxu0
  %v395 = vadd.f32 0.0, %v394
  %396 = vmatmul.bf16.gmra.mxu0 %v209
  %v397 = vpop.f32.mrf.mxu0
  %v398 = vadd.f32 0.0, %v397
  %v399 = vpop.f32.mrf.mxu0
  %v400 = vadd.f32 0.0, %v399
  %401 = vmatmul.bf16.gmra.mxu0 %v212
  %v402 = vpop.f32.mrf.mxu0
  %v403 = vadd.f32 0.0, %v402
  %v404 = vpop.f32.mrf.mxu0
  %v405 = vadd.f32 0.0, %v404
  %406 = vmatmul.bf16.gmra.mxu0 %v215
  %v407 = vpop.f32.mrf.mxu0
  %v408 = vadd.f32 0.0, %v407
  %v409 = vpop.f32.mrf.mxu0
  %v410 = vadd.f32 0.0, %v409
  %411 = vmatmul.bf16.gmra.mxu0 %v218
  %v412 = vpop.f32.mrf.mxu0
  %v413 = vadd.f32 0.0, %v412
  %v414 = vpop.f32.mrf.mxu0
  %v415 = vadd.f32 0.0, %v414
  %416 = vmatmul.bf16.gmra.mxu0 %v221
  %v417 = vpop.f32.mrf.mxu0
  %v418 = vadd.f32 0.0, %v417
  %v419 = vpop.f32.mrf.mxu0
  %v420 = vadd.f32 0.0, %v419
  %421 = vdwg.mxu0
  %422 = vmatpush.bf16.msra.mxu0 %v327
  %423 = vmatpush.bf16.msra.mxu0 %v326
  %424 = vmatpush.bf16.msra.mxu0 %v325
  %425 = vmatpush.bf16.msra.mxu0 %v324
  %426 = vmatpush.bf16.msra.mxu0 %v323
  %427 = vmatpush.bf16.msra.mxu0 %v322
  %428 = vmatpush.bf16.msra.mxu0 %v321
  %429 = vmatpush.bf16.msra.mxu0 %v320
  %430 = vmatmul.bf16.gmra.mxu0 %v201
  %v431 = vpop.f32.mrf.mxu0
  %v432 = vadd.f32 %v383, %v431
  %v433 = vpop.f32.mrf.mxu0
  %v434 = vadd.f32 %v385, %v433
  %435 = vmatmul.bf16.gmra.mxu0 %v204
  %v436 = vpop.f32.mrf.mxu0
  %v437 = vadd.f32 %v388, %v436
  %v438 = vpop.f32.mrf.mxu0
  %v439 = vadd.f32 %v390, %v438
  %440 = vmatmul.bf16.gmra.mxu0 %v207
  %v441 = vpop.f32.mrf.mxu0
  %v442 = vadd.f32 %v393, %v441
  %v443 = vpop.f32.mrf.mxu0
  %v444 = vadd.f32 %v395, %v443
  %445 = vmatmul.bf16.gmra.mxu0 %v210
  %v446 = vpop.f32.mrf.mxu0
  %v447 = vadd.f32 %v398, %v446
  %v448 = vpop.f32.mrf.mxu0
  %v449 = vadd.f32 %v400, %v448
  %450 = vmatmul.bf16.gmra.mxu0 %v213
  %v451 = vpop.f32.mrf.mxu0
  %v452 = vadd.f32 %v403, %v451
  %v453 = vpop.f32.mrf.mxu0
  %v454 = vadd.f32 %v405, %v453
  %455 = vmatmul.bf16.gmra.mxu0 %v216
  %v456 = vpop.f32.mrf.mxu0
  %v457 = vadd.f32 %v408, %v456
  %v458 = vpop.f32.mrf.mxu0
  %v459 = vadd.f32 %v410, %v458
  %460 = vmatmul.bf16.gmra.mxu0 %v219
  %v461 = vpop.f32.mrf.mxu0
  %v462 = vadd.f32 %v413, %v461
  %v463 = vpop.f32.mrf.mxu0
  %v464 = vadd.f32 %v415, %v463
  %465 = vmatmul.bf16.gmra.mxu0 %v222
  %v466 = vpop.f32.mrf.mxu0
  %v467 = vadd.f32 %v418, %v466
  %v468 = vpop.f32.mrf.mxu0
  %v469 = vadd.f32 %v420, %v468
  %470 = vdwg.mxu0
  %471 = vmatpush.bf16.msra.mxu0 0
  %472 = vmatpush.bf16.msra.mxu0 0
  %473 = vmatpush.bf16.msra.mxu0 0
  %474 = vmatpush.bf16.msra.mxu0 0
  %475 = vmatpush.bf16.msra.mxu0 0
  %476 = vmatpush.bf16.msra.mxu0 0
  %477 = vmatpush.bf16.msra.mxu0 %v329
  %478 = vmatpush.bf16.msra.mxu0 %v328
  %479 = vmatmul.bf16.gmra.mxu0 %v350
  %v480 = vpop.f32.mrf.mxu0
  %v481 = vadd.f32 %v432, %v480
  %v482 = vpop.f32.mrf.mxu0
  %v483 = vadd.f32 %v434, %v482
  %484 = vmatmul.bf16.gmra.mxu0 %v353
  %v485 = vpop.f32.mrf.mxu0
  %v486 = vadd.f32 %v437, %v485
  %v487 = vpop.f32.mrf.mxu0
  %v488 = vadd.f32 %v439, %v487
  %489 = vmatmul.bf16.gmra.mxu0 %v356
  %v490 = vpop.f32.mrf.mxu0
  %v491 = vadd.f32 %v442, %v490
  %v492 = vpop.f32.mrf.mxu0
  %v493 = vadd.f32 %v444, %v492
  %494 = vmatmul.bf16.gmra.mxu0 %v359
  %v495 = vpop.f32.mrf.mxu0
  %v496 = vadd.f32 %v447, %v495
  %v497 = vpop.f32.mrf.mxu0
  %v498 = vadd.f32 %v449, %v497
  %499 = vmatmul.bf16.gmra.mxu0 %v362
  %v500 = vpop.f32.mrf.mxu0
  %v501 = vadd.f32 %v452, %v500
  %v502 = vpop.f32.mrf.mxu0
  %v503 = vadd.f32 %v454, %v502
  %504 = vmatmul.bf16.gmra.mxu0 %v365
  %v505 = vpop.f32.mrf.mxu0
  %v506 = vadd.f32 %v457, %v505
  %v507 = vpop.f32.mrf.mxu0
  %v508 = vadd.f32 %v459, %v507
  %509 = vmatmul.bf16.gmra.mxu0 %v368
  %v510 = vpop.f32.mrf.mxu0
  %v511 = vadd.f32 %v462, %v510
  %v512 = vpop.f32.mrf.mxu0
  %v513 = vadd.f32 %v464, %v512
  %514 = vmatmul.bf16.gmra.mxu0 %v371
  %v515 = vpop.f32.mrf.mxu0
  %v516 = vadd.f32 %v467, %v515
  %v517 = vpop.f32.mrf.mxu0
  %v518 = vadd.f32 %v469, %v517
  %519 = vdwg.mxu0
  %v520 = vadd.f32 %v36, %v481
  %v521 = vadd.f32 %v37, %v483
  %v522 = vadd.f32 %v38, %v486
  %v523 = vadd.f32 %v39, %v488
  %v524 = vadd.f32 %v40, %v491
  %v525 = vadd.f32 %v41, %v493
  %v526 = vadd.f32 %v42, %v496
  %v527 = vadd.f32 %v43, %v498
  %v528 = vadd.f32 %v44, %v501
  %v529 = vadd.f32 %v45, %v503
  %v530 = vadd.f32 %v46, %v506
  %v531 = vadd.f32 %v47, %v508
  %v532 = vadd.f32 %v48, %v511
  %v533 = vadd.f32 %v49, %v513
  %v534 = vadd.f32 %v50, %v516
  %v535 = vadd.f32 %v51, %v518
  %536 = vst.msk [vmem:[#allocation2] sm:$0xff] %vm348, %v520
  %537 = vst.msk [vmem:[#allocation2 + $0x8] sm:$0xff] %vm348, %v521
  %538 = vst.msk [vmem:[#allocation2 + $0x10] sm:$0xff] %vm348, %v522
  %539 = vst.msk [vmem:[#allocation2 + $0x18] sm:$0xff] %vm348, %v523
  %540 = vst.msk [vmem:[#allocation2 + $0x20] sm:$0xff] %vm348, %v524
  %541 = vst.msk [vmem:[#allocation2 + $0x28] sm:$0xff] %vm348, %v525
  %542 = vst.msk [vmem:[#allocation2 + $0x30] sm:$0xff] %vm348, %v526
  %543 = vst.msk [vmem:[#allocation2 + $0x38] sm:$0xff] %vm348, %v527
  %544 = vst.msk [vmem:[#allocation2 + $0x40] sm:$0xff] %vm348, %v528
  %545 = vst.msk [vmem:[#allocation2 + $0x48] sm:$0xff] %vm348, %v529
  %546 = vst.msk [vmem:[#allocation2 + $0x50] sm:$0xff] %vm348, %v530
  %547 = vst.msk [vmem:[#allocation2 + $0x58] sm:$0xff] %vm348, %v531
  %548 = vst.msk [vmem:[#allocation2 + $0x60] sm:$0xff] %vm348, %v532
  %549 = vst.msk [vmem:[#allocation2 + $0x68] sm:$0xff] %vm348, %v533
  %550 = vst.msk [vmem:[#allocation2 + $0x70] sm:$0xff] %vm348, %v534
  %551 = vst.msk [vmem:[#allocation2 + $0x78] sm:$0xff] %vm348, %v535
  // Predicated region
  $region18: #{closed_call.52} parent=0 // pred_check
    %p552 = pneg %p15
  $region19: #{closed_call.52} parent=0 // pred_check_branch
    %554 = sbr.rel (%p552) target = $region21
  $region20: #{closed_call.52} parent=0 // pred_region
    %v555 = vld [vmem:[#allocation2] sm:$0xff]
    %v556 = vld [vmem:[#allocation2 + $0x8] sm:$0xff]
    %v557 = vld [vmem:[#allocation2 + $0x10] sm:$0xff]
    %v558 = vld [vmem:[#allocation2 + $0x18] sm:$0xff]
    %v559 = vld [vmem:[#allocation2 + $0x20] sm:$0xff]
    %v560 = vld [vmem:[#allocation2 + $0x28] sm:$0xff]
    %v561 = vld [vmem:[#allocation2 + $0x30] sm:$0xff]
    %v562 = vld [vmem:[#allocation2 + $0x38] sm:$0xff]
    %v563 = vld [vmem:[#allocation2 + $0x40] sm:$0xff]
    %v564 = vld [vmem:[#allocation2 + $0x48] sm:$0xff]
    %v565 = vld [vmem:[#allocation2 + $0x50] sm:$0xff]
    %v566 = vld [vmem:[#allocation2 + $0x58] sm:$0xff]
    %v567 = vld [vmem:[#allocation2 + $0x60] sm:$0xff]
    %v568 = vld [vmem:[#allocation2 + $0x68] sm:$0xff]
    %v569 = vld [vmem:[#allocation2 + $0x70] sm:$0xff]
    %v570 = vld [vmem:[#allocation2 + $0x78] sm:$0xff]
    %v571 = vld [vmem:[%s2] sm:$0x1]
    %v573 = vperm.slane %v571, 0
    %v575 = vadd.f32 %v555, %v573
    %v576 = vadd.f32 %v556, %v573
    %v577 = vadd.f32 %v557, %v573
    %v578 = vadd.f32 %v558, %v573
    %v579 = vadd.f32 %v559, %v573
    %v580 = vadd.f32 %v560, %v573
    %v581 = vadd.f32 %v561, %v573
    %v582 = vadd.f32 %v562, %v573
    %v583 = vadd.f32 %v563, %v573
    %v584 = vadd.f32 %v564, %v573
    %v585 = vadd.f32 %v565, %v573
    %v586 = vadd.f32 %v566, %v573
    %v587 = vadd.f32 %v567, %v573
    %v588 = vadd.f32 %v568, %v573
    %v589 = vadd.f32 %v569, %v573
    %v590 = vadd.f32 %v570, %v573
    %vm591 = vcmp.ge.f32.partialorder %v575, 0.0
    %vm592 = vcmp.ge.f32.partialorder %v576, 0.0
    %vm593 = vcmp.ge.f32.partialorder %v577, 0.0
    %vm594 = vcmp.ge.f32.partialorder %v578, 0.0
    %vm595 = vcmp.ge.f32.partialorder %v579, 0.0
    %vm596 = vcmp.ge.f32.partialorder %v580, 0.0
    %vm597 = vcmp.ge.f32.partialorder %v581, 0.0
    %vm598 = vcmp.ge.f32.partialorder %v582, 0.0
    %vm599 = vcmp.ge.f32.partialorder %v583, 0.0
    %vm600 = vcmp.ge.f32.partialorder %v584, 0.0
    %vm601 = vcmp.ge.f32.partialorder %v585, 0.0
    %vm602 = vcmp.ge.f32.partialorder %v586, 0.0
    %vm603 = vcmp.ge.f32.partialorder %v587, 0.0
    %vm604 = vcmp.ge.f32.partialorder %v588, 0.0
    %vm605 = vcmp.ge.f32.partialorder %v589, 0.0
    %vm606 = vcmp.ge.f32.partialorder %v590, 0.0
    %v607 = vmul.f32 %v575, 0.1
    %v608 = vmul.f32 %v576, 0.1
    %v609 = vmul.f32 %v577, 0.1
    %v610 = vmul.f32 %v578, 0.1
    %v611 = vmul.f32 %v579, 0.1
    %v612 = vmul.f32 %v580, 0.1
    %v613 = vmul.f32 %v581, 0.1
    %v614 = vmul.f32 %v582, 0.1
    %v615 = vmul.f32 %v583, 0.1
    %v616 = vmul.f32 %v584, 0.1
    %v617 = vmul.f32 %v585, 0.1
    %v618 = vmul.f32 %v586, 0.1
    %v619 = vmul.f32 %v587, 0.1
    %v620 = vmul.f32 %v588, 0.1
    %v621 = vmul.f32 %v589, 0.1
    %v622 = vmul.f32 %v590, 0.1
    %v623 = vsel %vm591, %v575, %v607
    %v624 = vsel %vm592, %v576, %v608
    %v625 = vsel %vm593, %v577, %v609
    %v626 = vsel %vm594, %v578, %v610
    %v627 = vsel %vm595, %v579, %v611
    %v628 = vsel %vm596, %v580, %v612
    %v629 = vsel %vm597, %v581, %v613
    %v630 = vsel %vm598, %v582, %v614
    %v631 = vsel %vm599, %v583, %v615
    %v632 = vsel %vm600, %v584, %v616
    %v633 = vsel %vm601, %v585, %v617
    %v634 = vsel %vm602, %v586, %v618
    %v635 = vsel %vm603, %v587, %v619
    %v636 = vsel %vm604, %v588, %v620
    %v637 = vsel %vm605, %v589, %v621
    %v638 = vsel %vm606, %v590, %v622
    %v639 = vpack.c.bf16 %v623, %v623
    %v640 = vpack.c.bf16 %v624, %v624
    %v641 = vpack.c.bf16 %v625, %v625
    %v642 = vpack.c.bf16 %v626, %v626
    %v643 = vpack.c.bf16 %v627, %v627
    %v644 = vpack.c.bf16 %v628, %v628
    %v645 = vpack.c.bf16 %v629, %v629
    %v646 = vpack.c.bf16 %v630, %v630
    %v647 = vpack.c.bf16 %v631, %v631
    %v648 = vpack.c.bf16 %v632, %v632
    %v649 = vpack.c.bf16 %v633, %v633
    %v650 = vpack.c.bf16 %v634, %v634
    %v651 = vpack.c.bf16 %v635, %v635
    %v652 = vpack.c.bf16 %v636, %v636
    %v653 = vpack.c.bf16 %v637, %v637
    %v654 = vpack.c.bf16 %v638, %v638
    %vm655 = vcmask 257024
    %656 = vst.msk [vmem:[%s3] sm:$0xf] %vm655, %v639
    %657 = vst.msk [vmem:[%s3 + $0x4] sm:$0xf] %vm655, %v640
    %658 = vst.msk [vmem:[%s3 + $0x8] sm:$0xf] %vm655, %v641
    %659 = vst.msk [vmem:[%s3 + $0xc] sm:$0xf] %vm655, %v642
    %660 = vst.msk [vmem:[%s3 + $0x10] sm:$0xf] %vm655, %v643
    %661 = vst.msk [vmem:[%s3 + $0x14] sm:$0xf] %vm655, %v644
    %662 = vst.msk [vmem:[%s3 + $0x18] sm:$0xf] %vm655, %v645
    %663 = vst.msk [vmem:[%s3 + $0x1c] sm:$0xf] %vm655, %v646
    %664 = vst.msk [vmem:[%s3 + $0x20] sm:$0xf] %vm655, %v647
    %665 = vst.msk [vmem:[%s3 + $0x24] sm:$0xf] %vm655, %v648
    %666 = vst.msk [vmem:[%s3 + $0x28] sm:$0xf] %vm655, %v649
    %667 = vst.msk [vmem:[%s3 + $0x2c] sm:$0xf] %vm655, %v650
    %668 = vst.msk [vmem:[%s3 + $0x30] sm:$0xf] %vm655, %v651
    %669 = vst.msk [vmem:[%s3 + $0x34] sm:$0xf] %vm655, %v652
    %670 = vst.msk [vmem:[%s3 + $0x38] sm:$0xf] %vm655, %v653
    %671 = vst.msk [vmem:[%s3 + $0x3c] sm:$0xf] %vm655, %v654
  $region21: #{closed_call.52} parent=0 // pred_fallthru
    _
  // Predicated region
  $region22: #{closed_call.52} parent=0 // pred_check
    _
  $region23: #{closed_call.52} parent=0 // pred_check_branch
    %673 = sbr.rel (0) target = $region25
  $region24: #{closed_call.52} parent=0 // pred_region
    _
  $region25: #{closed_call.52} parent=0 // pred_fallthru
    _
  // Predicated region
  $region26: #{closed_call.52} parent=0 // pred_check
    _
  $region27: #{closed_call.52} parent=0 // pred_check_branch
    %675 = sbr.rel (0) target = $region29
  $region28: #{closed_call.52} parent=0 // pred_region
    _
  $region29: #{closed_call.52} parent=0 // pred_fallthru
    _

// kernel: closed_call.53
$region0: #{closed_call.53}
  #allocation0 [shape = 'u32[]', space=smem, size = 0x4, offset = 0x4, fixed_abs, tag = 'smem constant byte address 0x4 - core index']
  #allocation1 [shape = 'u32[72,128]{1,0:T(1,128)}', space=vmem, size = 0x9000, scoped, tag = 'internal scratch']
  #allocation2 [shape = 'f32[32,32]{1,0:T(8,128)}', space=vmem, size = 0x4000, scoped, tag = 'scratch operand']
  %s0 = inlined_call_operand.vmem [shape: bf16[32,288], index: 0, kind: input, shape index: {}]
  %s1 = inlined_call_operand.vmem [shape: bf16[288,32], index: 1, kind: input, shape index: {}]
  %s2 = inlined_call_operand.vmem [shape: f32[1,32], index: 2, kind: input, shape index: {}]
  %s3 = inlined_call_operand.vmem [shape: bf16[32,32], index: 3, kind: output, shape index: {}]
  %s4 = sld [smem:[#allocation0]]
  $region30: #{closed_call.53} parent=0
    _
  %s6 = ssub.s32 1, %s4
  %s7 = scalar_select 0, %s6, %s4
  // Predicated region
  $region2: #{closed_call.53} parent=0 // pred_check
    _
  $region3: #{closed_call.53} parent=0 // pred_check_branch
    %9 = sbr.rel (0) target = $region5
  $region4: #{closed_call.53} parent=0 // pred_region
    _
  $region5: #{closed_call.53} parent=0 // pred_fallthru
    _
  // Predicated region
  $region6: #{closed_call.53} parent=0 // pred_check
    _
  $region7: #{closed_call.53} parent=0 // pred_check_branch
    %11 = sbr.rel (0) target = $region9
  $region8: #{closed_call.53} parent=0 // pred_region
    _
  $region9: #{closed_call.53} parent=0 // pred_fallthru
    _
  // Predicated region
  $region10: #{closed_call.53} parent=0 // pred_check
    _
  $region11: #{closed_call.53} parent=0 // pred_check_branch
    %13 = sbr.rel (0) target = $region13
  $region12: #{closed_call.53} parent=0 // pred_region
    _
  $region13: #{closed_call.53} parent=0 // pred_fallthru
    _
  %p15 = scmp.eq.s32.totalorder 0, 0
  // Predicated region
  $region14: #{closed_call.53} parent=0 // pred_check
    %p16 = pneg %p15
  $region15: #{closed_call.53} parent=0 // pred_check_branch
    %18 = sbr.rel (%p16) target = $region17
  $region16: #{closed_call.53} parent=0 // pred_region
    %vm19 = vcmask 261120
    %20 = vst.msk [vmem:[#allocation2] sm:$0xff] %vm19, 0.0
    %21 = vst.msk [vmem:[#allocation2 + $0x8] sm:$0xff] %vm19, 0.0
    %22 = vst.msk [vmem:[#allocation2 + $0x10] sm:$0xff] %vm19, 0.0
    %23 = vst.msk [vmem:[#allocation2 + $0x18] sm:$0xff] %vm19, 0.0
  $region17: #{closed_call.53} parent=0 // pred_fallthru
    _
  %v24 = vld [vmem:[#allocation2] sm:$0xff]
  %v25 = vld [vmem:[#allocation2 + $0x8] sm:$0xff]
  %v26 = vld [vmem:[#allocation2 + $0x10] sm:$0xff]
  %v27 = vld [vmem:[#allocation2 + $0x18] sm:$0xff]
  %v28 = vld [vmem:[%s0] sm:$0xff]
  %v29 = vld [vmem:[%s0 + $0x8] sm:$0xf]
  %v30 = vld [vmem:[%s0 + $0xc] sm:$0xff]
  %v31 = vld [vmem:[%s0 + $0x14] sm:$0xf]
  %v32 = vld [vmem:[%s0 + $0x18] sm:$0xff]
  %v33 = vld [vmem:[%s0 + $0x20] sm:$0xf]
  %v34 = vld [vmem:[%s0 + $0x24] sm:$0xff]
  %v35 = vld [vmem:[%s0 + $0x2c] sm:$0xf]
  %v36 = vld [vmem:[%s1] sm:$0xf]
  %v37 = vld [vmem:[%s1 + $0x4] sm:$0xf]
  %v38 = vld [vmem:[%s1 + $0x8] sm:$0xf]
  %v39 = vld [vmem:[%s1 + $0xc] sm:$0xf]
  %v40 = vld [vmem:[%s1 + $0x10] sm:$0xf]
  %v41 = vld [vmem:[%s1 + $0x14] sm:$0xf]
  %v42 = vld [vmem:[%s1 + $0x18] sm:$0xf]
  %v43 = vld [vmem:[%s1 + $0x1c] sm:$0xf]
  %v44 = vld [vmem:[%s1 + $0x20] sm:$0xf]
  %v45 = vld [vmem:[%s1 + $0x24] sm:$0xf]
  %v46 = vld [vmem:[%s1 + $0x28] sm:$0xf]
  %v47 = vld [vmem:[%s1 + $0x2c] sm:$0xf]
  %v48 = vld [vmem:[%s1 + $0x30] sm:$0xf]
  %v49 = vld [vmem:[%s1 + $0x34] sm:$0xf]
  %v50 = vld [vmem:[%s1 + $0x38] sm:$0xf]
  %v51 = vld [vmem:[%s1 + $0x3c] sm:$0xf]
  %v52 = vld [vmem:[%s1 + $0x40] sm:$0xf]
  %v53 = vld [vmem:[%s1 + $0x44] sm:$0xf]
  %v54 = vld [vmem:[%s1 + $0x48] sm:$0xf]
  %v55 = vld [vmem:[%s1 + $0x4c] sm:$0xf]
  %v56 = vld [vmem:[%s1 + $0x50] sm:$0xf]
  %v57 = vld [vmem:[%s1 + $0x54] sm:$0xf]
  %v58 = vld [vmem:[%s1 + $0x58] sm:$0xf]
  %v59 = vld [vmem:[%s1 + $0x5c] sm:$0xf]
  %v60 = vld [vmem:[%s1 + $0x60] sm:$0xf]
  %v61 = vld [vmem:[%s1 + $0x64] sm:$0xf]
  %v62 = vld [vmem:[%s1 + $0x68] sm:$0xf]
  %v63 = vld [vmem:[%s1 + $0x6c] sm:$0xf]
  %v64 = vld [vmem:[%s1 + $0x70] sm:$0xf]
  %v65 = vld [vmem:[%s1 + $0x74] sm:$0xf]
  %v66 = vld [vmem:[%s1 + $0x78] sm:$0xf]
  %v67 = vld [vmem:[%s1 + $0x7c] sm:$0xf]
  %v68 = vld [vmem:[%s1 + $0x80] sm:$0xf]
  %v69 = vld [vmem:[%s1 + $0x84] sm:$0xf]
  %v70 = vld [vmem:[%s1 + $0x88] sm:$0xf]
  %v71 = vld [vmem:[%s1 + $0x8c] sm:$0xf]
  %v80 = vunpack.c.l.b16 %v28
  %v81 = vunpack.c.h.b16 %v28
  %v82 = vunpack.c.l.b16 %v29
  %v83 = vunpack.c.l.b16 %v30
  %v84 = vunpack.c.h.b16 %v30
  %v85 = vunpack.c.l.b16 %v31
  %v86 = vunpack.c.l.b16 %v32
  %v87 = vunpack.c.h.b16 %v32
  %v88 = vunpack.c.l.b16 %v33
  %v89 = vunpack.c.l.b16 %v34
  %v90 = vunpack.c.h.b16 %v34
  %v91 = vunpack.c.l.b16 %v35
  %v92 = vpack.c.b16 %v83, %v80
  %v93 = vpack.c.b16 %v84, %v81
  %v94 = vpack.c.b16 %v85, %v82
  %v95 = vpack.c.b16 %v89, %v86
  %v96 = vpack.c.b16 %v90, %v87
  %v97 = vpack.c.b16 %v91, %v88
  %v138 = vunpack.c.l.b16 %v36
  %v139 = vunpack.c.l.b16 %v37
  %v140 = vunpack.c.l.b16 %v38
  %v141 = vunpack.c.l.b16 %v39
  %v142 = vunpack.c.l.b16 %v40
  %v143 = vunpack.c.l.b16 %v41
  %v144 = vunpack.c.l.b16 %v42
  %v145 = vunpack.c.l.b16 %v43
  %v146 = vunpack.c.l.b16 %v44
  %v147 = vunpack.c.l.b16 %v45
  %v148 = vunpack.c.l.b16 %v46
  %v149 = vunpack.c.l.b16 %v47
  %v150 = vunpack.c.l.b16 %v48
  %v151 = vunpack.c.l.b16 %v49
  %v152 = vunpack.c.l.b16 %v50
  %v153 = vunpack.c.l.b16 %v51
  %v154 = vunpack.c.l.b16 %v52
  %v155 = vunpack.c.l.b16 %v53
  %v156 = vunpack.c.l.b16 %v54
  %v157 = vunpack.c.l.b16 %v55
  %v158 = vunpack.c.l.b16 %v56
  %v159 = vunpack.c.l.b16 %v57
  %v160 = vunpack.c.l.b16 %v58
  %v161 = vunpack.c.l.b16 %v59
  %v162 = vunpack.c.l.b16 %v60
  %v163 = vunpack.c.l.b16 %v61
  %v164 = vunpack.c.l.b16 %v62
  %v165 = vunpack.c.l.b16 %v63
  %v166 = vunpack.c.l.b16 %v64
  %v167 = vunpack.c.l.b16 %v65
  %v168 = vunpack.c.l.b16 %v66
  %v169 = vunpack.c.l.b16 %v67
  %v170 = vunpack.c.l.b16 %v68
  %v171 = vunpack.c.l.b16 %v69
  %v172 = vunpack.c.l.b16 %v70
  %v173 = vunpack.c.l.b16 %v71
  %v174 = vpack.c.b16 %v139, %v138
  %v175 = vpack.c.b16 %v141, %v140
  %v176 = vpack.c.b16 %v143, %v142
  %v177 = vpack.c.b16 %v145, %v144
  %v178 = vpack.c.b16 %v147, %v146
  %v179 = vpack.c.b16 %v149, %v148
  %v180 = vpack.c.b16 %v151, %v150
  %v181 = vpack.c.b16 %v153, %v152
  %v182 = vpack.c.b16 %v155, %v154
  %v183 = vpack.c.b16 %v157, %v156
  %v184 = vpack.c.b16 %v159, %v158
  %v185 = vpack.c.b16 %v161, %v160
  %v186 = vpack.c.b16 %v163, %v162
  %v187 = vpack.c.b16 %v165, %v164
  %v188 = vpack.c.b16 %v167, %v166
  %v189 = vpack.c.b16 %v169, %v168
  %v190 = vpack.c.b16 %v171, %v170
  %v191 = vpack.c.b16 %v173, %v172
  %vm210 = vcmask 261120
  %v212 = vsel %vm210, %v94, 0
  %v215 = vsel %vm210, %v97, 0
  %217 = vmatpush.bf16.msra.mxu0 %v181
  %218 = vmatpush.bf16.msra.mxu0 %v180
  %219 = vmatpush.bf16.msra.mxu0 %v179
  %220 = vmatpush.bf16.msra.mxu0 %v178
  %221 = vmatpush.bf16.msra.mxu0 %v177
  %222 = vmatpush.bf16.msra.mxu0 %v176
  %223 = vmatpush.bf16.msra.mxu0 %v175
  %224 = vmatpush.bf16.msra.mxu0 %v174
  %225 = vmatmul.bf16.gmra.mxu0 %v92
  %v226 = vpop.f32.mrf.mxu0
  %v227 = vadd.f32 0.0, %v226
  %v228 = vpop.f32.mrf.mxu0
  %v229 = vadd.f32 0.0, %v228
  %230 = vmatmul.bf16.gmra.mxu0 %v95
  %v231 = vpop.f32.mrf.mxu0
  %v232 = vadd.f32 0.0, %v231
  %v233 = vpop.f32.mrf.mxu0
  %v234 = vadd.f32 0.0, %v233
  %235 = vdwg.mxu0
  %236 = vmatpush.bf16.msra.mxu0 %v189
  %237 = vmatpush.bf16.msra.mxu0 %v188
  %238 = vmatpush.bf16.msra.mxu0 %v187
  %239 = vmatpush.bf16.msra.mxu0 %v186
  %240 = vmatpush.bf16.msra.mxu0 %v185
  %241 = vmatpush.bf16.msra.mxu0 %v184
  %242 = vmatpush.bf16.msra.mxu0 %v183
  %243 = vmatpush.bf16.msra.mxu0 %v182
  %244 = vmatmul.bf16.gmra.mxu0 %v93
  %v245 = vpop.f32.mrf.mxu0
  %v246 = vadd.f32 %v227, %v245
  %v247 = vpop.f32.mrf.mxu0
  %v248 = vadd.f32 %v229, %v247
  %249 = vmatmul.bf16.gmra.mxu0 %v96
  %v250 = vpop.f32.mrf.mxu0
  %v251 = vadd.f32 %v232, %v250
  %v252 = vpop.f32.mrf.mxu0
  %v253 = vadd.f32 %v234, %v252
  %254 = vdwg.mxu0
  %255 = vmatpush.bf16.msra.mxu0 0
  %256 = vmatpush.bf16.msra.mxu0 0
  %257 = vmatpush.bf16.msra.mxu0 0
  %258 = vmatpush.bf16.msra.mxu0 0
  %259 = vmatpush.bf16.msra.mxu0 0
  %260 = vmatpush.bf16.msra.mxu0 0
  %261 = vmatpush.bf16.msra.mxu0 %v191
  %262 = vmatpush.bf16.msra.mxu0 %v190
  %263 = vmatmul.bf16.gmra.mxu0 %v212
  %v264 = vpop.f32.mrf.mxu0
  %v265 = vadd.f32 %v246, %v264
  %v266 = vpop.f32.mrf.mxu0
  %v267 = vadd.f32 %v248, %v266
  %268 = vmatmul.bf16.gmra.mxu0 %v215
  %v269 = vpop.f32.mrf.mxu0
  %v270 = vadd.f32 %v251, %v269
  %v271 = vpop.f32.mrf.mxu0
  %v272 = vadd.f32 %v253, %v271
  %273 = vdwg.mxu0
  %v274 = vadd.f32 %v24, %v265
  %v275 = vadd.f32 %v25, %v267
  %v276 = vadd.f32 %v26, %v270
  %v277 = vadd.f32 %v27, %v272
  %278 = vst.msk [vmem:[#allocation2] sm:$0xff] %vm210, %v274
  %279 = vst.msk [vmem:[#allocation2 + $0x8] sm:$0xff] %vm210, %v275
  %280 = vst.msk [vmem:[#allocation2 + $0x10] sm:$0xff] %vm210, %v276
  %281 = vst.msk [vmem:[#allocation2 + $0x18] sm:$0xff] %vm210, %v277
  // Predicated region
  $region18: #{closed_call.53} parent=0 // pred_check
    %p282 = pneg %p15
  $region19: #{closed_call.53} parent=0 // pred_check_branch
    %284 = sbr.rel (%p282) target = $region21
  $region20: #{closed_call.53} parent=0 // pred_region
    %v285 = vld [vmem:[#allocation2] sm:$0xff]
    %v286 = vld [vmem:[#allocation2 + $0x8] sm:$0xff]
    %v287 = vld [vmem:[#allocation2 + $0x10] sm:$0xff]
    %v288 = vld [vmem:[#allocation2 + $0x18] sm:$0xff]
    %v289 = vld [vmem:[%s2] sm:$0x1]
    %v291 = vperm.slane %v289, 0
    %v293 = vadd.f32 %v285, %v291
    %v294 = vadd.f32 %v286, %v291
    %v295 = vadd.f32 %v287, %v291
    %v296 = vadd.f32 %v288, %v291
    %vm297 = vcmp.ge.f32.partialorder %v293, 0.0
    %vm298 = vcmp.ge.f32.partialorder %v294, 0.0
    %vm299 = vcmp.ge.f32.partialorder %v295, 0.0
    %vm300 = vcmp.ge.f32.partialorder %v296, 0.0
    %v301 = vmul.f32 %v293, 0.1
    %v302 = vmul.f32 %v294, 0.1
    %v303 = vmul.f32 %v295, 0.1
    %v304 = vmul.f32 %v296, 0.1
    %v305 = vsel %vm297, %v293, %v301
    %v306 = vsel %vm298, %v294, %v302
    %v307 = vsel %vm299, %v295, %v303
    %v308 = vsel %vm300, %v296, %v304
    %v309 = vpack.c.bf16 %v305, %v305
    %v310 = vpack.c.bf16 %v306, %v306
    %v311 = vpack.c.bf16 %v307, %v307
    %v312 = vpack.c.bf16 %v308, %v308
    %vm313 = vcmask 257024
    %314 = vst.msk [vmem:[%s3] sm:$0xf] %vm313, %v309
    %315 = vst.msk [vmem:[%s3 + $0x4] sm:$0xf] %vm313, %v310
    %316 = vst.msk [vmem:[%s3 + $0x8] sm:$0xf] %vm313, %v311
    %317 = vst.msk [vmem:[%s3 + $0xc] sm:$0xf] %vm313, %v312
  $region21: #{closed_call.53} parent=0 // pred_fallthru
    _
  // Predicated region
  $region22: #{closed_call.53} parent=0 // pred_check
    _
  $region23: #{closed_call.53} parent=0 // pred_check_branch
    %319 = sbr.rel (0) target = $region25
  $region24: #{closed_call.53} parent=0 // pred_region
    _
  $region25: #{closed_call.53} parent=0 // pred_fallthru
    _
  // Predicated region
  $region26: #{closed_call.53} parent=0 // pred_check
    _
  $region27: #{closed_call.53} parent=0 // pred_check_branch
    %321 = sbr.rel (0) target = $region29
  $region28: #{closed_call.53} parent=0 // pred_region
    _
  $region29: #{closed_call.53} parent=0 // pred_fallthru
    _

// kernel: tile.24
$region0: #{tile.24}
  #allocation0 [shape = 's32[1]{0}', space=sflag, size = 0x4, scoped, tag = 'scoped memory for tile.24']
  %s0 = inlined_call_operand.vmem [shape: f32[32], index: 0, kind: input, shape index: {}]
  %s1 = inlined_call_operand.vmem [shape: f32[4,32], index: 1, kind: output, shape index: {}]
  // Predicated region
  $region2: #{tile.24} parent=0 // pred_check
    _
  $region3: #{tile.24} parent=0 // pred_check_branch
    %3 = sbr.rel (0) target = $region5
  $region4: #{tile.24} parent=0 // pred_region
    _
  $region5: #{tile.24} parent=0 // pred_fallthru
    _
  %v4 = vld [vmem:[%s0] ss:$0 sm:$0xff]
  %5 = vst [vmem:[%s1] sm:$0xf] %v4

// kernel: closed_call.55
$region0: #{closed_call.55}
  #allocation0 [shape = 'u32[]', space=smem, size = 0x4, offset = 0x4, fixed_abs, tag = 'smem constant byte address 0x4 - core index']
  #allocation1 [shape = 'u32[72,128]{1,0:T(1,128)}', space=vmem, size = 0x9000, scoped, tag = 'internal scratch']
  #allocation2 [shape = 'f32[32,128]{1,0:T(8,128)}', space=vmem, size = 0x4000, scoped, tag = 'scratch operand']
  %s0 = inlined_call_operand.vmem [shape: bf16[32,128], index: 0, kind: input, shape index: {}]
  %s1 = inlined_call_operand.vmem [shape: bf16[128,128], index: 1, kind: input, shape index: {}]
  %s2 = inlined_call_operand.vmem [shape: f32[1,128], index: 2, kind: input, shape index: {}]
  %s3 = inlined_call_operand.vmem [shape: bf16[32,128], index: 3, kind: output, shape index: {}]
  %s4 = sld [smem:[#allocation0]]
  $region30: #{closed_call.55} parent=0
    _
  %s6 = ssub.s32 1, %s4
  %s7 = scalar_select 0, %s6, %s4
  // Predicated region
  $region2: #{closed_call.55} parent=0 // pred_check
    _
  $region3: #{closed_call.55} parent=0 // pred_check_branch
    %9 = sbr.rel (0) target = $region5
  $region4: #{closed_call.55} parent=0 // pred_region
    _
  $region5: #{closed_call.55} parent=0 // pred_fallthru
    _
  // Predicated region
  $region6: #{closed_call.55} parent=0 // pred_check
    _
  $region7: #{closed_call.55} parent=0 // pred_check_branch
    %11 = sbr.rel (0) target = $region9
  $region8: #{closed_call.55} parent=0 // pred_region
    _
  $region9: #{closed_call.55} parent=0 // pred_fallthru
    _
  // Predicated region
  $region10: #{closed_call.55} parent=0 // pred_check
    _
  $region11: #{closed_call.55} parent=0 // pred_check_branch
    %13 = sbr.rel (0) target = $region13
  $region12: #{closed_call.55} parent=0 // pred_region
    _
  $region13: #{closed_call.55} parent=0 // pred_fallthru
    _
  %p14 = scmp.eq.s32.totalorder 0, 0
  // Predicated region
  $region14: #{closed_call.55} parent=0 // pred_check
    %p15 = pneg %p14
  $region15: #{closed_call.55} parent=0 // pred_check_branch
    %17 = sbr.rel (%p15) target = $region17
  $region16: #{closed_call.55} parent=0 // pred_region
    %18 = vst [vmem:[#allocation2] sm:$0xff] 0.0
    %19 = vst [vmem:[#allocation2 + $0x8] sm:$0xff] 0.0
    %20 = vst [vmem:[#allocation2 + $0x10] sm:$0xff] 0.0
    %21 = vst [vmem:[#allocation2 + $0x18] sm:$0xff] 0.0
  $region17: #{closed_call.55} parent=0 // pred_fallthru
    _
  %v22 = vld [vmem:[#allocation2] sm:$0xff]
  %v23 = vld [vmem:[#allocation2 + $0x8] sm:$0xff]
  %v24 = vld [vmem:[#allocation2 + $0x10] sm:$0xff]
  %v25 = vld [vmem:[#allocation2 + $0x18] sm:$0xff]
  %v26 = vld [vmem:[%s0] sm:$0xf]
  %v27 = vld [vmem:[%s0 + $0x4] sm:$0xf]
  %v28 = vld [vmem:[%s0 + $0x8] sm:$0xf]
  %v29 = vld [vmem:[%s0 + $0xc] sm:$0xf]
  %v30 = vld [vmem:[%s1] sm:$0xf]
  %v31 = vld [vmem:[%s1 + $0x4] sm:$0xf]
  %v32 = vld [vmem:[%s1 + $0x8] sm:$0xf]
  %v33 = vld [vmem:[%s1 + $0xc] sm:$0xf]
  %v34 = vld [vmem:[%s1 + $0x10] sm:$0xf]
  %v35 = vld [vmem:[%s1 + $0x14] sm:$0xf]
  %v36 = vld [vmem:[%s1 + $0x18] sm:$0xf]
  %v37 = vld [vmem:[%s1 + $0x1c] sm:$0xf]
  %v38 = vld [vmem:[%s1 + $0x20] sm:$0xf]
  %v39 = vld [vmem:[%s1 + $0x24] sm:$0xf]
  %v40 = vld [vmem:[%s1 + $0x28] sm:$0xf]
  %v41 = vld [vmem:[%s1 + $0x2c] sm:$0xf]
  %v42 = vld [vmem:[%s1 + $0x30] sm:$0xf]
  %v43 = vld [vmem:[%s1 + $0x34] sm:$0xf]
  %v44 = vld [vmem:[%s1 + $0x38] sm:$0xf]
  %v45 = vld [vmem:[%s1 + $0x3c] sm:$0xf]
  %v50 = vunpack.c.l.b16 %v26
  %v51 = vunpack.c.l.b16 %v27
  %v52 = vunpack.c.l.b16 %v28
  %v53 = vunpack.c.l.b16 %v29
  %v54 = vpack.c.b16 %v51, %v50
  %v55 = vpack.c.b16 %v53, %v52
  %v74 = vunpack.c.l.b16 %v30
  %v75 = vunpack.c.l.b16 %v31
  %v76 = vunpack.c.l.b16 %v32
  %v77 = vunpack.c.l.b16 %v33
  %v78 = vunpack.c.l.b16 %v34
  %v79 = vunpack.c.l.b16 %v35
  %v80 = vunpack.c.l.b16 %v36
  %v81 = vunpack.c.l.b16 %v37
  %v82 = vunpack.c.l.b16 %v38
  %v83 = vunpack.c.l.b16 %v39
  %v84 = vunpack.c.l.b16 %v40
  %v85 = vunpack.c.l.b16 %v41
  %v86 = vunpack.c.l.b16 %v42
  %v87 = vunpack.c.l.b16 %v43
  %v88 = vunpack.c.l.b16 %v44
  %v89 = vunpack.c.l.b16 %v45
  %v90 = vpack.c.b16 %v75, %v74
  %v91 = vpack.c.b16 %v77, %v76
  %v92 = vpack.c.b16 %v79, %v78
  %v93 = vpack.c.b16 %v81, %v80
  %v94 = vpack.c.b16 %v83, %v82
  %v95 = vpack.c.b16 %v85, %v84
  %v96 = vpack.c.b16 %v87, %v86
  %v97 = vpack.c.b16 %v89, %v88
  %106 = vmatpush.bf16.msra.mxu0 %v97
  %107 = vmatpush.bf16.msra.mxu0 %v96
  %108 = vmatpush.bf16.msra.mxu0 %v95
  %109 = vmatpush.bf16.msra.mxu0 %v94
  %110 = vmatpush.bf16.msra.mxu0 %v93
  %111 = vmatpush.bf16.msra.mxu0 %v92
  %112 = vmatpush.bf16.msra.mxu0 %v91
  %113 = vmatpush.bf16.msra.mxu0 %v90
  %114 = vmatmul.bf16.gmra.mxu0 %v54
  %v115 = vpop.f32.mrf.mxu0
  %v116 = vadd.f32 0.0, %v115
  %v117 = vpop.f32.mrf.mxu0
  %v118 = vadd.f32 0.0, %v117
  %119 = vmatmul.bf16.gmra.mxu0 %v55
  %v120 = vpop.f32.mrf.mxu0
  %v121 = vadd.f32 0.0, %v120
  %v122 = vpop.f32.mrf.mxu0
  %v123 = vadd.f32 0.0, %v122
  %124 = vdwg.mxu0
  %v125 = vadd.f32 %v22, %v116
  %v126 = vadd.f32 %v23, %v118
  %v127 = vadd.f32 %v24, %v121
  %v128 = vadd.f32 %v25, %v123
  %129 = vst [vmem:[#allocation2] sm:$0xff] %v125
  %130 = vst [vmem:[#allocation2 + $0x8] sm:$0xff] %v126
  %131 = vst [vmem:[#allocation2 + $0x10] sm:$0xff] %v127
  %132 = vst [vmem:[#allocation2 + $0x18] sm:$0xff] %v128
  // Predicated region
  $region18: #{closed_call.55} parent=0 // pred_check
    %p133 = pneg %p14
  $region19: #{closed_call.55} parent=0 // pred_check_branch
    %135 = sbr.rel (%p133) target = $region21
  $region20: #{closed_call.55} parent=0 // pred_region
    %v136 = vld [vmem:[#allocation2] sm:$0xff]
    %v137 = vld [vmem:[#allocation2 + $0x8] sm:$0xff]
    %v138 = vld [vmem:[#allocation2 + $0x10] sm:$0xff]
    %v139 = vld [vmem:[#allocation2 + $0x18] sm:$0xff]
    %v140 = vld [vmem:[%s2] sm:$0x1]
    %v142 = vperm.slane %v140, 0
    %v144 = vadd.f32 %v136, %v142
    %v145 = vadd.f32 %v137, %v142
    %v146 = vadd.f32 %v138, %v142
    %v147 = vadd.f32 %v139, %v142
    %vm148 = vcmp.ge.f32.partialorder %v144, 0.0
    %vm149 = vcmp.ge.f32.partialorder %v145, 0.0
    %vm150 = vcmp.ge.f32.partialorder %v146, 0.0
    %vm151 = vcmp.ge.f32.partialorder %v147, 0.0
    %v152 = vmul.f32 %v144, 0.1
    %v153 = vmul.f32 %v145, 0.1
    %v154 = vmul.f32 %v146, 0.1
    %v155 = vmul.f32 %v147, 0.1
    %v156 = vsel %vm148, %v144, %v152
    %v157 = vsel %vm149, %v145, %v153
    %v158 = vsel %vm150, %v146, %v154
    %v159 = vsel %vm151, %v147, %v155
    %v160 = vpack.c.bf16 %v156, %v156
    %v161 = vpack.c.bf16 %v157, %v157
    %v162 = vpack.c.bf16 %v158, %v158
    %v163 = vpack.c.bf16 %v159, %v159
    %164 = vst [vmem:[%s3] sm:$0xf] %v160
    %165 = vst [vmem:[%s3 + $0x4] sm:$0xf] %v161
    %166 = vst [vmem:[%s3 + $0x8] sm:$0xf] %v162
    %167 = vst [vmem:[%s3 + $0xc] sm:$0xf] %v163
  $region21: #{closed_call.55} parent=0 // pred_fallthru
    _
  // Predicated region
  $region22: #{closed_call.55} parent=0 // pred_check
    _
  $region23: #{closed_call.55} parent=0 // pred_check_branch
    %169 = sbr.rel (0) target = $region25
  $region24: #{closed_call.55} parent=0 // pred_region
    _
  $region25: #{closed_call.55} parent=0 // pred_fallthru
    _
  // Predicated region
  $region26: #{closed_call.55} parent=0 // pred_check
    _
  $region27: #{closed_call.55} parent=0 // pred_check_branch
    %171 = sbr.rel (0) target = $region29
  $region28: #{closed_call.55} parent=0 // pred_region
    _
  $region29: #{closed_call.55} parent=0 // pred_fallthru
    _

// kernel: closed_call.56
$region0: #{closed_call.56}
  #allocation0 [shape = 'u32[]', space=smem, size = 0x4, offset = 0x4, fixed_abs, tag = 'smem constant byte address 0x4 - core index']
  #allocation1 [shape = 'u32[72,128]{1,0:T(1,128)}', space=vmem, size = 0x9000, scoped, tag = 'internal scratch']
  #allocation2 [shape = 'f32[128,128]{1,0:T(8,128)}', space=vmem, size = 0x10000, scoped, tag = 'scratch operand']
  %s0 = inlined_call_operand.vmem [shape: bf16[128,128], index: 0, kind: input, shape index: {}]
  %s1 = inlined_call_operand.vmem [shape: bf16[128,128], index: 1, kind: input, shape index: {}]
  %s2 = inlined_call_operand.vmem [shape: f32[1,128], index: 2, kind: input, shape index: {}]
  %s3 = inlined_call_operand.vmem [shape: bf16[128,128], index: 3, kind: output, shape index: {}]
  %s4 = sld [smem:[#allocation0]]
  $region30: #{closed_call.56} parent=0
    _
  %s6 = ssub.s32 1, %s4
  %s7 = scalar_select 0, %s6, %s4
  // Predicated region
  $region2: #{closed_call.56} parent=0 // pred_check
    _
  $region3: #{closed_call.56} parent=0 // pred_check_branch
    %9 = sbr.rel (0) target = $region5
  $region4: #{closed_call.56} parent=0 // pred_region
    _
  $region5: #{closed_call.56} parent=0 // pred_fallthru
    _
  // Predicated region
  $region6: #{closed_call.56} parent=0 // pred_check
    _
  $region7: #{closed_call.56} parent=0 // pred_check_branch
    %11 = sbr.rel (0) target = $region9
  $region8: #{closed_call.56} parent=0 // pred_region
    _
  $region9: #{closed_call.56} parent=0 // pred_fallthru
    _
  // Predicated region
  $region10: #{closed_call.56} parent=0 // pred_check
    _
  $region11: #{closed_call.56} parent=0 // pred_check_branch
    %13 = sbr.rel (0) target = $region13
  $region12: #{closed_call.56} parent=0 // pred_region
    _
  $region13: #{closed_call.56} parent=0 // pred_fallthru
    _
  %p14 = scmp.eq.s32.totalorder 0, 0
  // Predicated region
  $region14: #{closed_call.56} parent=0 // pred_check
    %p15 = pneg %p14
  $region15: #{closed_call.56} parent=0 // pred_check_branch
    %17 = sbr.rel (%p15) target = $region17
  $region16: #{closed_call.56} parent=0 // pred_region
    %18 = vst [vmem:[#allocation2] sm:$0xff] 0.0
    %19 = vst [vmem:[#allocation2 + $0x8] sm:$0xff] 0.0
    %20 = vst [vmem:[#allocation2 + $0x10] sm:$0xff] 0.0
    %21 = vst [vmem:[#allocation2 + $0x18] sm:$0xff] 0.0
    %22 = vst [vmem:[#allocation2 + $0x20] sm:$0xff] 0.0
    %23 = vst [vmem:[#allocation2 + $0x28] sm:$0xff] 0.0
    %24 = vst [vmem:[#allocation2 + $0x30] sm:$0xff] 0.0
    %25 = vst [vmem:[#allocation2 + $0x38] sm:$0xff] 0.0
    %26 = vst [vmem:[#allocation2 + $0x40] sm:$0xff] 0.0
    %27 = vst [vmem:[#allocation2 + $0x48] sm:$0xff] 0.0
    %28 = vst [vmem:[#allocation2 + $0x50] sm:$0xff] 0.0
    %29 = vst [vmem:[#allocation2 + $0x58] sm:$0xff] 0.0
    %30 = vst [vmem:[#allocation2 + $0x60] sm:$0xff] 0.0
    %31 = vst [vmem:[#allocation2 + $0x68] sm:$0xff] 0.0
    %32 = vst [vmem:[#allocation2 + $0x70] sm:$0xff] 0.0
    %33 = vst [vmem:[#allocation2 + $0x78] sm:$0xff] 0.0
  $region17: #{closed_call.56} parent=0 // pred_fallthru
    _
  %v34 = vld [vmem:[#allocation2] sm:$0xff]
  %v35 = vld [vmem:[#allocation2 + $0x8] sm:$0xff]
  %v36 = vld [vmem:[#allocation2 + $0x10] sm:$0xff]
  %v37 = vld [vmem:[#allocation2 + $0x18] sm:$0xff]
  %v38 = vld [vmem:[#allocation2 + $0x20] sm:$0xff]
  %v39 = vld [vmem:[#allocation2 + $0x28] sm:$0xff]
  %v40 = vld [vmem:[#allocation2 + $0x30] sm:$0xff]
  %v41 = vld [vmem:[#allocation2 + $0x38] sm:$0xff]
  %v42 = vld [vmem:[#allocation2 + $0x40] sm:$0xff]
  %v43 = vld [vmem:[#allocation2 + $0x48] sm:$0xff]
  %v44 = vld [vmem:[#allocation2 + $0x50] sm:$0xff]
  %v45 = vld [vmem:[#allocation2 + $0x58] sm:$0xff]
  %v46 = vld [vmem:[#allocation2 + $0x60] sm:$0xff]
  %v47 = vld [vmem:[#allocation2 + $0x68] sm:$0xff]
  %v48 = vld [vmem:[#allocation2 + $0x70] sm:$0xff]
  %v49 = vld [vmem:[#allocation2 + $0x78] sm:$0xff]
  %v50 = vld [vmem:[%s0] sm:$0xf]
  %v51 = vld [vmem:[%s0 + $0x4] sm:$0xf]
  %v52 = vld [vmem:[%s0 + $0x8] sm:$0xf]
  %v53 = vld [vmem:[%s0 + $0xc] sm:$0xf]
  %v54 = vld [vmem:[%s0 + $0x10] sm:$0xf]
  %v55 = vld [vmem:[%s0 + $0x14] sm:$0xf]
  %v56 = vld [vmem:[%s0 + $0x18] sm:$0xf]
  %v57 = vld [vmem:[%s0 + $0x1c] sm:$0xf]
  %v58 = vld [vmem:[%s0 + $0x20] sm:$0xf]
  %v59 = vld [vmem:[%s0 + $0x24] sm:$0xf]
  %v60 = vld [vmem:[%s0 + $0x28] sm:$0xf]
  %v61 = vld [vmem:[%s0 + $0x2c] sm:$0xf]
  %v62 = vld [vmem:[%s0 + $0x30] sm:$0xf]
  %v63 = vld [vmem:[%s0 + $0x34] sm:$0xf]
  %v64 = vld [vmem:[%s0 + $0x38] sm:$0xf]
  %v65 = vld [vmem:[%s0 + $0x3c] sm:$0xf]
  %v66 = vld [vmem:[%s1] sm:$0xf]
  %v67 = vld [vmem:[%s1 + $0x4] sm:$0xf]
  %v68 = vld [vmem:[%s1 + $0x8] sm:$0xf]
  %v69 = vld [vmem:[%s1 + $0xc] sm:$0xf]
  %v70 = vld [vmem:[%s1 + $0x10] sm:$0xf]
  %v71 = vld [vmem:[%s1 + $0x14] sm:$0xf]
  %v72 = vld [vmem:[%s1 + $0x18] sm:$0xf]
  %v73 = vld [vmem:[%s1 + $0x1c] sm:$0xf]
  %v74 = vld [vmem:[%s1 + $0x20] sm:$0xf]
  %v75 = vld [vmem:[%s1 + $0x24] sm:$0xf]
  %v76 = vld [vmem:[%s1 + $0x28] sm:$0xf]
  %v77 = vld [vmem:[%s1 + $0x2c] sm:$0xf]
  %v78 = vld [vmem:[%s1 + $0x30] sm:$0xf]
  %v79 = vld [vmem:[%s1 + $0x34] sm:$0xf]
  %v80 = vld [vmem:[%s1 + $0x38] sm:$0xf]
  %v81 = vld [vmem:[%s1 + $0x3c] sm:$0xf]
  %v98 = vunpack.c.l.b16 %v50
  %v99 = vunpack.c.l.b16 %v51
  %v100 = vunpack.c.l.b16 %v52
  %v101 = vunpack.c.l.b16 %v53
  %v102 = vunpack.c.l.b16 %v54
  %v103 = vunpack.c.l.b16 %v55
  %v104 = vunpack.c.l.b16 %v56
  %v105 = vunpack.c.l.b16 %v57
  %v106 = vunpack.c.l.b16 %v58
  %v107 = vunpack.c.l.b16 %v59
  %v108 = vunpack.c.l.b16 %v60
  %v109 = vunpack.c.l.b16 %v61
  %v110 = vunpack.c.l.b16 %v62
  %v111 = vunpack.c.l.b16 %v63
  %v112 = vunpack.c.l.b16 %v64
  %v113 = vunpack.c.l.b16 %v65
  %v114 = vpack.c.b16 %v99, %v98
  %v115 = vpack.c.b16 %v101, %v100
  %v116 = vpack.c.b16 %v103, %v102
  %v117 = vpack.c.b16 %v105, %v104
  %v118 = vpack.c.b16 %v107, %v106
  %v119 = vpack.c.b16 %v109, %v108
  %v120 = vpack.c.b16 %v111, %v110
  %v121 = vpack.c.b16 %v113, %v112
  %v146 = vunpack.c.l.b16 %v66
  %v147 = vunpack.c.l.b16 %v67
  %v148 = vunpack.c.l.b16 %v68
  %v149 = vunpack.c.l.b16 %v69
  %v150 = vunpack.c.l.b16 %v70
  %v151 = vunpack.c.l.b16 %v71
  %v152 = vunpack.c.l.b16 %v72
  %v153 = vunpack.c.l.b16 %v73
  %v154 = vunpack.c.l.b16 %v74
  %v155 = vunpack.c.l.b16 %v75
  %v156 = vunpack.c.l.b16 %v76
  %v157 = vunpack.c.l.b16 %v77
  %v158 = vunpack.c.l.b16 %v78
  %v159 = vunpack.c.l.b16 %v79
  %v160 = vunpack.c.l.b16 %v80
  %v161 = vunpack.c.l.b16 %v81
  %v162 = vpack.c.b16 %v147, %v146
  %v163 = vpack.c.b16 %v149, %v148
  %v164 = vpack.c.b16 %v151, %v150
  %v165 = vpack.c.b16 %v153, %v152
  %v166 = vpack.c.b16 %v155, %v154
  %v167 = vpack.c.b16 %v157, %v156
  %v168 = vpack.c.b16 %v159, %v158
  %v169 = vpack.c.b16 %v161, %v160
  %178 = vmatpush.bf16.msra.mxu0 %v169
  %179 = vmatpush.bf16.msra.mxu0 %v168
  %180 = vmatpush.bf16.msra.mxu0 %v167
  %181 = vmatpush.bf16.msra.mxu0 %v166
  %182 = vmatpush.bf16.msra.mxu0 %v165
  %183 = vmatpush.bf16.msra.mxu0 %v164
  %184 = vmatpush.bf16.msra.mxu0 %v163
  %185 = vmatpush.bf16.msra.mxu0 %v162
  %186 = vmatmul.bf16.gmra.mxu0 %v114
  %v187 = vpop.f32.mrf.mxu0
  %v188 = vadd.f32 0.0, %v187
  %v189 = vpop.f32.mrf.mxu0
  %v190 = vadd.f32 0.0, %v189
  %191 = vmatmul.bf16.gmra.mxu0 %v115
  %v192 = vpop.f32.mrf.mxu0
  %v193 = vadd.f32 0.0, %v192
  %v194 = vpop.f32.mrf.mxu0
  %v195 = vadd.f32 0.0, %v194
  %196 = vmatmul.bf16.gmra.mxu0 %v116
  %v197 = vpop.f32.mrf.mxu0
  %v198 = vadd.f32 0.0, %v197
  %v199 = vpop.f32.mrf.mxu0
  %v200 = vadd.f32 0.0, %v199
  %201 = vmatmul.bf16.gmra.mxu0 %v117
  %v202 = vpop.f32.mrf.mxu0
  %v203 = vadd.f32 0.0, %v202
  %v204 = vpop.f32.mrf.mxu0
  %v205 = vadd.f32 0.0, %v204
  %206 = vmatmul.bf16.gmra.mxu0 %v118
  %v207 = vpop.f32.mrf.mxu0
  %v208 = vadd.f32 0.0, %v207
  %v209 = vpop.f32.mrf.mxu0
  %v210 = vadd.f32 0.0, %v209
  %211 = vmatmul.bf16.gmra.mxu0 %v119
  %v212 = vpop.f32.mrf.mxu0
  %v213 = vadd.f32 0.0, %v212
  %v214 = vpop.f32.mrf.mxu0
  %v215 = vadd.f32 0.0, %v214
  %216 = vmatmul.bf16.gmra.mxu0 %v120
  %v217 = vpop.f32.mrf.mxu0
  %v218 = vadd.f32 0.0, %v217
  %v219 = vpop.f32.mrf.mxu0
  %v220 = vadd.f32 0.0, %v219
  %221 = vmatmul.bf16.gmra.mxu0 %v121
  %v222 = vpop.f32.mrf.mxu0
  %v223 = vadd.f32 0.0, %v222
  %v224 = vpop.f32.mrf.mxu0
  %v225 = vadd.f32 0.0, %v224
  %226 = vdwg.mxu0
  %v227 = vadd.f32 %v34, %v188
  %v228 = vadd.f32 %v35, %v190
  %v229 = vadd.f32 %v36, %v193
  %v230 = vadd.f32 %v37, %v195
  %v231 = vadd.f32 %v38, %v198
  %v232 = vadd.f32 %v39, %v200
  %v233 = vadd.f32 %v40, %v203
  %v234 = vadd.f32 %v41, %v205
  %v235 = vadd.f32 %v42, %v208
  %v236 = vadd.f32 %v43, %v210
  %v237 = vadd.f32 %v44, %v213
  %v238 = vadd.f32 %v45, %v215
  %v239 = vadd.f32 %v46, %v218
  %v240 = vadd.f32 %v47, %v220
  %v241 = vadd.f32 %v48, %v223
  %v242 = vadd.f32 %v49, %v225
  %243 = vst [vmem:[#allocation2] sm:$0xff] %v227
  %244 = vst [vmem:[#allocation2 + $0x8] sm:$0xff] %v228
  %245 = vst [vmem:[#allocation2 + $0x10] sm:$0xff] %v229
  %246 = vst [vmem:[#allocation2 + $0x18] sm:$0xff] %v230
  %247 = vst [vmem:[#allocation2 + $0x20] sm:$0xff] %v231
  %248 = vst [vmem:[#allocation2 + $0x28] sm:$0xff] %v232
  %249 = vst [vmem:[#allocation2 + $0x30] sm:$0xff] %v233
  %250 = vst [vmem:[#allocation2 + $0x38] sm:$0xff] %v234
  %251 = vst [vmem:[#allocation2 + $0x40] sm:$0xff] %v235
  %252 = vst [vmem:[#allocation2 + $0x48] sm:$0xff] %v236
  %253 = vst [vmem:[#allocation2 + $0x50] sm:$0xff] %v237
  %254 = vst [vmem:[#allocation2 + $0x58] sm:$0xff] %v238
  %255 = vst [vmem:[#allocation2 + $0x60] sm:$0xff] %v239
  %256 = vst [vmem:[#allocation2 + $0x68] sm:$0xff] %v240
  %257 = vst [vmem:[#allocation2 + $0x70] sm:$0xff] %v241
  %258 = vst [vmem:[#allocation2 + $0x78] sm:$0xff] %v242
  // Predicated region
  $region18: #{closed_call.56} parent=0 // pred_check
    %p259 = pneg %p14
  $region19: #{closed_call.56} parent=0 // pred_check_branch
    %261 = sbr.rel (%p259) target = $region21
  $region20: #{closed_call.56} parent=0 // pred_region
    %v262 = vld [vmem:[#allocation2] sm:$0xff]
    %v263 = vld [vmem:[#allocation2 + $0x8] sm:$0xff]
    %v264 = vld [vmem:[#allocation2 + $0x10] sm:$0xff]
    %v265 = vld [vmem:[#allocation2 + $0x18] sm:$0xff]
    %v266 = vld [vmem:[#allocation2 + $0x20] sm:$0xff]
    %v267 = vld [vmem:[#allocation2 + $0x28] sm:$0xff]
    %v268 = vld [vmem:[#allocation2 + $0x30] sm:$0xff]
    %v269 = vld [vmem:[#allocation2 + $0x38] sm:$0xff]
    %v270 = vld [vmem:[#allocation2 + $0x40] sm:$0xff]
    %v271 = vld [vmem:[#allocation2 + $0x48] sm:$0xff]
    %v272 = vld [vmem:[#allocation2 + $0x50] sm:$0xff]
    %v273 = vld [vmem:[#allocation2 + $0x58] sm:$0xff]
    %v274 = vld [vmem:[#allocation2 + $0x60] sm:$0xff]
    %v275 = vld [vmem:[#allocation2 + $0x68] sm:$0xff]
    %v276 = vld [vmem:[#allocation2 + $0x70] sm:$0xff]
    %v277 = vld [vmem:[#allocation2 + $0x78] sm:$0xff]
    %v278 = vld [vmem:[%s2] sm:$0x1]
    %v280 = vperm.slane %v278, 0
    %v282 = vadd.f32 %v262, %v280
    %v283 = vadd.f32 %v263, %v280
    %v284 = vadd.f32 %v264, %v280
    %v285 = vadd.f32 %v265, %v280
    %v286 = vadd.f32 %v266, %v280
    %v287 = vadd.f32 %v267, %v280
    %v288 = vadd.f32 %v268, %v280
    %v289 = vadd.f32 %v269, %v280
    %v290 = vadd.f32 %v270, %v280
    %v291 = vadd.f32 %v271, %v280
    %v292 = vadd.f32 %v272, %v280
    %v293 = vadd.f32 %v273, %v280
    %v294 = vadd.f32 %v274, %v280
    %v295 = vadd.f32 %v275, %v280
    %v296 = vadd.f32 %v276, %v280
    %v297 = vadd.f32 %v277, %v280
    %vm298 = vcmp.ge.f32.partialorder %v282, 0.0
    %vm299 = vcmp.ge.f32.partialorder %v283, 0.0
    %vm300 = vcmp.ge.f32.partialorder %v284, 0.0
    %vm301 = vcmp.ge.f32.partialorder %v285, 0.0
    %vm302 = vcmp.ge.f32.partialorder %v286, 0.0
    %vm303 = vcmp.ge.f32.partialorder %v287, 0.0
    %vm304 = vcmp.ge.f32.partialorder %v288, 0.0
    %vm305 = vcmp.ge.f32.partialorder %v289, 0.0
    %vm306 = vcmp.ge.f32.partialorder %v290, 0.0
    %vm307 = vcmp.ge.f32.partialorder %v291, 0.0
    %vm308 = vcmp.ge.f32.partialorder %v292, 0.0
    %vm309 = vcmp.ge.f32.partialorder %v293, 0.0
    %vm310 = vcmp.ge.f32.partialorder %v294, 0.0
    %vm311 = vcmp.ge.f32.partialorder %v295, 0.0
    %vm312 = vcmp.ge.f32.partialorder %v296, 0.0
    %vm313 = vcmp.ge.f32.partialorder %v297, 0.0
    %v314 = vmul.f32 %v282, 0.1
    %v315 = vmul.f32 %v283, 0.1
    %v316 = vmul.f32 %v284, 0.1
    %v317 = vmul.f32 %v285, 0.1
    %v318 = vmul.f32 %v286, 0.1
    %v319 = vmul.f32 %v287, 0.1
    %v320 = vmul.f32 %v288, 0.1
    %v321 = vmul.f32 %v289, 0.1
    %v322 = vmul.f32 %v290, 0.1
    %v323 = vmul.f32 %v291, 0.1
    %v324 = vmul.f32 %v292, 0.1
    %v325 = vmul.f32 %v293, 0.1
    %v326 = vmul.f32 %v294, 0.1
    %v327 = vmul.f32 %v295, 0.1
    %v328 = vmul.f32 %v296, 0.1
    %v329 = vmul.f32 %v297, 0.1
    %v330 = vsel %vm298, %v282, %v314
    %v331 = vsel %vm299, %v283, %v315
    %v332 = vsel %vm300, %v284, %v316
    %v333 = vsel %vm301, %v285, %v317
    %v334 = vsel %vm302, %v286, %v318
    %v335 = vsel %vm303, %v287, %v319
    %v336 = vsel %vm304, %v288, %v320
    %v337 = vsel %vm305, %v289, %v321
    %v338 = vsel %vm306, %v290, %v322
    %v339 = vsel %vm307, %v291, %v323
    %v340 = vsel %vm308, %v292, %v324
    %v341 = vsel %vm309, %v293, %v325
    %v342 = vsel %vm310, %v294, %v326
    %v343 = vsel %vm311, %v295, %v327
    %v344 = vsel %vm312, %v296, %v328
    %v345 = vsel %vm313, %v297, %v329
    %v346 = vpack.c.bf16 %v330, %v330
    %v347 = vpack.c.bf16 %v331, %v331
    %v348 = vpack.c.bf16 %v332, %v332
    %v349 = vpack.c.bf16 %v333, %v333
    %v350 = vpack.c.bf16 %v334, %v334
    %v351 = vpack.c.bf16 %v335, %v335
    %v352 = vpack.c.bf16 %v336, %v336
    %v353 = vpack.c.bf16 %v337, %v337
    %v354 = vpack.c.bf16 %v338, %v338
    %v355 = vpack.c.bf16 %v339, %v339
    %v356 = vpack.c.bf16 %v340, %v340
    %v357 = vpack.c.bf16 %v341, %v341
    %v358 = vpack.c.bf16 %v342, %v342
    %v359 = vpack.c.bf16 %v343, %v343
    %v360 = vpack.c.bf16 %v344, %v344
    %v361 = vpack.c.bf16 %v345, %v345
    %362 = vst [vmem:[%s3] sm:$0xf] %v346
    %363 = vst [vmem:[%s3 + $0x4] sm:$0xf] %v347
    %364 = vst [vmem:[%s3 + $0x8] sm:$0xf] %v348
    %365 = vst [vmem:[%s3 + $0xc] sm:$0xf] %v349
    %366 = vst [vmem:[%s3 + $0x10] sm:$0xf] %v350
    %367 = vst [vmem:[%s3 + $0x14] sm:$0xf] %v351
    %368 = vst [vmem:[%s3 + $0x18] sm:$0xf] %v352
    %369 = vst [vmem:[%s3 + $0x1c] sm:$0xf] %v353
    %370 = vst [vmem:[%s3 + $0x20] sm:$0xf] %v354
    %371 = vst [vmem:[%s3 + $0x24] sm:$0xf] %v355
    %372 = vst [vmem:[%s3 + $0x28] sm:$0xf] %v356
    %373 = vst [vmem:[%s3 + $0x2c] sm:$0xf] %v357
    %374 = vst [vmem:[%s3 + $0x30] sm:$0xf] %v358
    %375 = vst [vmem:[%s3 + $0x34] sm:$0xf] %v359
    %376 = vst [vmem:[%s3 + $0x38] sm:$0xf] %v360
    %377 = vst [vmem:[%s3 + $0x3c] sm:$0xf] %v361
  $region21: #{closed_call.56} parent=0 // pred_fallthru
    _
  // Predicated region
  $region22: #{closed_call.56} parent=0 // pred_check
    _
  $region23: #{closed_call.56} parent=0 // pred_check_branch
    %379 = sbr.rel (0) target = $region25
  $region24: #{closed_call.56} parent=0 // pred_region
    _
  $region25: #{closed_call.56} parent=0 // pred_fallthru
    _
  // Predicated region
  $region26: #{closed_call.56} parent=0 // pred_check
    _
  $region27: #{closed_call.56} parent=0 // pred_check_branch
    %381 = sbr.rel (0) target = $region29
  $region28: #{closed_call.56} parent=0 // pred_region
    _
  $region29: #{closed_call.56} parent=0 // pred_fallthru
    _

// kernel: closed_call.54
$region0: #{closed_call.54}
  #allocation0 [shape = 'u32[]', space=smem, size = 0x4, offset = 0x4, fixed_abs, tag = 'smem constant byte address 0x4 - core index']
  #allocation1 [shape = 'u32[72,128]{1,0:T(1,128)}', space=vmem, size = 0x9000, scoped, tag = 'internal scratch']
  %s0 = inlined_call_operand.vmem [shape: bf16[32,576], index: 0, kind: input, shape index: {}]
  %s1 = inlined_call_operand.vmem [shape: f32[32,32], index: 1, kind: input, shape index: {}]
  %s2 = inlined_call_operand.vmem [shape: f32[32,32], index: 2, kind: input, shape index: {}]
  %s3 = inlined_call_operand.vmem [shape: bf16[576,128], index: 3, kind: input, shape index: {}]
  %s4 = inlined_call_operand.vmem [shape: f32[1,128], index: 4, kind: input, shape index: {}]
  %s5 = inlined_call_operand.vmem [shape: bf16[32,64], index: 5, kind: input, shape index: {}]
  %s6 = inlined_call_operand.vmem [shape: f32[1,64], index: 6, kind: input, shape index: {}]
  %s7 = inlined_call_operand.vmem [shape: bf16[32,48], index: 7, kind: input, shape index: {}]
  %s8 = inlined_call_operand.vmem [shape: f32[1,48], index: 8, kind: input, shape index: {}]
  %s9 = inlined_call_operand.vmem [shape: bf16[32,64], index: 9, kind: input, shape index: {}]
  %s10 = inlined_call_operand.vmem [shape: bf16[32,64], index: 10, kind: input, shape index: {}]
  %s11 = inlined_call_operand.vmem [shape: f32[1,64], index: 11, kind: input, shape index: {}]
  %s12 = inlined_call_operand.vmem [shape: bf16[64,96], index: 12, kind: input, shape index: {}]
  %s13 = inlined_call_operand.vmem [shape: bf16[32,96], index: 13, kind: input, shape index: {}]
  %s14 = inlined_call_operand.vmem [shape: f32[1,96], index: 14, kind: input, shape index: {}]
  %s15 = inlined_call_operand.vmem [shape: f32[16,32], index: 15, kind: input, shape index: {}]
  %s16 = inlined_call_operand.vmem [shape: f32[16,32], index: 16, kind: input, shape index: {}]
  %s17 = inlined_call_operand.vmem [shape: f32[32,32], index: 17, kind: output, shape index: {0}]
  %s18 = inlined_call_operand.vmem [shape: f32[32,32], index: 18, kind: output, shape index: {1}]
  %s19 = inlined_call_operand.vmem [shape: f32[32,32], index: 19, kind: output, shape index: {2}]
  %s20 = inlined_call_operand.vmem [shape: bf16[2,16,32], index: 20, kind: output, shape index: {3}]
  %21 = xla_tuple %s17, %s18, %s19, %s20
  %s22 = sld [smem:[#allocation0]]
  $region102: #{closed_call.54} parent=0
    _
  %s24 = ssub.s32 1, %s22
  %s25 = scalar_select 0, %s24, %s22
  // Predicated region
  $region2: #{closed_call.54} parent=0 // pred_check
    _
  $region3: #{closed_call.54} parent=0 // pred_check_branch
    %27 = sbr.rel (0) target = $region5
  $region4: #{closed_call.54} parent=0 // pred_region
    _
  $region5: #{closed_call.54} parent=0 // pred_fallthru
    _
  // Predicated region
  $region6: #{closed_call.54} parent=0 // pred_check
    _
  $region7: #{closed_call.54} parent=0 // pred_check_branch
    %29 = sbr.rel (0) target = $region9
  $region8: #{closed_call.54} parent=0 // pred_region
    _
  $region9: #{closed_call.54} parent=0 // pred_fallthru
    _
  // Predicated region
  $region10: #{closed_call.54} parent=0 // pred_check
    _
  $region11: #{closed_call.54} parent=0 // pred_check_branch
    %31 = sbr.rel (0) target = $region13
  $region12: #{closed_call.54} parent=0 // pred_region
    _
  $region13: #{closed_call.54} parent=0 // pred_fallthru
    _
  // Predicated region
  $region14: #{closed_call.54} parent=0 // pred_check
    _
  $region15: #{closed_call.54} parent=0 // pred_check_branch
    %33 = sbr.rel (0) target = $region17
  $region16: #{closed_call.54} parent=0 // pred_region
    _
  $region17: #{closed_call.54} parent=0 // pred_fallthru
    _
  // Predicated region
  $region18: #{closed_call.54} parent=0 // pred_check
    _
  $region19: #{closed_call.54} parent=0 // pred_check_branch
    %35 = sbr.rel (0) target = $region21
  $region20: #{closed_call.54} parent=0 // pred_region
    _
  $region21: #{closed_call.54} parent=0 // pred_fallthru
    _
  // Predicated region
  $region22: #{closed_call.54} parent=0 // pred_check
    _
  $region23: #{closed_call.54} parent=0 // pred_check_branch
    %37 = sbr.rel (0) target = $region25
  $region24: #{closed_call.54} parent=0 // pred_region
    _
  $region25: #{closed_call.54} parent=0 // pred_fallthru
    _
  // Predicated region
  $region26: #{closed_call.54} parent=0 // pred_check
    _
  $region27: #{closed_call.54} parent=0 // pred_check_branch
    %39 = sbr.rel (0) target = $region29
  $region28: #{closed_call.54} parent=0 // pred_region
    _
  $region29: #{closed_call.54} parent=0 // pred_fallthru
    _
  // Predicated region
  $region30: #{closed_call.54} parent=0 // pred_check
    _
  $region31: #{closed_call.54} parent=0 // pred_check_branch
    %41 = sbr.rel (0) target = $region33
  $region32: #{closed_call.54} parent=0 // pred_region
    _
  $region33: #{closed_call.54} parent=0 // pred_fallthru
    _
  // Predicated region
  $region34: #{closed_call.54} parent=0 // pred_check
    _
  $region35: #{closed_call.54} parent=0 // pred_check_branch
    %43 = sbr.rel (0) target = $region37
  $region36: #{closed_call.54} parent=0 // pred_region
    _
  $region37: #{closed_call.54} parent=0 // pred_fallthru
    _
  // Predicated region
  $region38: #{closed_call.54} parent=0 // pred_check
    _
  $region39: #{closed_call.54} parent=0 // pred_check_branch
    %45 = sbr.rel (0) target = $region41
  $region40: #{closed_call.54} parent=0 // pred_region
    _
  $region41: #{closed_call.54} parent=0 // pred_fallthru
    _
  // Predicated region
  $region42: #{closed_call.54} parent=0 // pred_check
    _
  $region43: #{closed_call.54} parent=0 // pred_check_branch
    %47 = sbr.rel (0) target = $region45
  $region44: #{closed_call.54} parent=0 // pred_region
    _
  $region45: #{closed_call.54} parent=0 // pred_fallthru
    _
  // Predicated region
  $region46: #{closed_call.54} parent=0 // pred_check
    _
  $region47: #{closed_call.54} parent=0 // pred_check_branch
    %49 = sbr.rel (0) target = $region49
  $region48: #{closed_call.54} parent=0 // pred_region
    _
  $region49: #{closed_call.54} parent=0 // pred_fallthru
    _
  // Predicated region
  $region50: #{closed_call.54} parent=0 // pred_check
    _
  $region51: #{closed_call.54} parent=0 // pred_check_branch
    %51 = sbr.rel (0) target = $region53
  $region52: #{closed_call.54} parent=0 // pred_region
    _
  $region53: #{closed_call.54} parent=0 // pred_fallthru
    _
  // Predicated region
  $region54: #{closed_call.54} parent=0 // pred_check
    _
  $region55: #{closed_call.54} parent=0 // pred_check_branch
    %53 = sbr.rel (0) target = $region57
  $region56: #{closed_call.54} parent=0 // pred_region
    _
  $region57: #{closed_call.54} parent=0 // pred_fallthru
    _
  // Predicated region
  $region58: #{closed_call.54} parent=0 // pred_check
    _
  $region59: #{closed_call.54} parent=0 // pred_check_branch
    %55 = sbr.rel (0) target = $region61
  $region60: #{closed_call.54} parent=0 // pred_region
    _
  $region61: #{closed_call.54} parent=0 // pred_fallthru
    _
  // Predicated region
  $region62: #{closed_call.54} parent=0 // pred_check
    _
  $region63: #{closed_call.54} parent=0 // pred_check_branch
    %57 = sbr.rel (0) target = $region65
  $region64: #{closed_call.54} parent=0 // pred_region
    _
  $region65: #{closed_call.54} parent=0 // pred_fallthru
    _
  // Predicated region
  $region66: #{closed_call.54} parent=0 // pred_check
    _
  $region67: #{closed_call.54} parent=0 // pred_check_branch
    %59 = sbr.rel (0) target = $region69
  $region68: #{closed_call.54} parent=0 // pred_region
    _
  $region69: #{closed_call.54} parent=0 // pred_fallthru
    _
  %v61 = vld [vmem:[%s0] sm:$0xff]
  %v62 = vld [vmem:[%s0 + $0x8] sm:$0xff]
  %v63 = vld [vmem:[%s0 + $0x10] sm:$0xf]
  %v64 = vld [vmem:[%s0 + $0x14] sm:$0xff]
  %v65 = vld [vmem:[%s0 + $0x1c] sm:$0xff]
  %v66 = vld [vmem:[%s0 + $0x24] sm:$0xf]
  %v67 = vld [vmem:[%s0 + $0x28] sm:$0xff]
  %v68 = vld [vmem:[%s0 + $0x30] sm:$0xff]
  %v69 = vld [vmem:[%s0 + $0x38] sm:$0xf]
  %v70 = vld [vmem:[%s0 + $0x3c] sm:$0xff]
  %v71 = vld [vmem:[%s0 + $0x44] sm:$0xff]
  %v72 = vld [vmem:[%s0 + $0x4c] sm:$0xf]
  %v73 = vld [vmem:[%s3] sm:$0xf]
  %v74 = vld [vmem:[%s3 + $0x4] sm:$0xf]
  %v75 = vld [vmem:[%s3 + $0x8] sm:$0xf]
  %v76 = vld [vmem:[%s3 + $0xc] sm:$0xf]
  %v77 = vld [vmem:[%s3 + $0x10] sm:$0xf]
  %v78 = vld [vmem:[%s3 + $0x14] sm:$0xf]
  %v79 = vld [vmem:[%s3 + $0x18] sm:$0xf]
  %v80 = vld [vmem:[%s3 + $0x1c] sm:$0xf]
  %v81 = vld [vmem:[%s3 + $0x20] sm:$0xf]
  %v82 = vld [vmem:[%s3 + $0x24] sm:$0xf]
  %v83 = vld [vmem:[%s3 + $0x28] sm:$0xf]
  %v84 = vld [vmem:[%s3 + $0x2c] sm:$0xf]
  %v85 = vld [vmem:[%s3 + $0x30] sm:$0xf]
  %v86 = vld [vmem:[%s3 + $0x34] sm:$0xf]
  %v87 = vld [vmem:[%s3 + $0x38] sm:$0xf]
  %v88 = vld [vmem:[%s3 + $0x3c] sm:$0xf]
  %v89 = vld [vmem:[%s3 + $0x40] sm:$0xf]
  %v90 = vld [vmem:[%s3 + $0x44] sm:$0xf]
  %v91 = vld [vmem:[%s3 + $0x48] sm:$0xf]
  %v92 = vld [vmem:[%s3 + $0x4c] sm:$0xf]
  %v93 = vld [vmem:[%s3 + $0x50] sm:$0xf]
  %v94 = vld [vmem:[%s3 + $0x54] sm:$0xf]
  %v95 = vld [vmem:[%s3 + $0x58] sm:$0xf]
  %v96 = vld [vmem:[%s3 + $0x5c] sm:$0xf]
  %v97 = vld [vmem:[%s3 + $0x60] sm:$0xf]
  %v98 = vld [vmem:[%s3 + $0x64] sm:$0xf]
  %v99 = vld [vmem:[%s3 + $0x68] sm:$0xf]
  %v100 = vld [vmem:[%s3 + $0x6c] sm:$0xf]
  %v101 = vld [vmem:[%s3 + $0x70] sm:$0xf]
  %v102 = vld [vmem:[%s3 + $0x74] sm:$0xf]
  %v103 = vld [vmem:[%s3 + $0x78] sm:$0xf]
  %v104 = vld [vmem:[%s3 + $0x7c] sm:$0xf]
  %v105 = vld [vmem:[%s3 + $0x80] sm:$0xf]
  %v106 = vld [vmem:[%s3 + $0x84] sm:$0xf]
  %v107 = vld [vmem:[%s3 + $0x88] sm:$0xf]
  %v108 = vld [vmem:[%s3 + $0x8c] sm:$0xf]
  %v109 = vld [vmem:[%s3 + $0x90] sm:$0xf]
  %v110 = vld [vmem:[%s3 + $0x94] sm:$0xf]
  %v111 = vld [vmem:[%s3 + $0x98] sm:$0xf]
  %v112 = vld [vmem:[%s3 + $0x9c] sm:$0xf]
  %v113 = vld [vmem:[%s3 + $0xa0] sm:$0xf]
  %v114 = vld [vmem:[%s3 + $0xa4] sm:$0xf]
  %v115 = vld [vmem:[%s3 + $0xa8] sm:$0xf]
  %v116 = vld [vmem:[%s3 + $0xac] sm:$0xf]
  %v117 = vld [vmem:[%s3 + $0xb0] sm:$0xf]
  %v118 = vld [vmem:[%s3 + $0xb4] sm:$0xf]
  %v119 = vld [vmem:[%s3 + $0xb8] sm:$0xf]
  %v120 = vld [vmem:[%s3 + $0xbc] sm:$0xf]
  %v121 = vld [vmem:[%s3 + $0xc0] sm:$0xf]
  %v122 = vld [vmem:[%s3 + $0xc4] sm:$0xf]
  %v123 = vld [vmem:[%s3 + $0xc8] sm:$0xf]
  %v124 = vld [vmem:[%s3 + $0xcc] sm:$0xf]
  %v125 = vld [vmem:[%s3 + $0xd0] sm:$0xf]
  %v126 = vld [vmem:[%s3 + $0xd4] sm:$0xf]
  %v127 = vld [vmem:[%s3 + $0xd8] sm:$0xf]
  %v128 = vld [vmem:[%s3 + $0xdc] sm:$0xf]
  %v129 = vld [vmem:[%s3 + $0xe0] sm:$0xf]
  %v130 = vld [vmem:[%s3 + $0xe4] sm:$0xf]
  %v131 = vld [vmem:[%s3 + $0xe8] sm:$0xf]
  %v132 = vld [vmem:[%s3 + $0xec] sm:$0xf]
  %v133 = vld [vmem:[%s3 + $0xf0] sm:$0xf]
  %v134 = vld [vmem:[%s3 + $0xf4] sm:$0xf]
  %v135 = vld [vmem:[%s3 + $0xf8] sm:$0xf]
  %v136 = vld [vmem:[%s3 + $0xfc] sm:$0xf]
  %v137 = vld [vmem:[%s3 + $0x100] sm:$0xf]
  %v138 = vld [vmem:[%s3 + $0x104] sm:$0xf]
  %v139 = vld [vmem:[%s3 + $0x108] sm:$0xf]
  %v140 = vld [vmem:[%s3 + $0x10c] sm:$0xf]
  %v141 = vld [vmem:[%s3 + $0x110] sm:$0xf]
  %v142 = vld [vmem:[%s3 + $0x114] sm:$0xf]
  %v143 = vld [vmem:[%s3 + $0x118] sm:$0xf]
  %v144 = vld [vmem:[%s3 + $0x11c] sm:$0xf]
  %v145 = vld [vmem:[%s4] sm:$0x1]
  %v147 = vperm.slane %v145, 0
  %v161 = vunpack.c.l.b16 %v61
  %v162 = vunpack.c.h.b16 %v61
  %v163 = vunpack.c.l.b16 %v62
  %v164 = vunpack.c.h.b16 %v62
  %v165 = vunpack.c.l.b16 %v63
  %v166 = vunpack.c.l.b16 %v64
  %v167 = vunpack.c.h.b16 %v64
  %v168 = vunpack.c.l.b16 %v65
  %v169 = vunpack.c.h.b16 %v65
  %v170 = vunpack.c.l.b16 %v66
  %v171 = vunpack.c.l.b16 %v67
  %v172 = vunpack.c.h.b16 %v67
  %v173 = vunpack.c.l.b16 %v68
  %v174 = vunpack.c.h.b16 %v68
  %v175 = vunpack.c.l.b16 %v69
  %v176 = vunpack.c.l.b16 %v70
  %v177 = vunpack.c.h.b16 %v70
  %v178 = vunpack.c.l.b16 %v71
  %v179 = vunpack.c.h.b16 %v71
  %v180 = vunpack.c.l.b16 %v72
  %v181 = vpack.c.b16 %v166, %v161
  %v182 = vpack.c.b16 %v167, %v162
  %v183 = vpack.c.b16 %v168, %v163
  %v184 = vpack.c.b16 %v169, %v164
  %v185 = vpack.c.b16 %v170, %v165
  %v186 = vpack.c.b16 %v176, %v171
  %v187 = vpack.c.b16 %v177, %v172
  %v188 = vpack.c.b16 %v178, %v173
  %v189 = vpack.c.b16 %v179, %v174
  %v190 = vpack.c.b16 %v180, %v175
  %v271 = vunpack.c.l.b16 %v73
  %v272 = vunpack.c.l.b16 %v74
  %v273 = vunpack.c.l.b16 %v75
  %v274 = vunpack.c.l.b16 %v76
  %v275 = vunpack.c.l.b16 %v77
  %v276 = vunpack.c.l.b16 %v78
  %v277 = vunpack.c.l.b16 %v79
  %v278 = vunpack.c.l.b16 %v80
  %v279 = vunpack.c.l.b16 %v81
  %v280 = vunpack.c.l.b16 %v82
  %v281 = vunpack.c.l.b16 %v83
  %v282 = vunpack.c.l.b16 %v84
  %v283 = vunpack.c.l.b16 %v85
  %v284 = vunpack.c.l.b16 %v86
  %v285 = vunpack.c.l.b16 %v87
  %v286 = vunpack.c.l.b16 %v88
  %v287 = vunpack.c.l.b16 %v89
  %v288 = vunpack.c.l.b16 %v90
  %v289 = vunpack.c.l.b16 %v91
  %v290 = vunpack.c.l.b16 %v92
  %v291 = vunpack.c.l.b16 %v93
  %v292 = vunpack.c.l.b16 %v94
  %v293 = vunpack.c.l.b16 %v95
  %v294 = vunpack.c.l.b16 %v96
  %v295 = vunpack.c.l.b16 %v97
  %v296 = vunpack.c.l.b16 %v98
  %v297 = vunpack.c.l.b16 %v99
  %v298 = vunpack.c.l.b16 %v100
  %v299 = vunpack.c.l.b16 %v101
  %v300 = vunpack.c.l.b16 %v102
  %v301 = vunpack.c.l.b16 %v103
  %v302 = vunpack.c.l.b16 %v104
  %v303 = vunpack.c.l.b16 %v105
  %v304 = vunpack.c.l.b16 %v106
  %v305 = vunpack.c.l.b16 %v107
  %v306 = vunpack.c.l.b16 %v108
  %v307 = vunpack.c.l.b16 %v109
  %v308 = vunpack.c.l.b16 %v110
  %v309 = vunpack.c.l.b16 %v111
  %v310 = vunpack.c.l.b16 %v112
  %v311 = vunpack.c.l.b16 %v113
  %v312 = vunpack.c.l.b16 %v114
  %v313 = vunpack.c.l.b16 %v115
  %v314 = vunpack.c.l.b16 %v116
  %v315 = vunpack.c.l.b16 %v117
  %v316 = vunpack.c.l.b16 %v118
  %v317 = vunpack.c.l.b16 %v119
  %v318 = vunpack.c.l.b16 %v120
  %v319 = vunpack.c.l.b16 %v121
  %v320 = vunpack.c.l.b16 %v122
  %v321 = vunpack.c.l.b16 %v123
  %v322 = vunpack.c.l.b16 %v124
  %v323 = vunpack.c.l.b16 %v125
  %v324 = vunpack.c.l.b16 %v126
  %v325 = vunpack.c.l.b16 %v127
  %v326 = vunpack.c.l.b16 %v128
  %v327 = vunpack.c.l.b16 %v129
  %v328 = vunpack.c.l.b16 %v130
  %v329 = vunpack.c.l.b16 %v131
  %v330 = vunpack.c.l.b16 %v132
  %v331 = vunpack.c.l.b16 %v133
  %v332 = vunpack.c.l.b16 %v134
  %v333 = vunpack.c.l.b16 %v135
  %v334 = vunpack.c.l.b16 %v136
  %v335 = vunpack.c.l.b16 %v137
  %v336 = vunpack.c.l.b16 %v138
  %v337 = vunpack.c.l.b16 %v139
  %v338 = vunpack.c.l.b16 %v140
  %v339 = vunpack.c.l.b16 %v141
  %v340 = vunpack.c.l.b16 %v142
  %v341 = vunpack.c.l.b16 %v143
  %v342 = vunpack.c.l.b16 %v144
  %v343 = vpack.c.b16 %v272, %v271
  %v344 = vpack.c.b16 %v274, %v273
  %v345 = vpack.c.b16 %v276, %v275
  %v346 = vpack.c.b16 %v278, %v277
  %v347 = vpack.c.b16 %v280, %v279
  %v348 = vpack.c.b16 %v282, %v281
  %v349 = vpack.c.b16 %v284, %v283
  %v350 = vpack.c.b16 %v286, %v285
  %v351 = vpack.c.b16 %v288, %v287
  %v352 = vpack.c.b16 %v290, %v289
  %v353 = vpack.c.b16 %v292, %v291
  %v354 = vpack.c.b16 %v294, %v293
  %v355 = vpack.c.b16 %v296, %v295
  %v356 = vpack.c.b16 %v298, %v297
  %v357 = vpack.c.b16 %v300, %v299
  %v358 = vpack.c.b16 %v302, %v301
  %v359 = vpack.c.b16 %v304, %v303
  %v360 = vpack.c.b16 %v306, %v305
  %v361 = vpack.c.b16 %v308, %v307
  %v362 = vpack.c.b16 %v310, %v309
  %v363 = vpack.c.b16 %v312, %v311
  %v364 = vpack.c.b16 %v314, %v313
  %v365 = vpack.c.b16 %v316, %v315
  %v366 = vpack.c.b16 %v318, %v317
  %v367 = vpack.c.b16 %v320, %v319
  %v368 = vpack.c.b16 %v322, %v321
  %v369 = vpack.c.b16 %v324, %v323
  %v370 = vpack.c.b16 %v326, %v325
  %v371 = vpack.c.b16 %v328, %v327
  %v372 = vpack.c.b16 %v330, %v329
  %v373 = vpack.c.b16 %v332, %v331
  %v374 = vpack.c.b16 %v334, %v333
  %v375 = vpack.c.b16 %v336, %v335
  %v376 = vpack.c.b16 %v338, %v337
  %v377 = vpack.c.b16 %v340, %v339
  %v378 = vpack.c.b16 %v342, %v341
  %vm415 = vcmask 523264
  %v417 = vsel %vm415, %v185, 0
  %v420 = vsel %vm415, %v190, 0
  %422 = vmatpush.bf16.msra.mxu0 %v350
  %423 = vmatpush.bf16.msra.mxu0 %v349
  %424 = vmatpush.bf16.msra.mxu0 %v348
  %425 = vmatpush.bf16.msra.mxu0 %v347
  %426 = vmatpush.bf16.msra.mxu0 %v346
  %427 = vmatpush.bf16.msra.mxu0 %v345
  %428 = vmatpush.bf16.msra.mxu0 %v344
  %429 = vmatpush.bf16.msra.mxu0 %v343
  %430 = vmatmul.bf16.gmra.mxu0 %v181
  %v431 = vpop.f32.mrf.mxu0
  %v432 = vadd.f32 %v147, %v431
  %v433 = vpop.f32.mrf.mxu0
  %v434 = vadd.f32 %v147, %v433
  %435 = vmatmul.bf16.gmra.mxu0 %v186
  %v436 = vpop.f32.mrf.mxu0
  %v437 = vadd.f32 %v147, %v436
  %v438 = vpop.f32.mrf.mxu0
  %v439 = vadd.f32 %v147, %v438
  %440 = vdwg.mxu0
  %441 = vmatpush.bf16.msra.mxu0 %v358
  %442 = vmatpush.bf16.msra.mxu0 %v357
  %443 = vmatpush.bf16.msra.mxu0 %v356
  %444 = vmatpush.bf16.msra.mxu0 %v355
  %445 = vmatpush.bf16.msra.mxu0 %v354
  %446 = vmatpush.bf16.msra.mxu0 %v353
  %447 = vmatpush.bf16.msra.mxu0 %v352
  %448 = vmatpush.bf16.msra.mxu0 %v351
  %449 = vmatmul.bf16.gmra.mxu0 %v182
  %v450 = vpop.f32.mrf.mxu0
  %v451 = vadd.f32 %v432, %v450
  %v452 = vpop.f32.mrf.mxu0
  %v453 = vadd.f32 %v434, %v452
  %454 = vmatmul.bf16.gmra.mxu0 %v187
  %v455 = vpop.f32.mrf.mxu0
  %v456 = vadd.f32 %v437, %v455
  %v457 = vpop.f32.mrf.mxu0
  %v458 = vadd.f32 %v439, %v457
  %459 = vdwg.mxu0
  %460 = vmatpush.bf16.msra.mxu0 %v366
  %461 = vmatpush.bf16.msra.mxu0 %v365
  %462 = vmatpush.bf16.msra.mxu0 %v364
  %463 = vmatpush.bf16.msra.mxu0 %v363
  %464 = vmatpush.bf16.msra.mxu0 %v362
  %465 = vmatpush.bf16.msra.mxu0 %v361
  %466 = vmatpush.bf16.msra.mxu0 %v360
  %467 = vmatpush.bf16.msra.mxu0 %v359
  %468 = vmatmul.bf16.gmra.mxu0 %v183
  %v469 = vpop.f32.mrf.mxu0
  %v470 = vadd.f32 %v451, %v469
  %v471 = vpop.f32.mrf.mxu0
  %v472 = vadd.f32 %v453, %v471
  %473 = vmatmul.bf16.gmra.mxu0 %v188
  %v474 = vpop.f32.mrf.mxu0
  %v475 = vadd.f32 %v456, %v474
  %v476 = vpop.f32.mrf.mxu0
  %v477 = vadd.f32 %v458, %v476
  %478 = vdwg.mxu0
  %479 = vmatpush.bf16.msra.mxu0 %v374
  %480 = vmatpush.bf16.msra.mxu0 %v373
  %481 = vmatpush.bf16.msra.mxu0 %v372
  %482 = vmatpush.bf16.msra.mxu0 %v371
  %483 = vmatpush.bf16.msra.mxu0 %v370
  %484 = vmatpush.bf16.msra.mxu0 %v369
  %485 = vmatpush.bf16.msra.mxu0 %v368
  %486 = vmatpush.bf16.msra.mxu0 %v367
  %487 = vmatmul.bf16.gmra.mxu0 %v184
  %v488 = vpop.f32.mrf.mxu0
  %v489 = vadd.f32 %v470, %v488
  %v490 = vpop.f32.mrf.mxu0
  %v491 = vadd.f32 %v472, %v490
  %492 = vmatmul.bf16.gmra.mxu0 %v189
  %v493 = vpop.f32.mrf.mxu0
  %v494 = vadd.f32 %v475, %v493
  %v495 = vpop.f32.mrf.mxu0
  %v496 = vadd.f32 %v477, %v495
  %497 = vdwg.mxu0
  %498 = vmatpush.bf16.msra.mxu0 0
  %499 = vmatpush.bf16.msra.mxu0 0
  %500 = vmatpush.bf16.msra.mxu0 0
  %501 = vmatpush.bf16.msra.mxu0 0
  %502 = vmatpush.bf16.msra.mxu0 %v378
  %503 = vmatpush.bf16.msra.mxu0 %v377
  %504 = vmatpush.bf16.msra.mxu0 %v376
  %505 = vmatpush.bf16.msra.mxu0 %v375
  %506 = vmatmul.bf16.gmra.mxu0 %v417
  %v507 = vpop.f32.mrf.mxu0
  %v508 = vadd.f32 %v489, %v507
  %v509 = vpop.f32.mrf.mxu0
  %v510 = vadd.f32 %v491, %v509
  %511 = vmatmul.bf16.gmra.mxu0 %v420
  %v512 = vpop.f32.mrf.mxu0
  %v513 = vadd.f32 %v494, %v512
  %v514 = vpop.f32.mrf.mxu0
  %v515 = vadd.f32 %v496, %v514
  %516 = vdwg.mxu0
  %v517 = vld [vmem:[%s1] sm:$0xff]
  %v518 = vld [vmem:[%s1 + $0x8] sm:$0xff]
  %v519 = vld [vmem:[%s1 + $0x10] sm:$0xff]
  %v520 = vld [vmem:[%s1 + $0x18] sm:$0xff]
  %v521 = vld [vmem:[%s2] sm:$0xff]
  %v522 = vld [vmem:[%s2 + $0x8] sm:$0xff]
  %v523 = vld [vmem:[%s2 + $0x10] sm:$0xff]
  %v524 = vld [vmem:[%s2 + $0x18] sm:$0xff]
  %v525 = vxor.u32 %v508, 2147483648
  %v526 = vxor.u32 %v510, 2147483648
  %v527 = vxor.u32 %v513, 2147483648
  %v528 = vxor.u32 %v515, 2147483648
  %v529 = vmul.f32 %v525, 1.442695
  %v530 = vpow.pop %v529
  %v531 = vmul.f32 %v526, 1.442695
  %v532 = vpow.pop %v531
  %v533 = vmul.f32 %v527, 1.442695
  %v534 = vpow.pop %v533
  %v535 = vmul.f32 %v528, 1.442695
  %v536 = vpow.pop %v535
  %v537 = vadd.f32 %v530, 1.0
  %v538 = vadd.f32 %v532, 1.0
  %v539 = vadd.f32 %v534, 1.0
  %v540 = vadd.f32 %v536, 1.0
  %v541 = vrcp.pop %v537
  %v542 = vmul.f32 %v537, %v541
  %v543 = vsub.f32 1.0, %v542
  %v544 = vmul.f32 %v541, %v543
  %v545 = vadd.f32 %v541, %v544
  %vm546 = vweird.f32 %v537
  %vm547 = vweird.f32 %v541
  %vm548 = vmor %vm546, %vm547
  %v549 = vsel %vm548, %v541, %v545
  %v550 = vand.u32 2147483647, %v537
  %vm551 = vcmp.eq.f32.partialorder %v550, 8.507059e+37
  %v552 = vand.u32 %v537, 2147483648
  %v553 = vor.u32 1.1754944e-38, %v552
  %v554 = vsel %vm551, %v553, %v549
  %v555 = vmul.f32 1.0, %v554
  %v556 = vrcp.pop %v538
  %v557 = vmul.f32 %v538, %v556
  %v558 = vsub.f32 1.0, %v557
  %v559 = vmul.f32 %v556, %v558
  %v560 = vadd.f32 %v556, %v559
  %vm561 = vweird.f32 %v538
  %vm562 = vweird.f32 %v556
  %vm563 = vmor %vm561, %vm562
  %v564 = vsel %vm563, %v556, %v560
  %v565 = vand.u32 2147483647, %v538
  %vm566 = vcmp.eq.f32.partialorder %v565, 8.507059e+37
  %v567 = vand.u32 %v538, 2147483648
  %v568 = vor.u32 1.1754944e-38, %v567
  %v569 = vsel %vm566, %v568, %v564
  %v570 = vmul.f32 1.0, %v569
  %v571 = vrcp.pop %v539
  %v572 = vmul.f32 %v539, %v571
  %v573 = vsub.f32 1.0, %v572
  %v574 = vmul.f32 %v571, %v573
  %v575 = vadd.f32 %v571, %v574
  %vm576 = vweird.f32 %v539
  %vm577 = vweird.f32 %v571
  %vm578 = vmor %vm576, %vm577
  %v579 = vsel %vm578, %v571, %v575
  %v580 = vand.u32 2147483647, %v539
  %vm581 = vcmp.eq.f32.partialorder %v580, 8.507059e+37
  %v582 = vand.u32 %v539, 2147483648
  %v583 = vor.u32 1.1754944e-38, %v582
  %v584 = vsel %vm581, %v583, %v579
  %v585 = vmul.f32 1.0, %v584
  %v586 = vrcp.pop %v540
  %v587 = vmul.f32 %v540, %v586
  %v588 = vsub.f32 1.0, %v587
  %v589 = vmul.f32 %v586, %v588
  %v590 = vadd.f32 %v586, %v589
  %vm591 = vweird.f32 %v540
  %vm592 = vweird.f32 %v586
  %vm593 = vmor %vm591, %vm592
  %v594 = vsel %vm593, %v586, %v590
  %v595 = vand.u32 2147483647, %v540
  %vm596 = vcmp.eq.f32.partialorder %v595, 8.507059e+37
  %v597 = vand.u32 %v540, 2147483648
  %v598 = vor.u32 1.1754944e-38, %v597
  %v599 = vsel %vm596, %v598, %v594
  %v600 = vmul.f32 1.0, %v599
  %v601 = vtanh.pop %v508
  %v602 = vtanh.pop %v510
  %v603 = vtanh.pop %v513
  %v604 = vtanh.pop %v515
  %609 = vrot.lane.b32.xlu0 %v517, 32
  %v610 = vpop.permute.xlu0 %609
  %611 = vrot.lane.b32.xlu0 %v518, 32
  %v612 = vpop.permute.xlu0 %611
  %613 = vrot.lane.b32.xlu0 %v519, 32
  %v614 = vpop.permute.xlu0 %613
  %615 = vrot.lane.b32.xlu0 %v520, 32
  %v616 = vpop.permute.xlu0 %615
  %v621 = vmul.f32 %v555, %v610
  %v622 = vmul.f32 %v570, %v612
  %v623 = vmul.f32 %v585, %v614
  %v624 = vmul.f32 %v600, %v616
  %629 = vrot.lane.b32.xlu0 %v601, 32
  %v630 = vpop.permute.xlu0 %629
  %631 = vrot.lane.b32.xlu0 %v602, 32
  %v632 = vpop.permute.xlu0 %631
  %633 = vrot.lane.b32.xlu0 %v603, 32
  %v634 = vpop.permute.xlu0 %633
  %635 = vrot.lane.b32.xlu0 %v604, 32
  %v636 = vpop.permute.xlu0 %635
  %v641 = vmul.f32 %v555, %v630
  %v642 = vmul.f32 %v570, %v632
  %v643 = vmul.f32 %v585, %v634
  %v644 = vmul.f32 %v600, %v636
  %649 = vrot.lane.b32.xlu0 %v641, 32
  %v650 = vpop.permute.xlu0 %649
  %651 = vrot.lane.b32.xlu0 %v642, 32
  %v652 = vpop.permute.xlu0 %651
  %653 = vrot.lane.b32.xlu0 %v643, 32
  %v654 = vpop.permute.xlu0 %653
  %655 = vrot.lane.b32.xlu0 %v644, 32
  %v656 = vpop.permute.xlu0 %655
  %v661 = vadd.f32 %v621, %v650
  %v662 = vadd.f32 %v622, %v652
  %v663 = vadd.f32 %v623, %v654
  %v664 = vadd.f32 %v624, %v656
  %v665 = vtanh.pop %v661
  %v666 = vtanh.pop %v662
  %v667 = vtanh.pop %v663
  %v668 = vtanh.pop %v664
  %673 = vrot.lane.b32.xlu0 %v665, 32
  %v674 = vpop.permute.xlu0 %673
  %675 = vrot.lane.b32.xlu0 %v666, 32
  %v676 = vpop.permute.xlu0 %675
  %677 = vrot.lane.b32.xlu0 %v667, 32
  %v678 = vpop.permute.xlu0 %677
  %679 = vrot.lane.b32.xlu0 %v668, 32
  %v680 = vpop.permute.xlu0 %679
  %v685 = vmul.f32 %v555, %v674
  %v686 = vmul.f32 %v570, %v676
  %v687 = vmul.f32 %v585, %v678
  %v688 = vmul.f32 %v600, %v680
  %v689 = vpack.c.bf16 %v686, %v685
  %v690 = vpack.c.bf16 %v688, %v687
  %v691 = vld [vmem:[%s5] sm:$0xf]
  %v692 = vld [vmem:[%s5 + $0x4] sm:$0xf]
  %v693 = vld [vmem:[%s5 + $0x8] sm:$0xf]
  %v694 = vld [vmem:[%s5 + $0xc] sm:$0xf]
  %v695 = vld [vmem:[%s6] sm:$0x1]
  %v697 = vperm.slane %v695, 0
  %701 = vrot.lane.b32.xlu0 %v689, 64
  %v702 = vpop.permute.xlu0 %701
  %703 = vrot.lane.b32.xlu0 %v690, 64
  %v704 = vpop.permute.xlu0 %703
  %v709 = vunpack.c.l.b16 %v691
  %v710 = vunpack.c.l.b16 %v692
  %v711 = vunpack.c.l.b16 %v693
  %v712 = vunpack.c.l.b16 %v694
  %v713 = vpack.c.b16 %v710, %v709
  %v714 = vpack.c.b16 %v712, %v711
  %vm717 = vcmask 261120
  %v719 = vsel %vm717, %v702, 0
  %v722 = vsel %vm717, %v704, 0
  %724 = vmatpush.bf16.msra.mxu0 0
  %725 = vmatpush.bf16.msra.mxu0 0
  %726 = vmatpush.bf16.msra.mxu0 0
  %727 = vmatpush.bf16.msra.mxu0 0
  %728 = vmatpush.bf16.msra.mxu0 0
  %729 = vmatpush.bf16.msra.mxu0 0
  %730 = vmatpush.bf16.msra.mxu0 %v714
  %731 = vmatpush.bf16.msra.mxu0 %v713
  %732 = vmatmul.bf16.gmra.mxu0 %v719
  %v733 = vpop.f32.mrf.mxu0
  %v734 = vadd.f32 %v697, %v733
  %v735 = vpop.f32.mrf.mxu0
  %v736 = vadd.f32 %v697, %v735
  %737 = vmatmul.bf16.gmra.mxu0 %v722
  %v738 = vpop.f32.mrf.mxu0
  %v739 = vadd.f32 %v697, %v738
  %v740 = vpop.f32.mrf.mxu0
  %v741 = vadd.f32 %v697, %v740
  %742 = vdwg.mxu0
  %v743 = vpack.c.bf16 %v522, %v521
  %v744 = vpack.c.bf16 %v524, %v523
  %v745 = vld [vmem:[%s7] sm:$0xf]
  %v746 = vld [vmem:[%s7 + $0x4] sm:$0xf]
  %v747 = vld [vmem:[%s7 + $0x8] sm:$0xf]
  %v748 = vld [vmem:[%s7 + $0xc] sm:$0xf]
  %v749 = vld [vmem:[%s8] sm:$0x1]
  %v751 = vperm.slane %v749, 0
  %v757 = vunpack.c.l.b16 %v745
  %v758 = vunpack.c.l.b16 %v746
  %v759 = vunpack.c.l.b16 %v747
  %v760 = vunpack.c.l.b16 %v748
  %v761 = vpack.c.b16 %v758, %v757
  %v762 = vpack.c.b16 %v760, %v759
  %v766 = vsel %vm717, %v743, 0
  %v769 = vsel %vm717, %v744, 0
  %771 = vmatpush.bf16.msra.mxu0 0
  %772 = vmatpush.bf16.msra.mxu0 0
  %773 = vmatpush.bf16.msra.mxu0 0
  %774 = vmatpush.bf16.msra.mxu0 0
  %775 = vmatpush.bf16.msra.mxu0 0
  %776 = vmatpush.bf16.msra.mxu0 0
  %777 = vmatpush.bf16.msra.mxu0 %v762
  %778 = vmatpush.bf16.msra.mxu0 %v761
  %779 = vmatmul.bf16.gmra.mxu0 %v766
  %v780 = vpop.f32.mrf.mxu0
  %v781 = vadd.f32 %v751, %v780
  %v782 = vpop.f32.mrf.mxu0
  %v783 = vadd.f32 %v751, %v782
  %784 = vmatmul.bf16.gmra.mxu0 %v769
  %v785 = vpop.f32.mrf.mxu0
  %v786 = vadd.f32 %v751, %v785
  %v787 = vpop.f32.mrf.mxu0
  %v788 = vadd.f32 %v751, %v787
  %789 = vdwg.mxu0
  %v790 = vpack.c.bf16 %v734, %v734
  %v791 = vpack.c.bf16 %v736, %v736
  %v792 = vpack.c.bf16 %v739, %v739
  %v793 = vpack.c.bf16 %v741, %v741
  %v794 = vpack.c.bf16 %v781, %v781
  %v795 = vpack.c.bf16 %v783, %v783
  %v796 = vpack.c.bf16 %v786, %v786
  %v797 = vpack.c.bf16 %v788, %v788
  %v800 = vunpack.c.l.b16 %v790
  %v801 = vunpack.c.l.b16 %v791
  %v802 = vpack.c.b16 %v801, %v800
  %803 = vrot.lane.b32.xlu0 %v802, 112
  %v804 = vpop.permute.xlu0 %803
  %vm805 = vcmask 130048
  %v807 = vsel %vm805, %v802, 0
  %v810 = vsel %vm805, %v804, 0
  %812 = vmatpush.bf16.xpose.msra.mxu0 0
  %813 = vmatpush.bf16.xpose.msra.mxu0 0
  %814 = vmatpush.bf16.xpose.msra.mxu0 0
  %815 = vmatpush.bf16.xpose.msra.mxu0 0
  %816 = vmatpush.bf16.xpose.msra.mxu0 0
  %817 = vmatpush.bf16.xpose.msra.mxu0 0
  %818 = vmatpush.bf16.xpose.msra.mxu0 0
  %819 = vmatpush.bf16.xpose.msra.mxu0 %v810
  %820 = vmatmul.bf16.gmra.mxu0 %v807
  %v821 = vpop.f32.mrf.mxu0
  %v822 = vadd.f32 0.0, %v821
  %v823 = vpop.f32.mrf.mxu0
  %v824 = vadd.f32 0.0, %v823
  %825 = vdwg.mxu0
  %v828 = vunpack.c.l.b16 %v792
  %v829 = vunpack.c.l.b16 %v793
  %v830 = vpack.c.b16 %v829, %v828
  %831 = vrot.lane.b32.xlu0 %v830, 112
  %v832 = vpop.permute.xlu0 %831
  %v834 = vsel %vm805, %v830, 0
  %v837 = vsel %vm805, %v832, 0
  %839 = vmatpush.bf16.xpose.msra.mxu0 0
  %840 = vmatpush.bf16.xpose.msra.mxu0 0
  %841 = vmatpush.bf16.xpose.msra.mxu0 0
  %842 = vmatpush.bf16.xpose.msra.mxu0 0
  %843 = vmatpush.bf16.xpose.msra.mxu0 0
  %844 = vmatpush.bf16.xpose.msra.mxu0 0
  %845 = vmatpush.bf16.xpose.msra.mxu0 0
  %846 = vmatpush.bf16.xpose.msra.mxu0 %v837
  %847 = vmatmul.bf16.gmra.mxu0 %v834
  %v848 = vpop.f32.mrf.mxu0
  %v849 = vadd.f32 0.0, %v848
  %v850 = vpop.f32.mrf.mxu0
  %v851 = vadd.f32 0.0, %v850
  %852 = vdwg.mxu0
  %v853 = vsel %vm805, %v822, -inf
  %854 = vmax.xlane.f32.xlu0 %v853
  %v855 = vpop.xlane.xlu0 %854
  %v856 = vsel %vm805, %v824, -inf
  %857 = vmax.xlane.f32.xlu0 %v856
  %v858 = vpop.xlane.xlu0 %857
  %v859 = vsel %vm805, %v849, -inf
  %860 = vmax.xlane.f32.xlu0 %v859
  %v861 = vpop.xlane.xlu0 %860
  %v862 = vsel %vm805, %v851, -inf
  %863 = vmax.xlane.f32.xlu0 %v862
  %v864 = vpop.xlane.xlu0 %863
  %v865 = vsub.f32 %v822, %v855
  %v866 = vsub.f32 %v824, %v858
  %v867 = vsub.f32 %v849, %v861
  %v868 = vsub.f32 %v851, %v864
  %v869 = vmul.f32 %v865, 1.442695
  %v870 = vpow.pop %v869
  %v871 = vmul.f32 %v866, 1.442695
  %v872 = vpow.pop %v871
  %v873 = vmul.f32 %v867, 1.442695
  %v874 = vpow.pop %v873
  %v875 = vmul.f32 %v868, 1.442695
  %v876 = vpow.pop %v875
  %v877 = vsel %vm805, %v870, 0.0
  %878 = vadd.xlane.f32.xlu0 %v877
  %v879 = vpop.xlane.xlu0 %878
  %v880 = vsel %vm805, %v872, 0.0
  %881 = vadd.xlane.f32.xlu0 %v880
  %v882 = vpop.xlane.xlu0 %881
  %v883 = vsel %vm805, %v874, 0.0
  %884 = vadd.xlane.f32.xlu0 %v883
  %v885 = vpop.xlane.xlu0 %884
  %v886 = vsel %vm805, %v876, 0.0
  %887 = vadd.xlane.f32.xlu0 %v886
  %v888 = vpop.xlane.xlu0 %887
  %v889 = vrcp.pop %v879
  %v890 = vrcp.pop %v882
  %v891 = vrcp.pop %v885
  %v892 = vrcp.pop %v888
  %v893 = vmul.f32 %v870, %v889
  %v894 = vmul.f32 %v872, %v890
  %v895 = vmul.f32 %v874, %v891
  %v896 = vmul.f32 %v876, %v892
  %v897 = vpack.c.bf16 %v893, %v893
  %v898 = vpack.c.bf16 %v894, %v894
  %v899 = vpack.c.bf16 %v895, %v895
  %v900 = vpack.c.bf16 %v896, %v896
  %v903 = vunpack.c.l.b16 %v897
  %v904 = vunpack.c.l.b16 %v898
  %v905 = vpack.c.b16 %v904, %v903
  %906 = vrot.lane.b32.xlu0 %v802, 96
  %v907 = vpop.permute.xlu0 %906
  %v910 = vsel %vm805, %v905, 0
  %912 = vmatpush.bf16.msra.mxu0 0
  %913 = vmatpush.bf16.msra.mxu0 0
  %914 = vmatpush.bf16.msra.mxu0 0
  %915 = vmatpush.bf16.msra.mxu0 0
  %916 = vmatpush.bf16.msra.mxu0 0
  %917 = vmatpush.bf16.msra.mxu0 0
  %918 = vmatpush.bf16.msra.mxu0 0
  %919 = vmatpush.bf16.msra.mxu0 %v907
  %920 = vmatmul.bf16.gmra.mxu0 %v910
  %v921 = vpop.f32.mrf.mxu0
  %v922 = vadd.f32 0.0, %v921
  %v923 = vpop.f32.mrf.mxu0
  %v924 = vadd.f32 0.0, %v923
  %925 = vdwg.mxu0
  %v928 = vunpack.c.l.b16 %v899
  %v929 = vunpack.c.l.b16 %v900
  %v930 = vpack.c.b16 %v929, %v928
  %931 = vrot.lane.b32.xlu0 %v830, 96
  %v932 = vpop.permute.xlu0 %931
  %v935 = vsel %vm805, %v930, 0
  %937 = vmatpush.bf16.msra.mxu0 0
  %938 = vmatpush.bf16.msra.mxu0 0
  %939 = vmatpush.bf16.msra.mxu0 0
  %940 = vmatpush.bf16.msra.mxu0 0
  %941 = vmatpush.bf16.msra.mxu0 0
  %942 = vmatpush.bf16.msra.mxu0 0
  %943 = vmatpush.bf16.msra.mxu0 0
  %944 = vmatpush.bf16.msra.mxu0 %v932
  %945 = vmatmul.bf16.gmra.mxu0 %v935
  %v946 = vpop.f32.mrf.mxu0
  %v947 = vadd.f32 0.0, %v946
  %v948 = vpop.f32.mrf.mxu0
  %v949 = vadd.f32 0.0, %v948
  %950 = vdwg.mxu0
  %v953 = vunpack.c.l.b16 %v794
  %v954 = vunpack.c.l.b16 %v795
  %v955 = vpack.c.b16 %v954, %v953
  %v957 = vsel %vm805, %v955, 0
  %959 = vmatpush.bf16.xpose.msra.mxu0 0
  %960 = vmatpush.bf16.xpose.msra.mxu0 0
  %961 = vmatpush.bf16.xpose.msra.mxu0 0
  %962 = vmatpush.bf16.xpose.msra.mxu0 0
  %963 = vmatpush.bf16.xpose.msra.mxu0 0
  %964 = vmatpush.bf16.xpose.msra.mxu0 0
  %965 = vmatpush.bf16.xpose.msra.mxu0 0
  %966 = vmatpush.bf16.xpose.msra.mxu0 %v957
  %967 = vmatmul.bf16.gmra.mxu0 %v807
  %v968 = vpop.f32.mrf.mxu0
  %v969 = vadd.f32 0.0, %v968
  %v970 = vpop.f32.mrf.mxu0
  %v971 = vadd.f32 0.0, %v970
  %972 = vdwg.mxu0
  %v975 = vunpack.c.l.b16 %v796
  %v976 = vunpack.c.l.b16 %v797
  %v977 = vpack.c.b16 %v976, %v975
  %v979 = vsel %vm805, %v977, 0
  %981 = vmatpush.bf16.xpose.msra.mxu0 0
  %982 = vmatpush.bf16.xpose.msra.mxu0 0
  %983 = vmatpush.bf16.xpose.msra.mxu0 0
  %984 = vmatpush.bf16.xpose.msra.mxu0 0
  %985 = vmatpush.bf16.xpose.msra.mxu0 0
  %986 = vmatpush.bf16.xpose.msra.mxu0 0
  %987 = vmatpush.bf16.xpose.msra.mxu0 0
  %988 = vmatpush.bf16.xpose.msra.mxu0 %v979
  %989 = vmatmul.bf16.gmra.mxu0 %v834
  %v990 = vpop.f32.mrf.mxu0
  %v991 = vadd.f32 0.0, %v990
  %v992 = vpop.f32.mrf.mxu0
  %v993 = vadd.f32 0.0, %v992
  %994 = vdwg.mxu0
  %v995 = vsel %vm805, %v969, -inf
  %996 = vmax.xlane.f32.xlu0 %v995
  %v997 = vpop.xlane.xlu0 %996
  %v998 = vsel %vm805, %v971, -inf
  %999 = vmax.xlane.f32.xlu0 %v998
  %v1000 = vpop.xlane.xlu0 %999
  %v1001 = vsel %vm805, %v991, -inf
  %1002 = vmax.xlane.f32.xlu0 %v1001
  %v1003 = vpop.xlane.xlu0 %1002
  %v1004 = vsel %vm805, %v993, -inf
  %1005 = vmax.xlane.f32.xlu0 %v1004
  %v1006 = vpop.xlane.xlu0 %1005
  %v1007 = vsub.f32 %v969, %v997
  %v1008 = vsub.f32 %v971, %v1000
  %v1009 = vsub.f32 %v991, %v1003
  %v1010 = vsub.f32 %v993, %v1006
  %v1011 = vmul.f32 %v1007, 1.442695
  %v1012 = vpow.pop %v1011
  %v1013 = vmul.f32 %v1008, 1.442695
  %v1014 = vpow.pop %v1013
  %v1015 = vmul.f32 %v1009, 1.442695
  %v1016 = vpow.pop %v1015
  %v1017 = vmul.f32 %v1010, 1.442695
  %v1018 = vpow.pop %v1017
  %v1019 = vsel %vm805, %v1012, 0.0
  %1020 = vadd.xlane.f32.xlu0 %v1019
  %v1021 = vpop.xlane.xlu0 %1020
  %v1022 = vsel %vm805, %v1014, 0.0
  %1023 = vadd.xlane.f32.xlu0 %v1022
  %v1024 = vpop.xlane.xlu0 %1023
  %v1025 = vsel %vm805, %v1016, 0.0
  %1026 = vadd.xlane.f32.xlu0 %v1025
  %v1027 = vpop.xlane.xlu0 %1026
  %v1028 = vsel %vm805, %v1018, 0.0
  %1029 = vadd.xlane.f32.xlu0 %v1028
  %v1030 = vpop.xlane.xlu0 %1029
  %v1031 = vrcp.pop %v1021
  %v1032 = vrcp.pop %v1024
  %v1033 = vrcp.pop %v1027
  %v1034 = vrcp.pop %v1030
  %v1035 = vmul.f32 %v1012, %v1031
  %v1036 = vmul.f32 %v1014, %v1032
  %v1037 = vmul.f32 %v1016, %v1033
  %v1038 = vmul.f32 %v1018, %v1034
  %v1039 = vpack.c.bf16 %v1035, %v1035
  %v1040 = vpack.c.bf16 %v1036, %v1036
  %v1041 = vpack.c.bf16 %v1037, %v1037
  %v1042 = vpack.c.bf16 %v1038, %v1038
  %v1045 = vunpack.c.l.b16 %v1039
  %v1046 = vunpack.c.l.b16 %v1040
  %v1047 = vpack.c.b16 %v1046, %v1045
  %1048 = vrot.lane.b32.xlu0 %v955, 112
  %v1049 = vpop.permute.xlu0 %1048
  %v1052 = vsel %vm805, %v1047, 0
  %1054 = vmatpush.bf16.msra.mxu0 0
  %1055 = vmatpush.bf16.msra.mxu0 0
  %1056 = vmatpush.bf16.msra.mxu0 0
  %1057 = vmatpush.bf16.msra.mxu0 0
  %1058 = vmatpush.bf16.msra.mxu0 0
  %1059 = vmatpush.bf16.msra.mxu0 0
  %1060 = vmatpush.bf16.msra.mxu0 0
  %1061 = vmatpush.bf16.msra.mxu0 %v1049
  %1062 = vmatmul.bf16.gmra.mxu0 %v1052
  %v1063 = vpop.f32.mrf.mxu0
  %v1064 = vadd.f32 0.0, %v1063
  %v1065 = vpop.f32.mrf.mxu0
  %v1066 = vadd.f32 0.0, %v1065
  %1067 = vdwg.mxu0
  %v1070 = vunpack.c.l.b16 %v1041
  %v1071 = vunpack.c.l.b16 %v1042
  %v1072 = vpack.c.b16 %v1071, %v1070
  %1073 = vrot.lane.b32.xlu0 %v977, 112
  %v1074 = vpop.permute.xlu0 %1073
  %v1077 = vsel %vm805, %v1072, 0
  %1079 = vmatpush.bf16.msra.mxu0 0
  %1080 = vmatpush.bf16.msra.mxu0 0
  %1081 = vmatpush.bf16.msra.mxu0 0
  %1082 = vmatpush.bf16.msra.mxu0 0
  %1083 = vmatpush.bf16.msra.mxu0 0
  %1084 = vmatpush.bf16.msra.mxu0 0
  %1085 = vmatpush.bf16.msra.mxu0 0
  %1086 = vmatpush.bf16.msra.mxu0 %v1074
  %1087 = vmatmul.bf16.gmra.mxu0 %v1077
  %v1088 = vpop.f32.mrf.mxu0
  %v1089 = vadd.f32 0.0, %v1088
  %v1090 = vpop.f32.mrf.mxu0
  %v1091 = vadd.f32 0.0, %v1090
  %1092 = vdwg.mxu0
  %v1093 = vpack.c.bf16 %v924, %v922
  %v1094 = vpack.c.bf16 %v949, %v947
  %v1095 = vld [vmem:[%s9] sm:$0xf]
  %v1096 = vld [vmem:[%s9 + $0x4] sm:$0xf]
  %v1097 = vld [vmem:[%s9 + $0x8] sm:$0xf]
  %v1098 = vld [vmem:[%s9 + $0xc] sm:$0xf]
  %v1099 = vpack.c.bf16 %v1066, %v1064
  %v1100 = vpack.c.bf16 %v1091, %v1089
  %v1101 = vld [vmem:[%s10] sm:$0xf]
  %v1102 = vld [vmem:[%s10 + $0x4] sm:$0xf]
  %v1103 = vld [vmem:[%s10 + $0x8] sm:$0xf]
  %v1104 = vld [vmem:[%s10 + $0xc] sm:$0xf]
  %v1109 = vunpack.c.l.b16 %v1101
  %v1110 = vunpack.c.l.b16 %v1102
  %v1111 = vunpack.c.l.b16 %v1103
  %v1112 = vunpack.c.l.b16 %v1104
  %v1113 = vpack.c.b16 %v1110, %v1109
  %v1114 = vpack.c.b16 %v1112, %v1111
  %v1118 = vsel %vm717, %v1099, 0
  %v1121 = vsel %vm717, %v1100, 0
  %1123 = vmatpush.bf16.msra.mxu0 0
  %1124 = vmatpush.bf16.msra.mxu0 0
  %1125 = vmatpush.bf16.msra.mxu0 0
  %1126 = vmatpush.bf16.msra.mxu0 0
  %1127 = vmatpush.bf16.msra.mxu0 0
  %1128 = vmatpush.bf16.msra.mxu0 0
  %1129 = vmatpush.bf16.msra.mxu0 %v1114
  %1130 = vmatpush.bf16.msra.mxu0 %v1113
  %1131 = vmatmul.bf16.gmra.mxu0 %v1118
  %v1132 = vpop.f32.mrf.mxu0
  %v1133 = vadd.f32 0.0, %v1132
  %v1134 = vpop.f32.mrf.mxu0
  %v1135 = vadd.f32 0.0, %v1134
  %1136 = vmatmul.bf16.gmra.mxu0 %v1121
  %v1137 = vpop.f32.mrf.mxu0
  %v1138 = vadd.f32 0.0, %v1137
  %v1139 = vpop.f32.mrf.mxu0
  %v1140 = vadd.f32 0.0, %v1139
  %1141 = vdwg.mxu0
  %v1146 = vunpack.c.l.b16 %v1095
  %v1147 = vunpack.c.l.b16 %v1096
  %v1148 = vunpack.c.l.b16 %v1097
  %v1149 = vunpack.c.l.b16 %v1098
  %v1150 = vpack.c.b16 %v1147, %v1146
  %v1151 = vpack.c.b16 %v1149, %v1148
  %v1155 = vsel %vm717, %v1093, 0
  %v1158 = vsel %vm717, %v1094, 0
  %1160 = vmatpush.bf16.msra.mxu0 0
  %1161 = vmatpush.bf16.msra.mxu0 0
  %1162 = vmatpush.bf16.msra.mxu0 0
  %1163 = vmatpush.bf16.msra.mxu0 0
  %1164 = vmatpush.bf16.msra.mxu0 0
  %1165 = vmatpush.bf16.msra.mxu0 0
  %1166 = vmatpush.bf16.msra.mxu0 %v1151
  %1167 = vmatpush.bf16.msra.mxu0 %v1150
  %1168 = vmatmul.bf16.gmra.mxu0 %v1155
  %v1169 = vpop.f32.mrf.mxu0
  %v1170 = vadd.f32 %v1133, %v1169
  %v1171 = vpop.f32.mrf.mxu0
  %v1172 = vadd.f32 %v1135, %v1171
  %1173 = vmatmul.bf16.gmra.mxu0 %v1158
  %v1174 = vpop.f32.mrf.mxu0
  %v1175 = vadd.f32 %v1138, %v1174
  %v1176 = vpop.f32.mrf.mxu0
  %v1177 = vadd.f32 %v1140, %v1176
  %1178 = vdwg.mxu0
  %v1179 = vld [vmem:[%s11] sm:$0x1]
  %v1181 = vperm.slane %v1179, 0
  %v1183 = vadd.f32 %v1170, %v1181
  %v1184 = vadd.f32 %v1172, %v1181
  %v1185 = vadd.f32 %v1175, %v1181
  %v1186 = vadd.f32 %v1177, %v1181
  %v1187 = vpack.c.bf16 %v1184, %v1183
  %v1188 = vpack.c.bf16 %v1186, %v1185
  %v1189 = vld [vmem:[%s12] sm:$0xf]
  %v1190 = vld [vmem:[%s12 + $0x4] sm:$0xf]
  %v1191 = vld [vmem:[%s12 + $0x8] sm:$0xf]
  %v1192 = vld [vmem:[%s12 + $0xc] sm:$0xf]
  %v1193 = vld [vmem:[%s12 + $0x10] sm:$0xf]
  %v1194 = vld [vmem:[%s12 + $0x14] sm:$0xf]
  %v1195 = vld [vmem:[%s12 + $0x18] sm:$0xf]
  %v1196 = vld [vmem:[%s12 + $0x1c] sm:$0xf]
  %v1197 = vld [vmem:[%s13] sm:$0xf]
  %v1198 = vld [vmem:[%s13 + $0x4] sm:$0xf]
  %v1199 = vld [vmem:[%s13 + $0x8] sm:$0xf]
  %v1200 = vld [vmem:[%s13 + $0xc] sm:$0xf]
  %v1205 = vunpack.c.l.b16 %v1197
  %v1206 = vunpack.c.l.b16 %v1198
  %v1207 = vunpack.c.l.b16 %v1199
  %v1208 = vunpack.c.l.b16 %v1200
  %v1209 = vpack.c.b16 %v1206, %v1205
  %v1210 = vpack.c.b16 %v1208, %v1207
  %1213 = vmatpush.bf16.msra.mxu0 0
  %1214 = vmatpush.bf16.msra.mxu0 0
  %1215 = vmatpush.bf16.msra.mxu0 0
  %1216 = vmatpush.bf16.msra.mxu0 0
  %1217 = vmatpush.bf16.msra.mxu0 0
  %1218 = vmatpush.bf16.msra.mxu0 0
  %1219 = vmatpush.bf16.msra.mxu0 %v1210
  %1220 = vmatpush.bf16.msra.mxu0 %v1209
  %1221 = vmatmul.bf16.gmra.mxu0 %v719
  %v1222 = vpop.f32.mrf.mxu0
  %v1223 = vadd.f32 0.0, %v1222
  %v1224 = vpop.f32.mrf.mxu0
  %v1225 = vadd.f32 0.0, %v1224
  %1226 = vmatmul.bf16.gmra.mxu0 %v722
  %v1227 = vpop.f32.mrf.mxu0
  %v1228 = vadd.f32 0.0, %v1227
  %v1229 = vpop.f32.mrf.mxu0
  %v1230 = vadd.f32 0.0, %v1229
  %1231 = vdwg.mxu0
  %v1240 = vunpack.c.l.b16 %v1189
  %v1241 = vunpack.c.l.b16 %v1190
  %v1242 = vunpack.c.l.b16 %v1191
  %v1243 = vunpack.c.l.b16 %v1192
  %v1244 = vunpack.c.l.b16 %v1193
  %v1245 = vunpack.c.l.b16 %v1194
  %v1246 = vunpack.c.l.b16 %v1195
  %v1247 = vunpack.c.l.b16 %v1196
  %v1248 = vpack.c.b16 %v1241, %v1240
  %v1249 = vpack.c.b16 %v1243, %v1242
  %v1250 = vpack.c.b16 %v1245, %v1244
  %v1251 = vpack.c.b16 %v1247, %v1246
  %v1257 = vsel %vm415, %v1187, 0
  %v1260 = vsel %vm415, %v1188, 0
  %1262 = vmatpush.bf16.msra.mxu0 0
  %1263 = vmatpush.bf16.msra.mxu0 0
  %1264 = vmatpush.bf16.msra.mxu0 0
  %1265 = vmatpush.bf16.msra.mxu0 0
  %1266 = vmatpush.bf16.msra.mxu0 %v1251
  %1267 = vmatpush.bf16.msra.mxu0 %v1250
  %1268 = vmatpush.bf16.msra.mxu0 %v1249
  %1269 = vmatpush.bf16.msra.mxu0 %v1248
  %1270 = vmatmul.bf16.gmra.mxu0 %v1257
  %v1271 = vpop.f32.mrf.mxu0
  %v1272 = vadd.f32 %v1223, %v1271
  %v1273 = vpop.f32.mrf.mxu0
  %v1274 = vadd.f32 %v1225, %v1273
  %1275 = vmatmul.bf16.gmra.mxu0 %v1260
  %v1276 = vpop.f32.mrf.mxu0
  %v1277 = vadd.f32 %v1228, %v1276
  %v1278 = vpop.f32.mrf.mxu0
  %v1279 = vadd.f32 %v1230, %v1278
  %1280 = vdwg.mxu0
  %v1281 = vld [vmem:[%s14] sm:$0x1]
  %v1283 = vperm.slane %v1281, 0
  %v1285 = vadd.f32 %v1272, %v1283
  %v1286 = vadd.f32 %v1274, %v1283
  %v1287 = vadd.f32 %v1277, %v1283
  %v1288 = vadd.f32 %v1279, %v1283
  %v1289 = vxor.u32 %v1285, 2147483648
  %v1290 = vxor.u32 %v1286, 2147483648
  %v1291 = vxor.u32 %v1287, 2147483648
  %v1292 = vxor.u32 %v1288, 2147483648
  %v1293 = vmul.f32 %v1289, 1.442695
  %v1294 = vpow.pop %v1293
  %v1295 = vmul.f32 %v1290, 1.442695
  %v1296 = vpow.pop %v1295
  %v1297 = vmul.f32 %v1291, 1.442695
  %v1298 = vpow.pop %v1297
  %v1299 = vmul.f32 %v1292, 1.442695
  %v1300 = vpow.pop %v1299
  %v1301 = vadd.f32 %v1294, 1.0
  %v1302 = vadd.f32 %v1296, 1.0
  %v1303 = vadd.f32 %v1298, 1.0
  %v1304 = vadd.f32 %v1300, 1.0
  %v1305 = vrcp.pop %v1301
  %v1306 = vmul.f32 %v1301, %v1305
  %v1307 = vsub.f32 1.0, %v1306
  %v1308 = vmul.f32 %v1305, %v1307
  %v1309 = vadd.f32 %v1305, %v1308
  %vm1310 = vweird.f32 %v1301
  %vm1311 = vweird.f32 %v1305
  %vm1312 = vmor %vm1310, %vm1311
  %v1313 = vsel %vm1312, %v1305, %v1309
  %v1314 = vand.u32 2147483647, %v1301
  %vm1315 = vcmp.eq.f32.partialorder %v1314, 8.507059e+37
  %v1316 = vand.u32 %v1301, 2147483648
  %v1317 = vor.u32 1.1754944e-38, %v1316
  %v1318 = vsel %vm1315, %v1317, %v1313
  %v1319 = vmul.f32 1.0, %v1318
  %v1320 = vrcp.pop %v1302
  %v1321 = vmul.f32 %v1302, %v1320
  %v1322 = vsub.f32 1.0, %v1321
  %v1323 = vmul.f32 %v1320, %v1322
  %v1324 = vadd.f32 %v1320, %v1323
  %vm1325 = vweird.f32 %v1302
  %vm1326 = vweird.f32 %v1320
  %vm1327 = vmor %vm1325, %vm1326
  %v1328 = vsel %vm1327, %v1320, %v1324
  %v1329 = vand.u32 2147483647, %v1302
  %vm1330 = vcmp.eq.f32.partialorder %v1329, 8.507059e+37
  %v1331 = vand.u32 %v1302, 2147483648
  %v1332 = vor.u32 1.1754944e-38, %v1331
  %v1333 = vsel %vm1330, %v1332, %v1328
  %v1334 = vmul.f32 1.0, %v1333
  %v1335 = vrcp.pop %v1303
  %v1336 = vmul.f32 %v1303, %v1335
  %v1337 = vsub.f32 1.0, %v1336
  %v1338 = vmul.f32 %v1335, %v1337
  %v1339 = vadd.f32 %v1335, %v1338
  %vm1340 = vweird.f32 %v1303
  %vm1341 = vweird.f32 %v1335
  %vm1342 = vmor %vm1340, %vm1341
  %v1343 = vsel %vm1342, %v1335, %v1339
  %v1344 = vand.u32 2147483647, %v1303
  %vm1345 = vcmp.eq.f32.partialorder %v1344, 8.507059e+37
  %v1346 = vand.u32 %v1303, 2147483648
  %v1347 = vor.u32 1.1754944e-38, %v1346
  %v1348 = vsel %vm1345, %v1347, %v1343
  %v1349 = vmul.f32 1.0, %v1348
  %v1350 = vrcp.pop %v1304
  %v1351 = vmul.f32 %v1304, %v1350
  %v1352 = vsub.f32 1.0, %v1351
  %v1353 = vmul.f32 %v1350, %v1352
  %v1354 = vadd.f32 %v1350, %v1353
  %vm1355 = vweird.f32 %v1304
  %vm1356 = vweird.f32 %v1350
  %vm1357 = vmor %vm1355, %vm1356
  %v1358 = vsel %vm1357, %v1350, %v1354
  %v1359 = vand.u32 2147483647, %v1304
  %vm1360 = vcmp.eq.f32.partialorder %v1359, 8.507059e+37
  %v1361 = vand.u32 %v1304, 2147483648
  %v1362 = vor.u32 1.1754944e-38, %v1361
  %v1363 = vsel %vm1360, %v1362, %v1358
  %v1364 = vmul.f32 1.0, %v1363
  %v1365 = vsub.f32 1.0, %v1319
  %v1366 = vsub.f32 1.0, %v1334
  %v1367 = vsub.f32 1.0, %v1349
  %v1368 = vsub.f32 1.0, %v1364
  %1373 = vrot.lane.b32.xlu0 %v521, 64
  %v1374 = vpop.permute.xlu0 %1373
  %1375 = vrot.lane.b32.xlu0 %v522, 64
  %v1376 = vpop.permute.xlu0 %1375
  %1377 = vrot.lane.b32.xlu0 %v523, 64
  %v1378 = vpop.permute.xlu0 %1377
  %1379 = vrot.lane.b32.xlu0 %v524, 64
  %v1380 = vpop.permute.xlu0 %1379
  %v1385 = vmul.f32 %v1365, %v1374
  %v1386 = vmul.f32 %v1366, %v1376
  %v1387 = vmul.f32 %v1367, %v1378
  %v1388 = vmul.f32 %v1368, %v1380
  %v1389 = vtanh.pop %v1285
  %v1390 = vtanh.pop %v1286
  %v1391 = vtanh.pop %v1287
  %v1392 = vtanh.pop %v1288
  %1397 = vrot.lane.b32.xlu0 %v1389, 32
  %v1398 = vpop.permute.xlu0 %1397
  %1399 = vrot.lane.b32.xlu0 %v1390, 32
  %v1400 = vpop.permute.xlu0 %1399
  %1401 = vrot.lane.b32.xlu0 %v1391, 32
  %v1402 = vpop.permute.xlu0 %1401
  %1403 = vrot.lane.b32.xlu0 %v1392, 32
  %v1404 = vpop.permute.xlu0 %1403
  %v1409 = vmul.f32 %v1319, %v1398
  %v1410 = vmul.f32 %v1334, %v1400
  %v1411 = vmul.f32 %v1349, %v1402
  %v1412 = vmul.f32 %v1364, %v1404
  %v1413 = vadd.f32 %v1385, %v1409
  %v1414 = vadd.f32 %v1386, %v1410
  %v1415 = vadd.f32 %v1387, %v1411
  %v1416 = vadd.f32 %v1388, %v1412
  %1421 = vrot.lane.b32.xlu0 %v1413, 64
  %v1422 = vpop.permute.xlu0 %1421
  %1423 = vrot.lane.b32.xlu0 %v1414, 64
  %v1424 = vpop.permute.xlu0 %1423
  %1425 = vrot.lane.b32.xlu0 %v1415, 64
  %v1426 = vpop.permute.xlu0 %1425
  %1427 = vrot.lane.b32.xlu0 %v1416, 64
  %v1428 = vpop.permute.xlu0 %1427
  %v1433 = vmul.f32 %v1319, %v1422
  %v1434 = vmul.f32 %v1334, %v1424
  %v1435 = vmul.f32 %v1349, %v1426
  %v1436 = vmul.f32 %v1364, %v1428
  %1437 = vst.msk [vmem:[%s17] sm:$0xff] %vm717, %v1433
  %1438 = vst.msk [vmem:[%s17 + $0x8] sm:$0xff] %vm717, %v1434
  %1439 = vst.msk [vmem:[%s17 + $0x10] sm:$0xff] %vm717, %v1435
  %1440 = vst.msk [vmem:[%s17 + $0x18] sm:$0xff] %vm717, %v1436
  %1445 = vrot.lane.b32.xlu0 %v661, 96
  %v1446 = vpop.permute.xlu0 %1445
  %1447 = vrot.lane.b32.xlu0 %v662, 96
  %v1448 = vpop.permute.xlu0 %1447
  %1449 = vrot.lane.b32.xlu0 %v663, 96
  %v1450 = vpop.permute.xlu0 %1449
  %1451 = vrot.lane.b32.xlu0 %v664, 96
  %v1452 = vpop.permute.xlu0 %1451
  %1457 = vst.msk [vmem:[%s18] sm:$0xff] %vm717, %v1446
  %1458 = vst.msk [vmem:[%s18 + $0x8] sm:$0xff] %vm717, %v1448
  %1459 = vst.msk [vmem:[%s18 + $0x10] sm:$0xff] %vm717, %v1450
  %1460 = vst.msk [vmem:[%s18 + $0x18] sm:$0xff] %vm717, %v1452
  %1461 = vst.msk [vmem:[%s19] sm:$0xff] %vm717, %v1422
  %1462 = vst.msk [vmem:[%s19 + $0x8] sm:$0xff] %vm717, %v1424
  %1463 = vst.msk [vmem:[%s19 + $0x10] sm:$0xff] %vm717, %v1426
  %1464 = vst.msk [vmem:[%s19 + $0x18] sm:$0xff] %vm717, %v1428
  %v1465 = vsel %vm717, %v1433, 0.0
  %1466 = vadd.xlane.f32.xlu0 %v1465
  %v1467 = vpop.xlane.xlu0 %1466
  %v1468 = vsel %vm717, %v1434, 0.0
  %1469 = vadd.xlane.f32.xlu0 %v1468
  %v1470 = vpop.xlane.xlu0 %1469
  %v1471 = vsel %vm717, %v1435, 0.0
  %1472 = vadd.xlane.f32.xlu0 %v1471
  %v1473 = vpop.xlane.xlu0 %1472
  %v1474 = vsel %vm717, %v1436, 0.0
  %1475 = vadd.xlane.f32.xlu0 %v1474
  %v1476 = vpop.xlane.xlu0 %1475
  %v1477 = vrcp.pop 32.0
  %v1478 = vmul.f32 32.0, %v1477
  %v1479 = vsub.f32 1.0, %v1478
  %v1480 = vmul.f32 %v1477, %v1479
  %v1481 = vadd.f32 %v1477, %v1480
  %vm1482 = vweird.f32 %v1477
  %v1483 = vsel %vm1482, %v1477, %v1481
  %v1484 = vmul.f32 %v1467, %v1483
  %v1485 = vmul.f32 %v1470, %v1483
  %v1486 = vmul.f32 %v1473, %v1483
  %v1487 = vmul.f32 %v1476, %v1483
  %v1488 = vadd.f32 %v1484, %v1485
  %v1489 = vrot.slane %v1488, 4
  %v1490 = vadd.f32 %v1488, %v1489
  %v1491 = vrot.slane %v1490, 2
  %v1492 = vadd.f32 %v1490, %v1491
  %v1493 = vrot.slane %v1492, 1
  %v1494 = vadd.f32 %v1492, %v1493
  %v1495 = vadd.f32 %v1486, %v1487
  %v1496 = vrot.slane %v1495, 4
  %v1497 = vadd.f32 %v1495, %v1496
  %v1498 = vrot.slane %v1497, 2
  %v1499 = vadd.f32 %v1497, %v1498
  %v1500 = vrot.slane %v1499, 1
  %v1501 = vadd.f32 %v1499, %v1500
  %v1502 = vrcp.pop 16.0
  %v1503 = vmul.f32 16.0, %v1502
  %v1504 = vsub.f32 1.0, %v1503
  %v1505 = vmul.f32 %v1502, %v1504
  %v1506 = vadd.f32 %v1502, %v1505
  %vm1507 = vweird.f32 %v1502
  %v1508 = vsel %vm1507, %v1502, %v1506
  %v1509 = vmul.f32 %v1494, %v1508
  %v1510 = vmul.f32 %v1501, %v1508
  %v1511 = vsub.f32 %v1433, %v1509
  %v1512 = vsub.f32 %v1434, %v1509
  %v1513 = vsub.f32 %v1435, %v1510
  %v1514 = vsub.f32 %v1436, %v1510
  %v1515 = vmul.f32 %v1511, %v1511
  %v1516 = vmul.f32 %v1512, %v1512
  %v1517 = vmul.f32 %v1513, %v1513
  %v1518 = vmul.f32 %v1514, %v1514
  %v1519 = vsel %vm717, %v1515, 0.0
  %1520 = vadd.xlane.f32.xlu0 %v1519
  %v1521 = vpop.xlane.xlu0 %1520
  %v1522 = vsel %vm717, %v1516, 0.0
  %1523 = vadd.xlane.f32.xlu0 %v1522
  %v1524 = vpop.xlane.xlu0 %1523
  %v1525 = vsel %vm717, %v1517, 0.0
  %1526 = vadd.xlane.f32.xlu0 %v1525
  %v1527 = vpop.xlane.xlu0 %1526
  %v1528 = vsel %vm717, %v1518, 0.0
  %1529 = vadd.xlane.f32.xlu0 %v1528
  %v1530 = vpop.xlane.xlu0 %1529
  %v1531 = vmul.f32 %v1521, %v1483
  %v1532 = vmul.f32 %v1524, %v1483
  %v1533 = vmul.f32 %v1527, %v1483
  %v1534 = vmul.f32 %v1530, %v1483
  %v1535 = vadd.f32 %v1531, %v1532
  %v1536 = vrot.slane %v1535, 4
  %v1537 = vadd.f32 %v1535, %v1536
  %v1538 = vrot.slane %v1537, 2
  %v1539 = vadd.f32 %v1537, %v1538
  %v1540 = vrot.slane %v1539, 1
  %v1541 = vadd.f32 %v1539, %v1540
  %v1542 = vadd.f32 %v1533, %v1534
  %v1543 = vrot.slane %v1542, 4
  %v1544 = vadd.f32 %v1542, %v1543
  %v1545 = vrot.slane %v1544, 2
  %v1546 = vadd.f32 %v1544, %v1545
  %v1547 = vrot.slane %v1546, 1
  %v1548 = vadd.f32 %v1546, %v1547
  %v1549 = vmul.f32 %v1541, %v1508
  %v1550 = vmul.f32 %v1548, %v1508
  %v1551 = vadd.f32 %v1549, 1e-05
  %v1552 = vadd.f32 %v1550, 1e-05
  %v1553 = vrsqrt.pop %v1551
  %v1554 = vmul.f32 %v1553, %v1551
  %v1555 = vmul.f32 %v1554, %v1553
  %v1556 = vmul.f32 0.5, %v1555
  %v1557 = vsub.f32 1.5, %v1556
  %v1558 = vmul.f32 %v1553, %v1557
  %vm1559 = vweird.f32 %v1551
  %vm1560 = vweird.f32 %v1553
  %vm1561 = vmor %vm1559, %vm1560
  %v1562 = vsel %vm1561, %v1553, %v1558
  %v1563 = vrsqrt.pop %v1552
  %v1564 = vmul.f32 %v1563, %v1552
  %v1565 = vmul.f32 %v1564, %v1563
  %v1566 = vmul.f32 0.5, %v1565
  %v1567 = vsub.f32 1.5, %v1566
  %v1568 = vmul.f32 %v1563, %v1567
  %vm1569 = vweird.f32 %v1552
  %vm1570 = vweird.f32 %v1563
  %vm1571 = vmor %vm1569, %vm1570
  %v1572 = vsel %vm1571, %v1563, %v1568
  %v1573 = vmul.f32 %v1511, %v1562
  %v1574 = vmul.f32 %v1512, %v1562
  %v1575 = vmul.f32 %v1513, %v1572
  %v1576 = vmul.f32 %v1514, %v1572
  %v1577 = vld [vmem:[%s15] sm:$0xff]
  %v1578 = vld [vmem:[%s15 + $0x8] sm:$0xff]
  %v1579 = vmul.f32 %v1573, %v1577
  %v1580 = vmul.f32 %v1574, %v1578
  %v1581 = vmul.f32 %v1575, %v1577
  %v1582 = vmul.f32 %v1576, %v1578
  %v1583 = vld [vmem:[%s16] sm:$0xff]
  %v1584 = vld [vmem:[%s16 + $0x8] sm:$0xff]
  %v1585 = vadd.f32 %v1579, %v1583
  %v1586 = vadd.f32 %v1580, %v1584
  %v1587 = vadd.f32 %v1581, %v1583
  %v1588 = vadd.f32 %v1582, %v1584
  %v1589 = vpack.c.bf16 %v1585, %v1585
  %v1590 = vpack.c.bf16 %v1586, %v1586
  %v1591 = vpack.c.bf16 %v1587, %v1587
  %v1592 = vpack.c.bf16 %v1588, %v1588
  %vm1593 = vcmask 257024
  %1594 = vst.msk [vmem:[%s20] sm:$0xf] %vm1593, %v1589
  %1595 = vst.msk [vmem:[%s20 + $0x4] sm:$0xf] %vm1593, %v1590
  %1596 = vst.msk [vmem:[%s20 + $0x8] sm:$0xf] %vm1593, %v1591
  %1597 = vst.msk [vmem:[%s20 + $0xc] sm:$0xf] %vm1593, %v1592
  // Predicated region
  $region70: #{closed_call.54} parent=0 // pred_check
    _
  $region71: #{closed_call.54} parent=0 // pred_check_branch
    %1599 = sbr.rel (0) target = $region73
  $region72: #{closed_call.54} parent=0 // pred_region
    _
  $region73: #{closed_call.54} parent=0 // pred_fallthru
    _
  // Predicated region
  $region74: #{closed_call.54} parent=0 // pred_check
    _
  $region75: #{closed_call.54} parent=0 // pred_check_branch
    %1601 = sbr.rel (0) target = $region77
  $region76: #{closed_call.54} parent=0 // pred_region
    _
  $region77: #{closed_call.54} parent=0 // pred_fallthru
    _
  // Predicated region
  $region78: #{closed_call.54} parent=0 // pred_check
    _
  $region79: #{closed_call.54} parent=0 // pred_check_branch
    %1603 = sbr.rel (0) target = $region81
  $region80: #{closed_call.54} parent=0 // pred_region
    _
  $region81: #{closed_call.54} parent=0 // pred_fallthru
    _
  // Predicated region
  $region82: #{closed_call.54} parent=0 // pred_check
    _
  $region83: #{closed_call.54} parent=0 // pred_check_branch
    %1605 = sbr.rel (0) target = $region85
  $region84: #{closed_call.54} parent=0 // pred_region
    _
  $region85: #{closed_call.54} parent=0 // pred_fallthru
    _
  // Predicated region
  $region86: #{closed_call.54} parent=0 // pred_check
    _
  $region87: #{closed_call.54} parent=0 // pred_check_branch
    %1607 = sbr.rel (0) target = $region89
  $region88: #{closed_call.54} parent=0 // pred_region
    _
  $region89: #{closed_call.54} parent=0 // pred_fallthru
    _
  // Predicated region
  $region90: #{closed_call.54} parent=0 // pred_check
    _
  $region91: #{closed_call.54} parent=0 // pred_check_branch
    %1609 = sbr.rel (0) target = $region93
  $region92: #{closed_call.54} parent=0 // pred_region
    _
  $region93: #{closed_call.54} parent=0 // pred_fallthru
    _
  // Predicated region
  $region94: #{closed_call.54} parent=0 // pred_check
    _
  $region95: #{closed_call.54} parent=0 // pred_check_branch
    %1611 = sbr.rel (0) target = $region97
  $region96: #{closed_call.54} parent=0 // pred_region
    _
  $region97: #{closed_call.54} parent=0 // pred_fallthru
    _
  // Predicated region
  $region98: #{closed_call.54} parent=0 // pred_check
    _
  $region99: #{closed_call.54} parent=0 // pred_check_branch
    %1613 = sbr.rel (0) target = $region101
  $region100: #{closed_call.54} parent=0 // pred_region
    _
  $region101: #{closed_call.54} parent=0 // pred_fallthru
    _

// kernel: closed_call.57
$region0: #{closed_call.57}
  #allocation0 [shape = 'u32[]', space=smem, size = 0x4, offset = 0x4, fixed_abs, tag = 'smem constant byte address 0x4 - core index']
  #allocation1 [shape = 'u32[72,128]{1,0:T(1,128)}', space=vmem, size = 0x9000, scoped, tag = 'internal scratch']
  #allocation2 [shape = 'f32[256,1]{1,0:T(8,128)}', space=vmem, size = 0x20000, scoped, tag = 'scratch operand']
  #allocation3 [shape = 'f32[1,1]{1,0:T(1,128)S(1)}', space=vmem, size = 0x200, scoped, tag = 'scoped memory for closed_call.57']
  %s0 = inlined_call_operand.vmem [shape: bf16[512,32], index: 0, kind: input, shape index: {}]
  %s1 = inlined_call_operand.vmem [shape: bf16[32,1], index: 1, kind: input, shape index: {}]
  %s2 = inlined_call_operand.<no memory space> [shape: f32[1,1], index: 2, kind: input, shape index: {}]
  %s3 = inlined_call_operand.vmem [shape: f32[512,1], index: 3, kind: output, shape index: {}]
  %s4 = sld [smem:[#allocation0]]
  $region53: #{closed_call.57} parent=0
    _
  %s6 = ssub.s32 1, %s4
  %s7 = scalar_select 0, %s6, %s4
  %v8 = vstv %s2
  %9 = vst [vmem:[#allocation3] sm:$0x1] %v8
  loop: start=0, step=1, limit=4
  $region2: #{closed_call.57} parent=0 // loop_pre_header
    _
  $region3: #{closed_call.57} parent=0 // loop_header
    %s11 = sphi 0, %s15
    %p12 = scmp.ge.s32.totalorder %s11, 4
    %s18 = sphi 0, %s30
    %s19 = sphi 0, %s26
    %s20 = sphi 0, %s18
    %s21 = sphi 0, %s19
    %s22 = sphi 0, %s20
    %s23 = sphi 0, %s21
    %s35 = sphi 0, %s37
    %s38 = sphi 0, %s35
    %s39 = sphi 0, %s38
    %s55 = sphi 0, %s39
    %s61 = sphi 0, %s63
    %s64 = sphi 0, %s61
    %s65 = sphi 0, %s64
    %s81 = sphi 0, %s65
    %s85 = sphi 0, %s85
    %s87 = sphi 0, %s85
    %s88 = sphi 0, %s87
    %s102 = sphi 0, %s88
    %s108 = sphi 0, %s110
    %s111 = sphi 0, %s108
    %s112 = sphi 0, %s111
    %s128 = sphi 0, %s112
  $region4: #{closed_call.57} parent=0 // loop_header_branch
    %14 = sbr.rel (%p12) target = $region8
  $region5: #{closed_call.57} parent=0 // loop_body
    %s16 = ssub.s32 %s11, 1
    %s17 = ssub.s32 %s11, 2
    %s24 = sadd.s32 1, %s19
    %p25 = scmp.ge.s32.totalorder %s24, 1
    %s26 = scalar_select %p25, 0, %s24
    %s27 = sadd.s32 1, %s18
    %s28 = scalar_select %p25, %s27, %s18
    %p29 = scmp.ge.s32.totalorder %s28, 2
    %s30 = scalar_select %p29, 0, %s28
    %s31 = ssub.s32 %s18, %s30
    %s32 = ssub.s32 %s19, %s26
    %s33 = sor.u32 %s31, %s32
    %p34 = scmp.eq.s32.totalorder %s33, 0
    %s36 = sadd.s32 %s35, 1
    %s37 = scalar_select %p34, %s35, %s36
    %p40 = pneg %p34
    %p41 = scmp.eq.s32.totalorder %s11, 1
    %p42 = por %p40, %p41
    %p43 = scmp.ne.s32.totalorder %s35, %s38
    %p44 = scmp.eq.s32.totalorder %s11, 0
    %p45 = por %p43, %p44
    %p46 = scmp.ne.s32.totalorder %s35, %s38
    %p47 = scmp.eq.s32.totalorder %s16, 1
    %p48 = por %p46, %p47
    %p49 = scmp.ne.s32.totalorder %s38, %s39
    %p50 = scmp.eq.s32.totalorder %s16, 0
    %p51 = por %p49, %p50
    %p52 = scmp.ne.s32.totalorder %s38, %s39
    %p53 = scmp.eq.s32.totalorder %s17, 1
    %p54 = por %p52, %p53
    %p56 = scmp.ne.s32.totalorder %s39, %s55
    %p57 = scmp.eq.s32.totalorder %s17, 0
    %p58 = por %p56, %p57
    %s59 = ssub.s32 %s19, %s26
    %p60 = scmp.eq.s32.totalorder %s59, 0
    %s62 = sadd.s32 %s61, 1
    %s63 = scalar_select %p60, %s61, %s62
    %p66 = pneg %p60
    %p67 = scmp.eq.s32.totalorder %s11, 1
    %p68 = por %p66, %p67
    %p69 = scmp.ne.s32.totalorder %s61, %s64
    %p70 = scmp.eq.s32.totalorder %s11, 0
    %p71 = por %p69, %p70
    %p72 = scmp.ne.s32.totalorder %s61, %s64
    %p73 = scmp.eq.s32.totalorder %s16, 1
    %p74 = por %p72, %p73
    %p75 = scmp.ne.s32.totalorder %s64, %s65
    %p76 = scmp.eq.s32.totalorder %s16, 0
    %p77 = por %p75, %p76
    %p78 = scmp.ne.s32.totalorder %s64, %s65
    %p79 = scmp.eq.s32.totalorder %s17, 1
    %p80 = por %p78, %p79
    %p82 = scmp.ne.s32.totalorder %s65, %s81
    %p83 = scmp.eq.s32.totalorder %s17, 0
    %p84 = por %p82, %p83
    %s86 = sadd.s32 %s85, 1
    %p89 = scmp.eq.s32.totalorder %s11, 1
    %p90 = scmp.ne.s32.totalorder %s85, %s87
    %p91 = scmp.eq.s32.totalorder %s11, 0
    %p92 = por %p90, %p91
    %p93 = scmp.ne.s32.totalorder %s85, %s87
    %p94 = scmp.eq.s32.totalorder %s16, 1
    %p95 = por %p93, %p94
    %p96 = scmp.ne.s32.totalorder %s87, %s88
    %p97 = scmp.eq.s32.totalorder %s16, 0
    %p98 = por %p96, %p97
    %p99 = scmp.ne.s32.totalorder %s87, %s88
    %p100 = scmp.eq.s32.totalorder %s17, 1
    %p101 = por %p99, %p100
    %p103 = scmp.ne.s32.totalorder %s88, %s102
    %p104 = scmp.eq.s32.totalorder %s17, 0
    %p105 = por %p103, %p104
    %s106 = ssub.s32 %s18, %s30
    %p107 = scmp.eq.s32.totalorder %s106, 0
    %s109 = sadd.s32 %s108, 1
    %s110 = scalar_select %p107, %s108, %s109
    %p113 = pneg %p107
    %p114 = scmp.eq.s32.totalorder %s11, 1
    %p115 = por %p113, %p114
    %p116 = scmp.ne.s32.totalorder %s108, %s111
    %p117 = scmp.eq.s32.totalorder %s11, 0
    %p118 = por %p116, %p117
    %p119 = scmp.ne.s32.totalorder %s108, %s111
    %p120 = scmp.eq.s32.totalorder %s16, 1
    %p121 = por %p119, %p120
    %p122 = scmp.ne.s32.totalorder %s111, %s112
    %p123 = scmp.eq.s32.totalorder %s16, 0
    %p124 = por %p122, %p123
    %p125 = scmp.ne.s32.totalorder %s111, %s112
    %p126 = scmp.eq.s32.totalorder %s17, 1
    %p127 = por %p125, %p126
    %p129 = scmp.ne.s32.totalorder %s112, %s128
    %p130 = scmp.eq.s32.totalorder %s17, 0
    %p131 = por %p129, %p130
    %p132 = scmp.le.s32.totalorder 1, %s11
    %p133 = scmp.lt.s32.totalorder %s11, 3
    %p134 = pnand %p132, %p133
    %p135 = pneg %p134
    // Predicated region
    $region9: #{closed_call.57} parent=5 // pred_check
      _
    $region10: #{closed_call.57} parent=5 // pred_check_branch
      %137 = sbr.rel (%p134) target = $region12
    $region11: #{closed_call.57} parent=5 // pred_region
      %s138 = ssub.s32 %s11, 1
      // Predicated region
      $region13: #{closed_call.57} parent=11 // pred_check
        %p139 = pneg %p77
      $region14: #{closed_call.57} parent=11 // pred_check_branch
        %141 = sbr.rel (%p139) target = $region16
      $region15: #{closed_call.57} parent=11 // pred_region
        %s142 = smul.u32 4, %s21
        %p143 = scmp.lt.s32.totalorder %s142, 3
        %s144 = scalar_select %p143, %s142, 3
        %s145 = smul.addr %s144, 4
        %s146 = scalar_lea.vmem %s1, %s145
        %s147 = smul.u32 4, %s21
      $region16: #{closed_call.57} parent=11 // pred_fallthru
        _
      // Predicated region
      $region17: #{closed_call.57} parent=11 // pred_check
        %p148 = pneg %p98
      $region18: #{closed_call.57} parent=11 // pred_check_branch
        %150 = sbr.rel (%p148) target = $region20
      $region19: #{closed_call.57} parent=11 // pred_region
        _
      $region20: #{closed_call.57} parent=11 // pred_fallthru
        _
    $region12: #{closed_call.57} parent=5 // pred_fallthru
      _
    %p151 = scmp.lt.s32.totalorder %s11, 2
    // Predicated region
    $region21: #{closed_call.57} parent=5 // pred_check
      %p152 = pneg %p151
    $region22: #{closed_call.57} parent=5 // pred_check_branch
      %154 = sbr.rel (%p152) target = $region24
    $region23: #{closed_call.57} parent=5 // pred_region
      // Predicated region
      $region25: #{closed_call.57} parent=23 // pred_check
        %p155 = pneg %p45
      $region26: #{closed_call.57} parent=23 // pred_check_branch
        %157 = sbr.rel (%p155) target = $region28
      $region27: #{closed_call.57} parent=23 // pred_region
        %s158 = smul.u32 32, %s18
        %p159 = scmp.lt.s32.totalorder %s158, 63
        %s160 = scalar_select %p159, %s158, 63
        %p161 = scmp.lt.s32.totalorder %s19, 0
        %s162 = scalar_select %p161, %s19, 0
        %s163 = sadd.s32 %s162, %s160
        %s164 = smul.addr %s163, 4
        %s165 = scalar_lea.vmem %s0, %s164
        %s166 = smul.u32 32, %s18
      $region28: #{closed_call.57} parent=23 // pred_fallthru
        _
    $region24: #{closed_call.57} parent=5 // pred_fallthru
      _
    %p167 = scmp.le.s32.totalorder 1, %s11
    %p168 = scmp.lt.s32.totalorder %s11, 3
    %p169 = pnand %p167, %p168
    %p170 = pneg %p169
    // Predicated region
    $region29: #{closed_call.57} parent=5 // pred_check
      _
    $region30: #{closed_call.57} parent=5 // pred_check_branch
      %172 = sbr.rel (%p169) target = $region32
    $region31: #{closed_call.57} parent=5 // pred_region
      %s173 = ssub.s32 %s11, 1
      %s174 = smul.u32 32, %s20
      %p175 = scmp.lt.s32.totalorder %s174, 63
      %s176 = scalar_select %p175, %s174, 63
      %p177 = scmp.lt.s32.totalorder %s21, 0
      %s178 = scalar_select %p177, %s21, 0
      %s179 = sadd.s32 %s178, %s176
      %s180 = smul.addr %s179, 4
      %s181 = scalar_lea.vmem %s0, %s180
      %p182 = pneg %p51
      %p183 = pneg %p48
      %s184 = smul.u32 4, %s21
      %p185 = scmp.lt.s32.totalorder %s184, 3
      %s186 = scalar_select %p185, %s184, 3
      %s187 = smul.addr %s186, 4
      %s188 = scalar_lea.vmem %s1, %s187
      %p189 = pneg %p77
      %p190 = pneg %p74
      %p191 = pneg %p98
      %p192 = pneg %p95
      %p193 = pneg %p124
      %p194 = pneg %p121
      %s195 = smul.u32 32, %s20
      %p196 = scmp.lt.s32.totalorder %s195, 63
      %s197 = scalar_select %p196, %s195, 63
      %s198 = smul.addr %s197, 8
      %s199 = scalar_lea.vmem %s3, %s198
      %s200 = smul.u32 32, %s20
      %p201 = scmp.lt.s32.totalorder %s200, 63
      %s202 = scalar_select %p201, %s200, 63
      %p203 = scmp.lt.s32.totalorder %s21, 0
      %s204 = scalar_select %p203, %s21, 0
      %s205 = sadd.s32 %s204, %s202
      %s206 = smul.addr %s205, 4
      %s207 = scalar_lea.vmem %s0, %s206
      %s208 = smul.u32 32, %s20
      %s209 = smul.u32 4, %s21
      %p210 = scmp.lt.s32.totalorder %s209, 3
      %s211 = scalar_select %p210, %s209, 3
      %s212 = smul.addr %s211, 4
      %s213 = scalar_lea.vmem %s1, %s212
      %s214 = smul.u32 4, %s21
      %s215 = smul.u32 32, %s20
      %p216 = scmp.lt.s32.totalorder %s215, 63
      %s217 = scalar_select %p216, %s215, 63
      %s218 = smul.addr %s217, 8
      %s219 = scalar_lea.vmem %s3, %s218
      %s220 = smul.u32 32, %s20
      %p222 = scmp.eq.s32.totalorder %s21, 0
      // Predicated region
      $region33: #{closed_call.57} parent=31 // pred_check
        %p223 = pneg %p222
      $region34: #{closed_call.57} parent=31 // pred_check_branch
        %225 = sbr.rel (%p223) target = $region36
      $region35: #{closed_call.57} parent=31 // pred_region
        %vm226 = vcmask 7168
        %227 = vst.msk [vmem:[#allocation2] sm:$0xff] %vm226, 0.0
        %228 = vst.msk [vmem:[#allocation2 + $0x8] sm:$0xff] %vm226, 0.0
        %229 = vst.msk [vmem:[#allocation2 + $0x10] sm:$0xff] %vm226, 0.0
        %230 = vst.msk [vmem:[#allocation2 + $0x18] sm:$0xff] %vm226, 0.0
        %231 = vst.msk [vmem:[#allocation2 + $0x20] sm:$0xff] %vm226, 0.0
        %232 = vst.msk [vmem:[#allocation2 + $0x28] sm:$0xff] %vm226, 0.0
        %233 = vst.msk [vmem:[#allocation2 + $0x30] sm:$0xff] %vm226, 0.0
        %234 = vst.msk [vmem:[#allocation2 + $0x38] sm:$0xff] %vm226, 0.0
        %235 = vst.msk [vmem:[#allocation2 + $0x40] sm:$0xff] %vm226, 0.0
        %236 = vst.msk [vmem:[#allocation2 + $0x48] sm:$0xff] %vm226, 0.0
        %237 = vst.msk [vmem:[#allocation2 + $0x50] sm:$0xff] %vm226, 0.0
        %238 = vst.msk [vmem:[#allocation2 + $0x58] sm:$0xff] %vm226, 0.0
        %239 = vst.msk [vmem:[#allocation2 + $0x60] sm:$0xff] %vm226, 0.0
        %240 = vst.msk [vmem:[#allocation2 + $0x68] sm:$0xff] %vm226, 0.0
        %241 = vst.msk [vmem:[#allocation2 + $0x70] sm:$0xff] %vm226, 0.0
        %242 = vst.msk [vmem:[#allocation2 + $0x78] sm:$0xff] %vm226, 0.0
        %243 = vst.msk [vmem:[#allocation2 + $0x80] sm:$0xff] %vm226, 0.0
        %244 = vst.msk [vmem:[#allocation2 + $0x88] sm:$0xff] %vm226, 0.0
        %245 = vst.msk [vmem:[#allocation2 + $0x90] sm:$0xff] %vm226, 0.0
        %246 = vst.msk [vmem:[#allocation2 + $0x98] sm:$0xff] %vm226, 0.0
        %247 = vst.msk [vmem:[#allocation2 + $0xa0] sm:$0xff] %vm226, 0.0
        %248 = vst.msk [vmem:[#allocation2 + $0xa8] sm:$0xff] %vm226, 0.0
        %249 = vst.msk [vmem:[#allocation2 + $0xb0] sm:$0xff] %vm226, 0.0
        %250 = vst.msk [vmem:[#allocation2 + $0xb8] sm:$0xff] %vm226, 0.0
        %251 = vst.msk [vmem:[#allocation2 + $0xc0] sm:$0xff] %vm226, 0.0
        %252 = vst.msk [vmem:[#allocation2 + $0xc8] sm:$0xff] %vm226, 0.0
        %253 = vst.msk [vmem:[#allocation2 + $0xd0] sm:$0xff] %vm226, 0.0
        %254 = vst.msk [vmem:[#allocation2 + $0xd8] sm:$0xff] %vm226, 0.0
        %255 = vst.msk [vmem:[#allocation2 + $0xe0] sm:$0xff] %vm226, 0.0
        %256 = vst.msk [vmem:[#allocation2 + $0xe8] sm:$0xff] %vm226, 0.0
        %257 = vst.msk [vmem:[#allocation2 + $0xf0] sm:$0xff] %vm226, 0.0
        %258 = vst.msk [vmem:[#allocation2 + $0xf8] sm:$0xff] %vm226, 0.0
      $region36: #{closed_call.57} parent=31 // pred_fallthru
        _
      %v259 = vld [vmem:[#allocation2] sm:$0xff]
      %v260 = vld [vmem:[#allocation2 + $0x8] sm:$0xff]
      %v261 = vld [vmem:[#allocation2 + $0x10] sm:$0xff]
      %v262 = vld [vmem:[#allocation2 + $0x18] sm:$0xff]
      %v263 = vld [vmem:[#allocation2 + $0x20] sm:$0xff]
      %v264 = vld [vmem:[#allocation2 + $0x28] sm:$0xff]
      %v265 = vld [vmem:[#allocation2 + $0x30] sm:$0xff]
      %v266 = vld [vmem:[#allocation2 + $0x38] sm:$0xff]
      %v267 = vld [vmem:[#allocation2 + $0x40] sm:$0xff]
      %v268 = vld [vmem:[#allocation2 + $0x48] sm:$0xff]
      %v269 = vld [vmem:[#allocation2 + $0x50] sm:$0xff]
      %v270 = vld [vmem:[#allocation2 + $0x58] sm:$0xff]
      %v271 = vld [vmem:[#allocation2 + $0x60] sm:$0xff]
      %v272 = vld [vmem:[#allocation2 + $0x68] sm:$0xff]
      %v273 = vld [vmem:[#allocation2 + $0x70] sm:$0xff]
      %v274 = vld [vmem:[#allocation2 + $0x78] sm:$0xff]
      %v275 = vld [vmem:[#allocation2 + $0x80] sm:$0xff]
      %v276 = vld [vmem:[#allocation2 + $0x88] sm:$0xff]
      %v277 = vld [vmem:[#allocation2 + $0x90] sm:$0xff]
      %v278 = vld [vmem:[#allocation2 + $0x98] sm:$0xff]
      %v279 = vld [vmem:[#allocation2 + $0xa0] sm:$0xff]
      %v280 = vld [vmem:[#allocation2 + $0xa8] sm:$0xff]
      %v281 = vld [vmem:[#allocation2 + $0xb0] sm:$0xff]
      %v282 = vld [vmem:[#allocation2 + $0xb8] sm:$0xff]
      %v283 = vld [vmem:[#allocation2 + $0xc0] sm:$0xff]
      %v284 = vld [vmem:[#allocation2 + $0xc8] sm:$0xff]
      %v285 = vld [vmem:[#allocation2 + $0xd0] sm:$0xff]
      %v286 = vld [vmem:[#allocation2 + $0xd8] sm:$0xff]
      %v287 = vld [vmem:[#allocation2 + $0xe0] sm:$0xff]
      %v288 = vld [vmem:[#allocation2 + $0xe8] sm:$0xff]
      %v289 = vld [vmem:[#allocation2 + $0xf0] sm:$0xff]
      %v290 = vld [vmem:[#allocation2 + $0xf8] sm:$0xff]
      %v291 = vld [vmem:[%s207] sm:$0xf]
      %v292 = vld [vmem:[%s207 + $0x4] sm:$0xf]
      %v293 = vld [vmem:[%s207 + $0x8] sm:$0xf]
      %v294 = vld [vmem:[%s207 + $0xc] sm:$0xf]
      %v295 = vld [vmem:[%s207 + $0x10] sm:$0xf]
      %v296 = vld [vmem:[%s207 + $0x14] sm:$0xf]
      %v297 = vld [vmem:[%s207 + $0x18] sm:$0xf]
      %v298 = vld [vmem:[%s207 + $0x1c] sm:$0xf]
      %v299 = vld [vmem:[%s207 + $0x20] sm:$0xf]
      %v300 = vld [vmem:[%s207 + $0x24] sm:$0xf]
      %v301 = vld [vmem:[%s207 + $0x28] sm:$0xf]
      %v302 = vld [vmem:[%s207 + $0x2c] sm:$0xf]
      %v303 = vld [vmem:[%s207 + $0x30] sm:$0xf]
      %v304 = vld [vmem:[%s207 + $0x34] sm:$0xf]
      %v305 = vld [vmem:[%s207 + $0x38] sm:$0xf]
      %v306 = vld [vmem:[%s207 + $0x3c] sm:$0xf]
      %v307 = vld [vmem:[%s207 + $0x40] sm:$0xf]
      %v308 = vld [vmem:[%s207 + $0x44] sm:$0xf]
      %v309 = vld [vmem:[%s207 + $0x48] sm:$0xf]
      %v310 = vld [vmem:[%s207 + $0x4c] sm:$0xf]
      %v311 = vld [vmem:[%s207 + $0x50] sm:$0xf]
      %v312 = vld [vmem:[%s207 + $0x54] sm:$0xf]
      %v313 = vld [vmem:[%s207 + $0x58] sm:$0xf]
      %v314 = vld [vmem:[%s207 + $0x5c] sm:$0xf]
      %v315 = vld [vmem:[%s207 + $0x60] sm:$0xf]
      %v316 = vld [vmem:[%s207 + $0x64] sm:$0xf]
      %v317 = vld [vmem:[%s207 + $0x68] sm:$0xf]
      %v318 = vld [vmem:[%s207 + $0x6c] sm:$0xf]
      %v319 = vld [vmem:[%s207 + $0x70] sm:$0xf]
      %v320 = vld [vmem:[%s207 + $0x74] sm:$0xf]
      %v321 = vld [vmem:[%s207 + $0x78] sm:$0xf]
      %v322 = vld [vmem:[%s207 + $0x7c] sm:$0xf]
      %v323 = vld [vmem:[%s213] sm:$0xf]
      %v324 = vld [vmem:[%s213 + $0x4] sm:$0xf]
      %v325 = vld [vmem:[%s213 + $0x8] sm:$0xf]
      %v326 = vld [vmem:[%s213 + $0xc] sm:$0xf]
      %v359 = vunpack.c.l.b16 %v291
      %v360 = vunpack.c.l.b16 %v292
      %v361 = vunpack.c.l.b16 %v293
      %v362 = vunpack.c.l.b16 %v294
      %v363 = vunpack.c.l.b16 %v295
      %v364 = vunpack.c.l.b16 %v296
      %v365 = vunpack.c.l.b16 %v297
      %v366 = vunpack.c.l.b16 %v298
      %v367 = vunpack.c.l.b16 %v299
      %v368 = vunpack.c.l.b16 %v300
      %v369 = vunpack.c.l.b16 %v301
      %v370 = vunpack.c.l.b16 %v302
      %v371 = vunpack.c.l.b16 %v303
      %v372 = vunpack.c.l.b16 %v304
      %v373 = vunpack.c.l.b16 %v305
      %v374 = vunpack.c.l.b16 %v306
      %v375 = vunpack.c.l.b16 %v307
      %v376 = vunpack.c.l.b16 %v308
      %v377 = vunpack.c.l.b16 %v309
      %v378 = vunpack.c.l.b16 %v310
      %v379 = vunpack.c.l.b16 %v311
      %v380 = vunpack.c.l.b16 %v312
      %v381 = vunpack.c.l.b16 %v313
      %v382 = vunpack.c.l.b16 %v314
      %v383 = vunpack.c.l.b16 %v315
      %v384 = vunpack.c.l.b16 %v316
      %v385 = vunpack.c.l.b16 %v317
      %v386 = vunpack.c.l.b16 %v318
      %v387 = vunpack.c.l.b16 %v319
      %v388 = vunpack.c.l.b16 %v320
      %v389 = vunpack.c.l.b16 %v321
      %v390 = vunpack.c.l.b16 %v322
      %v391 = vpack.c.b16 %v360, %v359
      %v392 = vpack.c.b16 %v362, %v361
      %v393 = vpack.c.b16 %v364, %v363
      %v394 = vpack.c.b16 %v366, %v365
      %v395 = vpack.c.b16 %v368, %v367
      %v396 = vpack.c.b16 %v370, %v369
      %v397 = vpack.c.b16 %v372, %v371
      %v398 = vpack.c.b16 %v374, %v373
      %v399 = vpack.c.b16 %v376, %v375
      %v400 = vpack.c.b16 %v378, %v377
      %v401 = vpack.c.b16 %v380, %v379
      %v402 = vpack.c.b16 %v382, %v381
      %v403 = vpack.c.b16 %v384, %v383
      %v404 = vpack.c.b16 %v386, %v385
      %v405 = vpack.c.b16 %v388, %v387
      %v406 = vpack.c.b16 %v390, %v389
      %v411 = vunpack.c.l.b16 %v323
      %v412 = vunpack.c.l.b16 %v324
      %v413 = vunpack.c.l.b16 %v325
      %v414 = vunpack.c.l.b16 %v326
      %v415 = vpack.c.b16 %v412, %v411
      %v416 = vpack.c.b16 %v414, %v413
      %vm419 = vcmask 261120
      %v421 = vsel %vm419, %v391, 0
      %v424 = vsel %vm419, %v392, 0
      %v427 = vsel %vm419, %v393, 0
      %v430 = vsel %vm419, %v394, 0
      %v433 = vsel %vm419, %v395, 0
      %v436 = vsel %vm419, %v396, 0
      %v439 = vsel %vm419, %v397, 0
      %v442 = vsel %vm419, %v398, 0
      %v445 = vsel %vm419, %v399, 0
      %v448 = vsel %vm419, %v400, 0
      %v451 = vsel %vm419, %v401, 0
      %v454 = vsel %vm419, %v402, 0
      %v457 = vsel %vm419, %v403, 0
      %v460 = vsel %vm419, %v404, 0
      %v463 = vsel %vm419, %v405, 0
      %v466 = vsel %vm419, %v406, 0
      %468 = vmatpush.bf16.msra.mxu0 0
      %469 = vmatpush.bf16.msra.mxu0 0
      %470 = vmatpush.bf16.msra.mxu0 0
      %471 = vmatpush.bf16.msra.mxu0 0
      %472 = vmatpush.bf16.msra.mxu0 0
      %473 = vmatpush.bf16.msra.mxu0 0
      %474 = vmatpush.bf16.msra.mxu0 %v416
      %475 = vmatpush.bf16.msra.mxu0 %v415
      %476 = vmatmul.bf16.gmra.mxu0 %v421
      %v477 = vpop.f32.mrf.mxu0
      %v478 = vadd.f32 0.0, %v477
      %v479 = vpop.f32.mrf.mxu0
      %v480 = vadd.f32 0.0, %v479
      %481 = vmatmul.bf16.gmra.mxu0 %v424
      %v482 = vpop.f32.mrf.mxu0
      %v483 = vadd.f32 0.0, %v482
      %v484 = vpop.f32.mrf.mxu0
      %v485 = vadd.f32 0.0, %v484
      %486 = vmatmul.bf16.gmra.mxu0 %v427
      %v487 = vpop.f32.mrf.mxu0
      %v488 = vadd.f32 0.0, %v487
      %v489 = vpop.f32.mrf.mxu0
      %v490 = vadd.f32 0.0, %v489
      %491 = vmatmul.bf16.gmra.mxu0 %v430
      %v492 = vpop.f32.mrf.mxu0
      %v493 = vadd.f32 0.0, %v492
      %v494 = vpop.f32.mrf.mxu0
      %v495 = vadd.f32 0.0, %v494
      %496 = vmatmul.bf16.gmra.mxu0 %v433
      %v497 = vpop.f32.mrf.mxu0
      %v498 = vadd.f32 0.0, %v497
      %v499 = vpop.f32.mrf.mxu0
      %v500 = vadd.f32 0.0, %v499
      %501 = vmatmul.bf16.gmra.mxu0 %v436
      %v502 = vpop.f32.mrf.mxu0
      %v503 = vadd.f32 0.0, %v502
      %v504 = vpop.f32.mrf.mxu0
      %v505 = vadd.f32 0.0, %v504
      %506 = vmatmul.bf16.gmra.mxu0 %v439
      %v507 = vpop.f32.mrf.mxu0
      %v508 = vadd.f32 0.0, %v507
      %v509 = vpop.f32.mrf.mxu0
      %v510 = vadd.f32 0.0, %v509
      %511 = vmatmul.bf16.gmra.mxu0 %v442
      %v512 = vpop.f32.mrf.mxu0
      %v513 = vadd.f32 0.0, %v512
      %v514 = vpop.f32.mrf.mxu0
      %v515 = vadd.f32 0.0, %v514
      %516 = vmatmul.bf16.gmra.mxu0 %v445
      %v517 = vpop.f32.mrf.mxu0
      %v518 = vadd.f32 0.0, %v517
      %v519 = vpop.f32.mrf.mxu0
      %v520 = vadd.f32 0.0, %v519
      %521 = vmatmul.bf16.gmra.mxu0 %v448
      %v522 = vpop.f32.mrf.mxu0
      %v523 = vadd.f32 0.0, %v522
      %v524 = vpop.f32.mrf.mxu0
      %v525 = vadd.f32 0.0, %v524
      %526 = vmatmul.bf16.gmra.mxu0 %v451
      %v527 = vpop.f32.mrf.mxu0
      %v528 = vadd.f32 0.0, %v527
      %v529 = vpop.f32.mrf.mxu0
      %v530 = vadd.f32 0.0, %v529
      %531 = vmatmul.bf16.gmra.mxu0 %v454
      %v532 = vpop.f32.mrf.mxu0
      %v533 = vadd.f32 0.0, %v532
      %v534 = vpop.f32.mrf.mxu0
      %v535 = vadd.f32 0.0, %v534
      %536 = vmatmul.bf16.gmra.mxu0 %v457
      %v537 = vpop.f32.mrf.mxu0
      %v538 = vadd.f32 0.0, %v537
      %v539 = vpop.f32.mrf.mxu0
      %v540 = vadd.f32 0.0, %v539
      %541 = vmatmul.bf16.gmra.mxu0 %v460
      %v542 = vpop.f32.mrf.mxu0
      %v543 = vadd.f32 0.0, %v542
      %v544 = vpop.f32.mrf.mxu0
      %v545 = vadd.f32 0.0, %v544
      %546 = vmatmul.bf16.gmra.mxu0 %v463
      %v547 = vpop.f32.mrf.mxu0
      %v548 = vadd.f32 0.0, %v547
      %v549 = vpop.f32.mrf.mxu0
      %v550 = vadd.f32 0.0, %v549
      %551 = vmatmul.bf16.gmra.mxu0 %v466
      %v552 = vpop.f32.mrf.mxu0
      %v553 = vadd.f32 0.0, %v552
      %v554 = vpop.f32.mrf.mxu0
      %v555 = vadd.f32 0.0, %v554
      %556 = vdwg.mxu0
      %v557 = vadd.f32 %v259, %v478
      %v558 = vadd.f32 %v260, %v480
      %v559 = vadd.f32 %v261, %v483
      %v560 = vadd.f32 %v262, %v485
      %v561 = vadd.f32 %v263, %v488
      %v562 = vadd.f32 %v264, %v490
      %v563 = vadd.f32 %v265, %v493
      %v564 = vadd.f32 %v266, %v495
      %v565 = vadd.f32 %v267, %v498
      %v566 = vadd.f32 %v268, %v500
      %v567 = vadd.f32 %v269, %v503
      %v568 = vadd.f32 %v270, %v505
      %v569 = vadd.f32 %v271, %v508
      %v570 = vadd.f32 %v272, %v510
      %v571 = vadd.f32 %v273, %v513
      %v572 = vadd.f32 %v274, %v515
      %v573 = vadd.f32 %v275, %v518
      %v574 = vadd.f32 %v276, %v520
      %v575 = vadd.f32 %v277, %v523
      %v576 = vadd.f32 %v278, %v525
      %v577 = vadd.f32 %v279, %v528
      %v578 = vadd.f32 %v280, %v530
      %v579 = vadd.f32 %v281, %v533
      %v580 = vadd.f32 %v282, %v535
      %v581 = vadd.f32 %v283, %v538
      %v582 = vadd.f32 %v284, %v540
      %v583 = vadd.f32 %v285, %v543
      %v584 = vadd.f32 %v286, %v545
      %v585 = vadd.f32 %v287, %v548
      %v586 = vadd.f32 %v288, %v550
      %v587 = vadd.f32 %v289, %v553
      %v588 = vadd.f32 %v290, %v555
      %vm589 = vcmask 7168
      %590 = vst.msk [vmem:[#allocation2] sm:$0xff] %vm589, %v557
      %591 = vst.msk [vmem:[#allocation2 + $0x8] sm:$0xff] %vm589, %v558
      %592 = vst.msk [vmem:[#allocation2 + $0x10] sm:$0xff] %vm589, %v559
      %593 = vst.msk [vmem:[#allocation2 + $0x18] sm:$0xff] %vm589, %v560
      %594 = vst.msk [vmem:[#allocation2 + $0x20] sm:$0xff] %vm589, %v561
      %595 = vst.msk [vmem:[#allocation2 + $0x28] sm:$0xff] %vm589, %v562
      %596 = vst.msk [vmem:[#allocation2 + $0x30] sm:$0xff] %vm589, %v563
      %597 = vst.msk [vmem:[#allocation2 + $0x38] sm:$0xff] %vm589, %v564
      %598 = vst.msk [vmem:[#allocation2 + $0x40] sm:$0xff] %vm589, %v565
      %599 = vst.msk [vmem:[#allocation2 + $0x48] sm:$0xff] %vm589, %v566
      %600 = vst.msk [vmem:[#allocation2 + $0x50] sm:$0xff] %vm589, %v567
      %601 = vst.msk [vmem:[#allocation2 + $0x58] sm:$0xff] %vm589, %v568
      %602 = vst.msk [vmem:[#allocation2 + $0x60] sm:$0xff] %vm589, %v569
      %603 = vst.msk [vmem:[#allocation2 + $0x68] sm:$0xff] %vm589, %v570
      %604 = vst.msk [vmem:[#allocation2 + $0x70] sm:$0xff] %vm589, %v571
      %605 = vst.msk [vmem:[#allocation2 + $0x78] sm:$0xff] %vm589, %v572
      %606 = vst.msk [vmem:[#allocation2 + $0x80] sm:$0xff] %vm589, %v573
      %607 = vst.msk [vmem:[#allocation2 + $0x88] sm:$0xff] %vm589, %v574
      %608 = vst.msk [vmem:[#allocation2 + $0x90] sm:$0xff] %vm589, %v575
      %609 = vst.msk [vmem:[#allocation2 + $0x98] sm:$0xff] %vm589, %v576
      %610 = vst.msk [vmem:[#allocation2 + $0xa0] sm:$0xff] %vm589, %v577
      %611 = vst.msk [vmem:[#allocation2 + $0xa8] sm:$0xff] %vm589, %v578
      %612 = vst.msk [vmem:[#allocation2 + $0xb0] sm:$0xff] %vm589, %v579
      %613 = vst.msk [vmem:[#allocation2 + $0xb8] sm:$0xff] %vm589, %v580
      %614 = vst.msk [vmem:[#allocation2 + $0xc0] sm:$0xff] %vm589, %v581
      %615 = vst.msk [vmem:[#allocation2 + $0xc8] sm:$0xff] %vm589, %v582
      %616 = vst.msk [vmem:[#allocation2 + $0xd0] sm:$0xff] %vm589, %v583
      %617 = vst.msk [vmem:[#allocation2 + $0xd8] sm:$0xff] %vm589, %v584
      %618 = vst.msk [vmem:[#allocation2 + $0xe0] sm:$0xff] %vm589, %v585
      %619 = vst.msk [vmem:[#allocation2 + $0xe8] sm:$0xff] %vm589, %v586
      %620 = vst.msk [vmem:[#allocation2 + $0xf0] sm:$0xff] %vm589, %v587
      %621 = vst.msk [vmem:[#allocation2 + $0xf8] sm:$0xff] %vm589, %v588
      // Predicated region
      $region37: #{closed_call.57} parent=31 // pred_check
        %p622 = pneg %p222
      $region38: #{closed_call.57} parent=31 // pred_check_branch
        %624 = sbr.rel (%p622) target = $region40
      $region39: #{closed_call.57} parent=31 // pred_region
        %v625 = vld [vmem:[#allocation2] sm:$0xff]
        %v626 = vld [vmem:[#allocation2 + $0x8] sm:$0xff]
        %v627 = vld [vmem:[#allocation2 + $0x10] sm:$0xff]
        %v628 = vld [vmem:[#allocation2 + $0x18] sm:$0xff]
        %v629 = vld [vmem:[#allocation2 + $0x20] sm:$0xff]
        %v630 = vld [vmem:[#allocation2 + $0x28] sm:$0xff]
        %v631 = vld [vmem:[#allocation2 + $0x30] sm:$0xff]
        %v632 = vld [vmem:[#allocation2 + $0x38] sm:$0xff]
        %v633 = vld [vmem:[#allocation2 + $0x40] sm:$0xff]
        %v634 = vld [vmem:[#allocation2 + $0x48] sm:$0xff]
        %v635 = vld [vmem:[#allocation2 + $0x50] sm:$0xff]
        %v636 = vld [vmem:[#allocation2 + $0x58] sm:$0xff]
        %v637 = vld [vmem:[#allocation2 + $0x60] sm:$0xff]
        %v638 = vld [vmem:[#allocation2 + $0x68] sm:$0xff]
        %v639 = vld [vmem:[#allocation2 + $0x70] sm:$0xff]
        %v640 = vld [vmem:[#allocation2 + $0x78] sm:$0xff]
        %v641 = vld [vmem:[#allocation2 + $0x80] sm:$0xff]
        %v642 = vld [vmem:[#allocation2 + $0x88] sm:$0xff]
        %v643 = vld [vmem:[#allocation2 + $0x90] sm:$0xff]
        %v644 = vld [vmem:[#allocation2 + $0x98] sm:$0xff]
        %v645 = vld [vmem:[#allocation2 + $0xa0] sm:$0xff]
        %v646 = vld [vmem:[#allocation2 + $0xa8] sm:$0xff]
        %v647 = vld [vmem:[#allocation2 + $0xb0] sm:$0xff]
        %v648 = vld [vmem:[#allocation2 + $0xb8] sm:$0xff]
        %v649 = vld [vmem:[#allocation2 + $0xc0] sm:$0xff]
        %v650 = vld [vmem:[#allocation2 + $0xc8] sm:$0xff]
        %v651 = vld [vmem:[#allocation2 + $0xd0] sm:$0xff]
        %v652 = vld [vmem:[#allocation2 + $0xd8] sm:$0xff]
        %v653 = vld [vmem:[#allocation2 + $0xe0] sm:$0xff]
        %v654 = vld [vmem:[#allocation2 + $0xe8] sm:$0xff]
        %v655 = vld [vmem:[#allocation2 + $0xf0] sm:$0xff]
        %v656 = vld [vmem:[#allocation2 + $0xf8] sm:$0xff]
        %v657 = vld [vmem:[#allocation3] sm:$0x1]
        %v659 = vperm.slane %v657, 0
        %v661 = vadd.f32 %v625, %v659
        %v662 = vadd.f32 %v626, %v659
        %v663 = vadd.f32 %v627, %v659
        %v664 = vadd.f32 %v628, %v659
        %v665 = vadd.f32 %v629, %v659
        %v666 = vadd.f32 %v630, %v659
        %v667 = vadd.f32 %v631, %v659
        %v668 = vadd.f32 %v632, %v659
        %v669 = vadd.f32 %v633, %v659
        %v670 = vadd.f32 %v634, %v659
        %v671 = vadd.f32 %v635, %v659
        %v672 = vadd.f32 %v636, %v659
        %v673 = vadd.f32 %v637, %v659
        %v674 = vadd.f32 %v638, %v659
        %v675 = vadd.f32 %v639, %v659
        %v676 = vadd.f32 %v640, %v659
        %v677 = vadd.f32 %v641, %v659
        %v678 = vadd.f32 %v642, %v659
        %v679 = vadd.f32 %v643, %v659
        %v680 = vadd.f32 %v644, %v659
        %v681 = vadd.f32 %v645, %v659
        %v682 = vadd.f32 %v646, %v659
        %v683 = vadd.f32 %v647, %v659
        %v684 = vadd.f32 %v648, %v659
        %v685 = vadd.f32 %v649, %v659
        %v686 = vadd.f32 %v650, %v659
        %v687 = vadd.f32 %v651, %v659
        %v688 = vadd.f32 %v652, %v659
        %v689 = vadd.f32 %v653, %v659
        %v690 = vadd.f32 %v654, %v659
        %v691 = vadd.f32 %v655, %v659
        %v692 = vadd.f32 %v656, %v659
        %693 = vst.msk [vmem:[%s219] sm:$0xff] %vm589, %v661
        %694 = vst.msk [vmem:[%s219 + $0x8] sm:$0xff] %vm589, %v662
        %695 = vst.msk [vmem:[%s219 + $0x10] sm:$0xff] %vm589, %v663
        %696 = vst.msk [vmem:[%s219 + $0x18] sm:$0xff] %vm589, %v664
        %697 = vst.msk [vmem:[%s219 + $0x20] sm:$0xff] %vm589, %v665
        %698 = vst.msk [vmem:[%s219 + $0x28] sm:$0xff] %vm589, %v666
        %699 = vst.msk [vmem:[%s219 + $0x30] sm:$0xff] %vm589, %v667
        %700 = vst.msk [vmem:[%s219 + $0x38] sm:$0xff] %vm589, %v668
        %701 = vst.msk [vmem:[%s219 + $0x40] sm:$0xff] %vm589, %v669
        %702 = vst.msk [vmem:[%s219 + $0x48] sm:$0xff] %vm589, %v670
        %703 = vst.msk [vmem:[%s219 + $0x50] sm:$0xff] %vm589, %v671
        %704 = vst.msk [vmem:[%s219 + $0x58] sm:$0xff] %vm589, %v672
        %705 = vst.msk [vmem:[%s219 + $0x60] sm:$0xff] %vm589, %v673
        %706 = vst.msk [vmem:[%s219 + $0x68] sm:$0xff] %vm589, %v674
        %707 = vst.msk [vmem:[%s219 + $0x70] sm:$0xff] %vm589, %v675
        %708 = vst.msk [vmem:[%s219 + $0x78] sm:$0xff] %vm589, %v676
        %709 = vst.msk [vmem:[%s219 + $0x80] sm:$0xff] %vm589, %v677
        %710 = vst.msk [vmem:[%s219 + $0x88] sm:$0xff] %vm589, %v678
        %711 = vst.msk [vmem:[%s219 + $0x90] sm:$0xff] %vm589, %v679
        %712 = vst.msk [vmem:[%s219 + $0x98] sm:$0xff] %vm589, %v680
        %713 = vst.msk [vmem:[%s219 + $0xa0] sm:$0xff] %vm589, %v681
        %714 = vst.msk [vmem:[%s219 + $0xa8] sm:$0xff] %vm589, %v682
        %715 = vst.msk [vmem:[%s219 + $0xb0] sm:$0xff] %vm589, %v683
        %716 = vst.msk [vmem:[%s219 + $0xb8] sm:$0xff] %vm589, %v684
        %717 = vst.msk [vmem:[%s219 + $0xc0] sm:$0xff] %vm589, %v685
        %718 = vst.msk [vmem:[%s219 + $0xc8] sm:$0xff] %vm589, %v686
        %719 = vst.msk [vmem:[%s219 + $0xd0] sm:$0xff] %vm589, %v687
        %720 = vst.msk [vmem:[%s219 + $0xd8] sm:$0xff] %vm589, %v688
        %721 = vst.msk [vmem:[%s219 + $0xe0] sm:$0xff] %vm589, %v689
        %722 = vst.msk [vmem:[%s219 + $0xe8] sm:$0xff] %vm589, %v690
        %723 = vst.msk [vmem:[%s219 + $0xf0] sm:$0xff] %vm589, %v691
        %724 = vst.msk [vmem:[%s219 + $0xf8] sm:$0xff] %vm589, %v692
      $region40: #{closed_call.57} parent=31 // pred_fallthru
        _
      %s725 = smul.u32 32, %s20
      %p726 = scmp.lt.s32.totalorder %s725, 63
      %s727 = scalar_select %p726, %s725, 63
      %s728 = smul.addr %s727, 8
      %s729 = scalar_lea.vmem %s3, %s728
      // Predicated region
      $region41: #{closed_call.57} parent=31 // pred_check
        %p730 = pneg %p121
      $region42: #{closed_call.57} parent=31 // pred_check_branch
        %732 = sbr.rel (%p730) target = $region44
      $region43: #{closed_call.57} parent=31 // pred_region
        %s733 = smul.u32 32, %s20
      $region44: #{closed_call.57} parent=31 // pred_fallthru
        _
    $region32: #{closed_call.57} parent=5 // pred_fallthru
      _
    %p734 = scmp.le.s32.totalorder 2, %s11
    // Predicated region
    $region45: #{closed_call.57} parent=5 // pred_check
      %p735 = pneg %p734
    $region46: #{closed_call.57} parent=5 // pred_check_branch
      %737 = sbr.rel (%p735) target = $region48
    $region47: #{closed_call.57} parent=5 // pred_region
      %s738 = ssub.s32 %s11, 2
      // Predicated region
      $region49: #{closed_call.57} parent=47 // pred_check
        %p739 = pneg %p127
      $region50: #{closed_call.57} parent=47 // pred_check_branch
        %741 = sbr.rel (%p739) target = $region52
      $region51: #{closed_call.57} parent=47 // pred_region
        %s742 = smul.u32 32, %s22
        %p743 = scmp.lt.s32.totalorder %s742, 63
        %s744 = scalar_select %p743, %s742, 63
        %s745 = smul.addr %s744, 8
        %s746 = scalar_lea.vmem %s3, %s745
      $region52: #{closed_call.57} parent=47 // pred_fallthru
        _
    $region48: #{closed_call.57} parent=5 // pred_fallthru
      _
  $region6: #{closed_call.57} parent=0 // loop_footer
    %s15 = sadd.s32 1, %s11
  $region7: #{closed_call.57} parent=0 // loop_footer_branch
    %10 = sbr.rel target = $region3
  $region8: #{closed_call.57} parent=0 // loop_exit
    _

</llo_original>
